<compile_context>
chip_gen: v7x
topology: tpu7x:2x2x1
jax: 0.10.0
libtpu: 0.0.40
codegen_flags: <defaults>
</compile_context>

<pallas_src>
import jax
import jax.numpy as jnp
from jax.experimental import pallas as pl
from jax.experimental.pallas import tpu as pltpu


def _round_up(n, m):
    return ((n + m - 1) // m) * m


def _conv_batch_tile(B):
    for bb in (8, 4, 2, 1):
        if B % bb == 0 and B // bb >= 2:
            return bb
    return B


def _fc_batch_tile(B):
    cands = [bb for bb in (64, 32, 16, 8) if B % bb == 0 and B // bb >= 2]
    if not cands:
        cands = [bb for bb in (64, 32, 16, 8) if B % bb == 0]
    return max(cands) if cands else B


# ----------------------------------------------------------------------------
# fused conv1 -> ReLU -> pool -> conv2 -> ReLU -> pool kernel (batched on lanes)
# ----------------------------------------------------------------------------
def _make_conv_kernel(BB, Lq, L1):
    N = BB * Lq
    # keep pooled (half-grid) positions 2i+s < L1; zero the padded tail beyond it
    bound0 = min((L1 + 1) // 2, Lq)
    bound1 = min(L1 // 2, Lq)
    need_tail_mask = (bound0 < Lq) or (bound1 < Lq)

    def kernel(x_ref, w1_ref, b1_ref, w2_ref, b2_ref, o_ref):
        ph = x_ref[0]                                          # (4, N) polyphase input

        lane = jax.lax.broadcasted_iota(jnp.int32, (1, N), 1)
        i_lane = lane % Lq                                     # position within a row
        first = i_lane == 0
        last = i_lane == (Lq - 1)

        # ---- conv1: tap bank rows (j+1)*4+p read u_p[i+j]; zero halo at row edges ----
        # (roll wraps across batch-row boundaries; the first/last masks restore zeros)
        left = jnp.where(first, 0.0, jnp.roll(ph, 1, axis=-1))
        right = jnp.where(last, 0.0, jnp.roll(ph, -1, axis=-1))
        t1 = jnp.concatenate([left, ph, right], axis=0)        # (12, N)

        y1 = jnp.dot(w1_ref[...], t1, preferred_element_type=jnp.float32)
        y1 = jnp.maximum(y1 + b1_ref[...], 0.0)                # (64, N): 4 phases x 16 ch

        # ---- pool1: max over the two conv1 phases of each half-grid position ----
        p0 = jnp.maximum(y1[0:16], y1[16:32])                  # half-grid parity s = 0
        p1 = jnp.maximum(y1[32:48], y1[48:64])                 # half-grid parity s = 1
        if need_tail_mask:
            # emulate torch: conv2's zero padding sees zeros for positions >= L//2
            p0 = jnp.where(i_lane < bound0, p0, 0.0)
            p1 = jnp.where(i_lane < bound1, p1, 0.0)

        # ---- conv2: stack the 6 (parity, shift) tap blocks along K = 96 ----
        p0m = jnp.where(first, 0.0, jnp.roll(p0, 1, axis=-1))
        p1m = jnp.where(first, 0.0, jnp.roll(p1, 1, axis=-1))
        p0p = jnp.where(last, 0.0, jnp.roll(p0, -1, axis=-1))
        p1p = jnp.where(last, 0.0, jnp.roll(p1, -1, axis=-1))
        t2 = jnp.concatenate([p0m, p1m, p0, p1, p0p, p1p], axis=0)   # (96, N)

        y2 = jnp.dot(w2_ref[...], t2, preferred_element_type=jnp.float32)
        y2 = jnp.maximum(y2 + b2_ref[...], 0.0)                # (64, N): 2 phases x 32 ch

        # ---- pool2: max over the two conv2 phases; emit bf16 features ----
        out = jnp.maximum(y2[0:32], y2[32:64]).astype(o_ref.dtype)   # (32, N)

        for b in range(BB):                                    # aligned (32, Lq) stores
            o_ref[b] = out[:, b * Lq:(b + 1) * Lq]

    return kernel


def conv_stack(x, prep):
    """(B, 1, L) f32 -> (B, 32, Lq) bf16 pooled conv features (Lq = Lp/4)."""
    B, _, L = x.shape
    Lp = _round_up(max(L, 512), 512)
    Lq = Lp // 4
    L1 = L // 2
    BB = _conv_batch_tile(B)
    G = B // BB
    N = BB * Lq

    # zero-pad to Lp and deinterleave into 4 phases, batch rows concatenated on lanes:
    # x4[g, p, b*Lq + i] = x_padded[g*BB + b, 4*i + p]
    xp = jnp.pad(x[:, 0, :], ((0, 0), (0, Lp - L)))
    x4 = xp.reshape(G, BB, Lq, 4).transpose(0, 3, 1, 2).reshape(G, 4, N)

    return pl.pallas_call(
        _make_conv_kernel(BB, Lq, L1),
        out_shape=jax.ShapeDtypeStruct((B, 32, Lq), jnp.bfloat16),
        grid=(G,),
        in_specs=[
            pl.BlockSpec((1, 4, N), lambda g: (g, 0, 0)),
            pl.BlockSpec((64, 12), lambda g: (0, 0)),   # weights: constant index_maps,
            pl.BlockSpec((64, 1), lambda g: (0, 0)),    # fetched once, VMEM-resident
            pl.BlockSpec((64, 96), lambda g: (0, 0)),
            pl.BlockSpec((64, 1), lambda g: (0, 0)),
        ],
        out_specs=pl.BlockSpec((BB, 32, Lq), lambda g: (g, 0, 0)),
        compiler_params=pltpu.CompilerParams(
            dimension_semantics=("parallel",),
            vmem_limit_bytes=40 * 1024 * 1024),
    )(x4, prep["w1big"], prep["b1big"], prep["w2big"], prep["b2big"])


# ----------------------------------------------------------------------------
# FC head: fc1 -> ReLU -> fc2 with the fc1 weight resident in VMEM (no K grid axis)
# ----------------------------------------------------------------------------
def _fc_kernel(x_ref, w1_ref, b1_ref, w2_ref, b2_ref, o_ref):
    h = jnp.dot(x_ref[...], w1_ref[...], preferred_element_type=jnp.float32)
    h = jnp.maximum(h + b1_ref[...], 0.0)
    o_ref[...] = jnp.dot(h, w2_ref[...], preferred_element_type=jnp.float32) + b2_ref[...]


def fc_head(x_flat, prep):
    B, F = x_flat.shape
    BBF = _fc_batch_tile(B)
    return pl.pallas_call(
        _fc_kernel,
        out_shape=jax.ShapeDtypeStruct((B, 128), jnp.float32),
        grid=(B // BBF,),
        in_specs=[
            pl.BlockSpec((BBF, F), lambda i: (i, 0)),
            pl.BlockSpec((F, 64), lambda i: (0, 0)),    # bf16 fc1 weight: streamed once
            pl.BlockSpec((1, 64), lambda i: (0, 0)),
            pl.BlockSpec((64, 128), lambda i: (0, 0)),
            pl.BlockSpec((1, 128), lambda i: (0, 0)),
        ],
        out_specs=pl.BlockSpec((BBF, 128), lambda i: (i, 0)),
        compiler_params=pltpu.CompilerParams(
            dimension_semantics=("parallel",),
            vmem_limit_bytes=24 * 1024 * 1024),
    )(x_flat, prep["wfc1_p"], prep["bfc1"], prep["wfc2_p"], prep["bfc2_p"])


# ----------------------------------------------------------------------------
# parameter handling (torch layout -> kernel layout, done once) and forward
# ----------------------------------------------------------------------------
def init_params(key, L):
    """Parameters in the PyTorch module's native layout (flatten_dim = 32*((L//2)//2))."""
    flatten_dim = 32 * ((L // 2) // 2)
    ks = jax.random.split(key, 8)
    return {
        "w1": 0.3 * jax.random.normal(ks[0], (16, 1, 7), jnp.float32),
        "b1": 0.1 * jax.random.normal(ks[1], (16,), jnp.float32),
        "w2": 0.1 * jax.random.normal(ks[2], (32, 16, 5), jnp.float32),
        "b2": 0.1 * jax.random.normal(ks[3], (32,), jnp.float32),
        "wfc1": 0.02 * jax.random.normal(ks[4], (64, flatten_dim), jnp.float32),
        "bfc1": 0.1 * jax.random.normal(ks[5], (64,), jnp.float32),
        "wfc2": 0.1 * jax.random.normal(ks[6], (4, 64), jnp.float32),
        "bfc2": 0.1 * jax.random.normal(ks[7], (4,), jnp.float32),
    }


def prepare_params(params, L):
    """One-time repack of the PyTorch-layout parameters into kernel layouts."""
    Lp = _round_up(max(L, 512), 512)
    Lq = Lp // 4
    L2 = (L // 2) // 2                       # true flattened length per channel (torch)

    w1 = params["w1"]                        # (16, 1, 7)
    w2 = params["w2"]                        # (32, 16, 5)

    # conv1 polyphase weight: Y1 row q*16+ci is y1 at position 4i+q; tap column
    # (j+1)*4+p multiplies u_p[i+j] and carries torch tap k = 4j + p + 3 - q.
    w1big = jnp.zeros((64, 12), jnp.float32)
    for q in range(4):
        for j in (-1, 0, 1):
            for p in range(4):
                k = 4 * j + p + 3 - q
                if 0 <= k < 7:
                    w1big = w1big.at[q * 16:(q + 1) * 16, (j + 1) * 4 + p].set(w1[:, 0, k])
    b1big = jnp.tile(params["b1"], 4).reshape(64, 1)

    # conv2 polyphase weight: Y2 row t*32+co is y2 at half-grid position 2j+t; tap block
    # e+2 multiplies P_{e mod 2}[ci, j + floor(e/2)] and carries torch tap k = e + 2 - t.
    w2big = jnp.zeros((64, 96), jnp.float32)
    for t in range(2):
        for e in range(-2, 4):
            k = e + 2 - t
            if 0 <= k < 5:
                w2big = w2big.at[t * 32:(t + 1) * 32,
                                 (e + 2) * 16:(e + 3) * 16].set(w2[:, :, k])
    b2big = jnp.tile(params["b2"], 2).reshape(64, 1)

    # fc1 weight laid out for the (B, 32, Lq) feature map: row c*Lq + n holds
    # wfc1[:, c*L2 + n] for n < L2 and zeros for the lane-padded tail (so the feature
    # map flattens with no slicing and tail junk contributes exactly 0).  bf16.
    wfc1 = params["wfc1"].reshape(64, 32, L2)
    wfc1 = jnp.pad(wfc1, ((0, 0), (0, 0), (0, Lq - L2)))
    wfc1_p = jnp.transpose(wfc1, (1, 2, 0)).reshape(32 * Lq, 64).astype(jnp.bfloat16)

    # fc2 padded to 128 output lanes for an unmasked store (wrapper slices [:, :4]).
    wfc2_p = jnp.zeros((64, 128), jnp.float32).at[:, :4].set(params["wfc2"].T)
    bfc2_p = jnp.zeros((1, 128), jnp.float32).at[0, :4].set(params["bfc2"])

    return {
        "w1big": w1big, "b1big": b1big, "w2big": w2big, "b2big": b2big,
        "wfc1_p": wfc1_p, "bfc1": params["bfc1"].reshape(1, 64),
        "wfc2_p": wfc2_p, "bfc2_p": bfc2_p,
    }


def ecg_classifier_forward(x, prep):
    """x: (B, 1, L) float32 -> (B, 4) logits (matches ECGClassifier.forward)."""
    B = x.shape[0]
    feats = conv_stack(x, prep)              # (B, 32, Lq) bf16
    x_flat = feats.reshape(B, -1)            # contiguous view
    logits = fc_head(x_flat, prep)           # (B, 128) f32, lane-padded
    return logits[:, :4]


# ----------------------------------------------------------------------------
# pure-JAX reference (validation only) and main
# ----------------------------------------------------------------------------
def _reference_forward(x, params):
    B = x.shape[0]

    def conv1d(inp, w, b, pad):
        out = jax.lax.conv_general_dilated(
            inp, w, window_strides=(1,), padding=((pad, pad),),
            dimension_numbers=("NCH", "OIH", "NCH"))
        return out + b[None, :, None]

    def pool2(inp):
        Lc = (inp.shape[-1] // 2) * 2
        return jnp.max(inp[:, :, :Lc].reshape(inp.shape[0], inp.shape[1], -1, 2), -1)

    h = pool2(jnp.maximum(conv1d(x, params["w1"], params["b1"], 3), 0.0))
    h = pool2(jnp.maximum(conv1d(h, params["w2"], params["b2"], 2), 0.0))
    h = h.reshape(B, -1)
    h = jnp.maximum(h @ params["wfc1"].T + params["bfc1"], 0.0)
    return h @ params["wfc2"].T + params["bfc2"]


if __name__ == "__main__":
    B, L = 2, 256            # small stand-in for the 5000-sample ECG signal
    key = jax.random.PRNGKey(0)
    kx, kp = jax.random.split(key)
    x = jax.random.normal(kx, (B, 1, L), jnp.float32)

    params = init_params(kp, L)
    prep = prepare_params(params, L)          # one-time weight repack (outside forward)

    fwd = jax.jit(ecg_classifier_forward)
    out = fwd(x, prep)
    jax.block_until_ready(out)

    assert out.shape == (B, 4) and out.dtype == jnp.float32
    ref = _reference_forward(x, params)
    assert jnp.allclose(out, ref, rtol=2e-2, atol=2e-2), \
        f"max abs err {jnp.max(jnp.abs(out - ref))}"
    print("KERNEL_OK")
</pallas_src>

<mosaic_0001>
module attributes {stable_mosaic.version = 11 : i64} {
  func.func @_fc_kernel(%arg0: i32, %arg1: memref<2x4096xbf16, #tpu.memory_space<vmem>>, %arg2: memref<4096x64xbf16, #tpu.memory_space<vmem>>, %arg3: memref<1x64xf32, #tpu.memory_space<vmem>>, %arg4: memref<64x128xf32, #tpu.memory_space<vmem>>, %arg5: memref<1x128xf32, #tpu.memory_space<vmem>>, %arg6: memref<2x128xf32, #tpu.memory_space<vmem>>) attributes {dimension_semantics = [#tpu.dimension_semantics<parallel>], iteration_bounds = array<i64: 1>, scalar_prefetch = 0 : i64, scratch_operands = 0 : i64, tpu.core_type = #tpu.core_type<tc>, window_params = [{transform_indices = @transform_0, window_bounds = array<i64: 2, 4096>}, {pipeline_mode = #tpu.pipeline_mode<synchronous>, transform_indices = @transform_1, window_bounds = array<i64: 4096, 64>}, {pipeline_mode = #tpu.pipeline_mode<synchronous>, transform_indices = @transform_2, window_bounds = array<i64: 1, 64>}, {pipeline_mode = #tpu.pipeline_mode<synchronous>, transform_indices = @transform_3, window_bounds = array<i64: 64, 128>}, {pipeline_mode = #tpu.pipeline_mode<synchronous>, transform_indices = @transform_4, window_bounds = array<i64: 1, 128>}, {transform_indices = @transform_5, window_bounds = array<i64: 2, 128>}]} {
    %c0 = arith.constant 0 : index
    %c0_0 = arith.constant 0 : index
    %0 = vector.load %arg1[%c0, %c0_0] : memref<2x4096xbf16, #tpu.memory_space<vmem>>, vector<2x4096xbf16>
    %c0_1 = arith.constant 0 : index
    %c0_2 = arith.constant 0 : index
    %1 = vector.load %arg2[%c0_1, %c0_2] : memref<4096x64xbf16, #tpu.memory_space<vmem>>, vector<4096x64xbf16>
    %cst = arith.constant dense<0.000000e+00> : vector<2x64xf32>
    %2 = tpu.matmul %0, %1, %cst {dimension_numbers = #tpu.dot_dimension_numbers<[1], [0], [0], [1], [0, 0, 1, 1], [], []>} : vector<2x4096xbf16>, vector<4096x64xbf16>, vector<2x64xf32> -> vector<2x64xf32>
    %c0_3 = arith.constant 0 : index
    %c0_4 = arith.constant 0 : index
    %3 = vector.load %arg3[%c0_3, %c0_4] : memref<1x64xf32, #tpu.memory_space<vmem>>, vector<1x64xf32>
    %4 = vector.broadcast %3 : vector<1x64xf32> to vector<2x64xf32>
    %5 = arith.addf %2, %4 : vector<2x64xf32>
    %cst_5 = arith.constant 0.000000e+00 : f32
    %6 = vector.broadcast %cst_5 : f32 to vector<2x64xf32>
    %7 = arith.maximumf %5, %6 : vector<2x64xf32>
    %c0_6 = arith.constant 0 : index
    %c0_7 = arith.constant 0 : index
    %8 = vector.load %arg4[%c0_6, %c0_7] : memref<64x128xf32, #tpu.memory_space<vmem>>, vector<64x128xf32>
    %cst_8 = arith.constant dense<0.000000e+00> : vector<2x128xf32>
    %9 = tpu.matmul %7, %8, %cst_8 {dimension_numbers = #tpu.dot_dimension_numbers<[1], [0], [0], [1], [0, 0, 1, 1], [], []>} : vector<2x64xf32>, vector<64x128xf32>, vector<2x128xf32> -> vector<2x128xf32>
    %c0_9 = arith.constant 0 : index
    %c0_10 = arith.constant 0 : index
    %10 = vector.load %arg5[%c0_9, %c0_10] : memref<1x128xf32, #tpu.memory_space<vmem>>, vector<1x128xf32>
    %11 = vector.broadcast %10 : vector<1x128xf32> to vector<2x128xf32>
    %12 = arith.addf %9, %11 : vector<2x128xf32>
    %c0_11 = arith.constant 0 : index
    %c0_12 = arith.constant 0 : index
    %13 = vector.load %arg6[%c0_11, %c0_12] : memref<2x128xf32, #tpu.memory_space<vmem>>, vector<2x128xf32>
    tpu.vector_store %arg6[%c0_11, %c0_12], %12 {strides = array<i32>} : memref<2x128xf32, #tpu.memory_space<vmem>>, vector<2x128xf32>,
    return
  }
  func.func @transform_0(%arg0: i32) -> (i32, i32) {
    %c0_i32 = arith.constant 0 : i32
    %c0_i32_0 = arith.constant 0 : i32
    return %arg0, %c0_i32 : i32, i32
  }
  func.func @transform_1(%arg0: i32) -> (i32, i32) {
    %c0_i32 = arith.constant 0 : i32
    %c0_i32_0 = arith.constant 0 : i32
    %c0_i32_1 = arith.constant 0 : i32
    return %c0_i32, %c0_i32_0 : i32, i32
  }
  func.func @transform_2(%arg0: i32) -> (i32, i32) {
    %c0_i32 = arith.constant 0 : i32
    %c0_i32_0 = arith.constant 0 : i32
    %c0_i32_1 = arith.constant 0 : i32
    return %c0_i32, %c0_i32_0 : i32, i32
  }
  func.func @transform_3(%arg0: i32) -> (i32, i32) {
    %c0_i32 = arith.constant 0 : i32
    %c0_i32_0 = arith.constant 0 : i32
    %c0_i32_1 = arith.constant 0 : i32
    return %c0_i32, %c0_i32_0 : i32, i32
  }
  func.func @transform_4(%arg0: i32) -> (i32, i32) {
    %c0_i32 = arith.constant 0 : i32
    %c0_i32_0 = arith.constant 0 : i32
    %c0_i32_1 = arith.constant 0 : i32
    return %c0_i32, %c0_i32_0 : i32, i32
  }
  func.func @transform_5(%arg0: i32) -> (i32, i32) {
    %c0_i32 = arith.constant 0 : i32
    %c0_i32_0 = arith.constant 0 : i32
    return %arg0, %c0_i32 : i32, i32
  }
}

module attributes {stable_mosaic.version = 11 : i64} {
  func.func @kernel(%arg0: i32, %arg1: memref<1x4x128xf32, #tpu.memory_space<vmem>>, %arg2: memref<64x12xf32, #tpu.memory_space<vmem>>, %arg3: memref<64x1xf32, #tpu.memory_space<vmem>>, %arg4: memref<64x96xf32, #tpu.memory_space<vmem>>, %arg5: memref<64x1xf32, #tpu.memory_space<vmem>>, %arg6: memref<1x32x128xbf16, #tpu.memory_space<vmem>>) attributes {dimension_semantics = [#tpu.dimension_semantics<parallel>], iteration_bounds = array<i64: 2>, scalar_prefetch = 0 : i64, scratch_operands = 0 : i64, tpu.core_type = #tpu.core_type<tc>, window_params = [{transform_indices = @transform_0, window_bounds = array<i64: 1, 4, 128>}, {pipeline_mode = #tpu.pipeline_mode<synchronous>, transform_indices = @transform_1, window_bounds = array<i64: 64, 12>}, {pipeline_mode = #tpu.pipeline_mode<synchronous>, transform_indices = @transform_2, window_bounds = array<i64: 64, 1>}, {pipeline_mode = #tpu.pipeline_mode<synchronous>, transform_indices = @transform_3, window_bounds = array<i64: 64, 96>}, {pipeline_mode = #tpu.pipeline_mode<synchronous>, transform_indices = @transform_4, window_bounds = array<i64: 64, 1>}, {transform_indices = @transform_5, window_bounds = array<i64: 1, 32, 128>}]} {
    %c0 = arith.constant 0 : index
    %c0_0 = arith.constant 0 : index
    %c0_1 = arith.constant 0 : index
    %0 = vector.load %arg1[%c0, %c0_0, %c0_1] : memref<1x4x128xf32, #tpu.memory_space<vmem>>, vector<1x4x128xf32>
    %1 = vector.shape_cast %0 : vector<1x4x128xf32> to vector<4x128xf32>
    %2 = tpu.iota {dimensions = array<i32: 1>} : vector<1x128xi32>
    %c128_i32 = arith.constant 128 : i32
    %c0_i32 = arith.constant 0 : i32
    %3 = arith.cmpi eq, %c128_i32, %c0_i32 : i32
    %c1_i32 = arith.constant 1 : i32
    %4 = arith.select %3, %c1_i32, %c128_i32 : i32
    %5 = vector.broadcast %4 : i32 to vector<1x128xi32>
    %6 = arith.remsi %2, %5 : vector<1x128xi32>
    %c0_i32_2 = arith.constant 0 : i32
    %7 = vector.broadcast %c0_i32_2 : i32 to vector<1x128xi32>
    %8 = arith.cmpi ne, %6, %7 : vector<1x128xi32>
    %c0_i32_3 = arith.constant 0 : i32
    %9 = vector.broadcast %c0_i32_3 : i32 to vector<1x128xi32>
    %10 = arith.cmpi slt, %6, %9 : vector<1x128xi32>
    %c0_i32_4 = arith.constant 0 : i32
    %11 = arith.cmpi slt, %4, %c0_i32_4 : i32
    %12 = vector.broadcast %11 : i1 to vector<1x128xi1>
    %13 = vector.broadcast %12 : vector<1x128xi1> to vector<1x128xi1>
    %14 = arith.xori %10, %13 : vector<1x128xi1>
    %15 = arith.andi %14, %8 : vector<1x128xi1>
    %16 = vector.broadcast %4 : i32 to vector<1x128xi32>
    %17 = arith.addi %6, %16 : vector<1x128xi32>
    %18 = arith.select %15, %17, %6 : vector<1x128xi1>, vector<1x128xi32>
    %c0_i32_5 = arith.constant 0 : i32
    %19 = vector.broadcast %c0_i32_5 : i32 to vector<1x128xi32>
    %20 = arith.cmpi eq, %18, %19 : vector<1x128xi32>
    %c127_i32 = arith.constant 127 : i32
    %21 = vector.broadcast %c127_i32 : i32 to vector<1x128xi32>
    %22 = arith.cmpi eq, %18, %21 : vector<1x128xi32>
    %23 = vector.extract_strided_slice %1 {offsets = [0, 127], sizes = [4, 1], strides = [1, 1]} : vector<4x128xf32> to vector<4x1xf32>
    %24 = vector.extract_strided_slice %1 {offsets = [0, 0], sizes = [4, 127], strides = [1, 1]} : vector<4x128xf32> to vector<4x127xf32>
    %25 = tpu.concatenate %23, %24 in 1 : vector<4x1xf32>, vector<4x127xf32> -> vector<4x128xf32>
    %cst = arith.constant 0.000000e+00 : f32
    %26 = vector.shape_cast %20 : vector<1x128xi1> to vector<1x128xi1>
    %27 = vector.broadcast %26 : vector<1x128xi1> to vector<4x128xi1>
    %28 = vector.broadcast %cst : f32 to vector<4x128xf32>
    %29 = arith.select %27, %28, %25 : vector<4x128xi1>, vector<4x128xf32>
    %30 = vector.extract_strided_slice %1 {offsets = [0, 1], sizes = [4, 127], strides = [1, 1]} : vector<4x128xf32> to vector<4x127xf32>
    %31 = vector.extract_strided_slice %1 {offsets = [0, 0], sizes = [4, 1], strides = [1, 1]} : vector<4x128xf32> to vector<4x1xf32>
    %32 = tpu.concatenate %30, %31 in 1 : vector<4x127xf32>, vector<4x1xf32> -> vector<4x128xf32>
    %cst_6 = arith.constant 0.000000e+00 : f32
    %33 = vector.shape_cast %22 : vector<1x128xi1> to vector<1x128xi1>
    %34 = vector.broadcast %33 : vector<1x128xi1> to vector<4x128xi1>
    %35 = vector.broadcast %cst_6 : f32 to vector<4x128xf32>
    %36 = arith.select %34, %35, %32 : vector<4x128xi1>, vector<4x128xf32>
    %37 = tpu.concatenate %29, %1, %36 in 0 : vector<4x128xf32>, vector<4x128xf32>, vector<4x128xf32> -> vector<12x128xf32>
    %c0_7 = arith.constant 0 : index
    %c0_8 = arith.constant 0 : index
    %38 = vector.load %arg2[%c0_7, %c0_8] : memref<64x12xf32, #tpu.memory_space<vmem>>, vector<64x12xf32>
    %cst_9 = arith.constant dense<0.000000e+00> : vector<64x128xf32>
    %39 = tpu.matmul %38, %37, %cst_9 {dimension_numbers = #tpu.dot_dimension_numbers<[1], [0], [0], [1], [0, 0, 1, 1], [], []>} : vector<64x12xf32>, vector<12x128xf32>, vector<64x128xf32> -> vector<64x128xf32>
    %c0_10 = arith.constant 0 : index
    %c0_11 = arith.constant 0 : index
    %40 = vector.load %arg3[%c0_10, %c0_11] : memref<64x1xf32, #tpu.memory_space<vmem>>, vector<64x1xf32>
    %41 = vector.broadcast %40 : vector<64x1xf32> to vector<64x128xf32>
    %42 = arith.addf %39, %41 : vector<64x128xf32>
    %cst_12 = arith.constant 0.000000e+00 : f32
    %43 = vector.broadcast %cst_12 : f32 to vector<64x128xf32>
    %44 = arith.maximumf %42, %43 : vector<64x128xf32>
    %45 = vector.extract_strided_slice %44 {offsets = [0, 0], sizes = [16, 128], strides = [1, 1]} : vector<64x128xf32> to vector<16x128xf32>
    %46 = vector.extract_strided_slice %44 {offsets = [16, 0], sizes = [16, 128], strides = [1, 1]} : vector<64x128xf32> to vector<16x128xf32>
    %47 = arith.maximumf %45, %46 : vector<16x128xf32>
    %48 = vector.extract_strided_slice %44 {offsets = [32, 0], sizes = [16, 128], strides = [1, 1]} : vector<64x128xf32> to vector<16x128xf32>
    %49 = vector.extract_strided_slice %44 {offsets = [48, 0], sizes = [16, 128], strides = [1, 1]} : vector<64x128xf32> to vector<16x128xf32>
    %50 = arith.maximumf %48, %49 : vector<16x128xf32>
    %c64_i32 = arith.constant 64 : i32
    %51 = vector.broadcast %c64_i32 : i32 to vector<1x128xi32>
    %52 = arith.cmpi slt, %18, %51 : vector<1x128xi32>
    %cst_13 = arith.constant 0.000000e+00 : f32
    %53 = vector.shape_cast %52 : vector<1x128xi1> to vector<1x128xi1>
    %54 = vector.broadcast %53 : vector<1x128xi1> to vector<16x128xi1>
    %55 = vector.broadcast %cst_13 : f32 to vector<16x128xf32>
    %56 = arith.select %54, %47, %55 : vector<16x128xi1>, vector<16x128xf32>
    %c64_i32_14 = arith.constant 64 : i32
    %57 = vector.broadcast %c64_i32_14 : i32 to vector<1x128xi32>
    %58 = arith.cmpi slt, %18, %57 : vector<1x128xi32>
    %cst_15 = arith.constant 0.000000e+00 : f32
    %59 = vector.shape_cast %58 : vector<1x128xi1> to vector<1x128xi1>
    %60 = vector.broadcast %59 : vector<1x128xi1> to vector<16x128xi1>
    %61 = vector.broadcast %cst_15 : f32 to vector<16x128xf32>
    %62 = arith.select %60, %50, %61 : vector<16x128xi1>, vector<16x128xf32>
    %63 = vector.extract_strided_slice %56 {offsets = [0, 127], sizes = [16, 1], strides = [1, 1]} : vector<16x128xf32> to vector<16x1xf32>
    %64 = vector.extract_strided_slice %56 {offsets = [0, 0], sizes = [16, 127], strides = [1, 1]} : vector<16x128xf32> to vector<16x127xf32>
    %65 = tpu.concatenate %63, %64 in 1 : vector<16x1xf32>, vector<16x127xf32> -> vector<16x128xf32>
    %cst_16 = arith.constant 0.000000e+00 : f32
    %66 = vector.shape_cast %20 : vector<1x128xi1> to vector<1x128xi1>
    %67 = vector.broadcast %66 : vector<1x128xi1> to vector<16x128xi1>
    %68 = vector.broadcast %cst_16 : f32 to vector<16x128xf32>
    %69 = arith.select %67, %68, %65 : vector<16x128xi1>, vector<16x128xf32>
    %70 = vector.extract_strided_slice %62 {offsets = [0, 127], sizes = [16, 1], strides = [1, 1]} : vector<16x128xf32> to vector<16x1xf32>
    %71 = vector.extract_strided_slice %62 {offsets = [0, 0], sizes = [16, 127], strides = [1, 1]} : vector<16x128xf32> to vector<16x127xf32>
    %72 = tpu.concatenate %70, %71 in 1 : vector<16x1xf32>, vector<16x127xf32> -> vector<16x128xf32>
    %cst_17 = arith.constant 0.000000e+00 : f32
    %73 = vector.shape_cast %20 : vector<1x128xi1> to vector<1x128xi1>
    %74 = vector.broadcast %73 : vector<1x128xi1> to vector<16x128xi1>
    %75 = vector.broadcast %cst_17 : f32 to vector<16x128xf32>
    %76 = arith.select %74, %75, %72 : vector<16x128xi1>, vector<16x128xf32>
    %77 = vector.extract_strided_slice %56 {offsets = [0, 1], sizes = [16, 127], strides = [1, 1]} : vector<16x128xf32> to vector<16x127xf32>
    %78 = vector.extract_strided_slice %56 {offsets = [0, 0], sizes = [16, 1], strides = [1, 1]} : vector<16x128xf32> to vector<16x1xf32>
    %79 = tpu.concatenate %77, %78 in 1 : vector<16x127xf32>, vector<16x1xf32> -> vector<16x128xf32>
    %cst_18 = arith.constant 0.000000e+00 : f32
    %80 = vector.shape_cast %22 : vector<1x128xi1> to vector<1x128xi1>
    %81 = vector.broadcast %80 : vector<1x128xi1> to vector<16x128xi1>
    %82 = vector.broadcast %cst_18 : f32 to vector<16x128xf32>
    %83 = arith.select %81, %82, %79 : vector<16x128xi1>, vector<16x128xf32>
    %84 = vector.extract_strided_slice %62 {offsets = [0, 1], sizes = [16, 127], strides = [1, 1]} : vector<16x128xf32> to vector<16x127xf32>
    %85 = vector.extract_strided_slice %62 {offsets = [0, 0], sizes = [16, 1], strides = [1, 1]} : vector<16x128xf32> to vector<16x1xf32>
    %86 = tpu.concatenate %84, %85 in 1 : vector<16x127xf32>, vector<16x1xf32> -> vector<16x128xf32>
    %cst_19 = arith.constant 0.000000e+00 : f32
    %87 = vector.shape_cast %22 : vector<1x128xi1> to vector<1x128xi1>
    %88 = vector.broadcast %87 : vector<1x128xi1> to vector<16x128xi1>
    %89 = vector.broadcast %cst_19 : f32 to vector<16x128xf32>
    %90 = arith.select %88, %89, %86 : vector<16x128xi1>, vector<16x128xf32>
    %91 = tpu.concatenate %69, %76, %56, %62, %83, %90 in 0 : vector<16x128xf32>, vector<16x128xf32>, vector<16x128xf32>, vector<16x128xf32>, vector<16x128xf32>, vector<16x128xf32> -> vector<96x128xf32>
    %c0_20 = arith.constant 0 : index
    %c0_21 = arith.constant 0 : index
    %92 = vector.load %arg4[%c0_20, %c0_21] : memref<64x96xf32, #tpu.memory_space<vmem>>, vector<64x96xf32>
    %cst_22 = arith.constant dense<0.000000e+00> : vector<64x128xf32>
    %93 = tpu.matmul %92, %91, %cst_22 {dimension_numbers = #tpu.dot_dimension_numbers<[1], [0], [0], [1], [0, 0, 1, 1], [], []>} : vector<64x96xf32>, vector<96x128xf32>, vector<64x128xf32> -> vector<64x128xf32>
    %c0_23 = arith.constant 0 : index
    %c0_24 = arith.constant 0 : index
    %94 = vector.load %arg5[%c0_23, %c0_24] : memref<64x1xf32, #tpu.memory_space<vmem>>, vector<64x1xf32>
    %95 = vector.broadcast %94 : vector<64x1xf32> to vector<64x128xf32>
    %96 = arith.addf %93, %95 : vector<64x128xf32>
    %cst_25 = arith.constant 0.000000e+00 : f32
    %97 = vector.broadcast %cst_25 : f32 to vector<64x128xf32>
    %98 = arith.maximumf %96, %97 : vector<64x128xf32>
    %99 = vector.extract_strided_slice %98 {offsets = [0, 0], sizes = [32, 128], strides = [1, 1]} : vector<64x128xf32> to vector<32x128xf32>
    %100 = vector.extract_strided_slice %98 {offsets = [32, 0], sizes = [32, 128], strides = [1, 1]} : vector<64x128xf32> to vector<32x128xf32>
    %101 = arith.maximumf %99, %100 : vector<32x128xf32>
    %102 = arith.truncf %101 : vector<32x128xf32> to vector<32x128xbf16>
    %c0_26 = arith.constant 0 : index
    %c0_27 = arith.constant 0 : index
    %c0_28 = arith.constant 0 : index
    %103 = vector.load %arg6[%c0_26, %c0_27, %c0_28] : memref<1x32x128xbf16, #tpu.memory_space<vmem>>, vector<1x32x128xbf16>
    %104 = vector.shape_cast %103 : vector<1x32x128xbf16> to vector<32x128xbf16>
    %105 = vector.shape_cast %102 : vector<32x128xbf16> to vector<1x32x128xbf16>
    tpu.vector_store %arg6[%c0_26, %c0_27, %c0_28], %105 {strides = array<i32>} : memref<1x32x128xbf16, #tpu.memory_space<vmem>>, vector<1x32x128xbf16>,
    return
  }
  func.func @transform_0(%arg0: i32) -> (i32, i32, i32) {
    %c0_i32 = arith.constant 0 : i32
    %c0_i32_0 = arith.constant 0 : i32
    %c0_i32_1 = arith.constant 0 : i32
    return %arg0, %c0_i32, %c0_i32_0 : i32, i32, i32
  }
  func.func @transform_1(%arg0: i32) -> (i32, i32) {
    %c0_i32 = arith.constant 0 : i32
    %c0_i32_0 = arith.constant 0 : i32
    %c0_i32_1 = arith.constant 0 : i32
    return %c0_i32, %c0_i32_0 : i32, i32
  }
  func.func @transform_2(%arg0: i32) -> (i32, i32) {
    %c0_i32 = arith.constant 0 : i32
    %c0_i32_0 = arith.constant 0 : i32
    %c0_i32_1 = arith.constant 0 : i32
    return %c0_i32, %c0_i32_0 : i32, i32
  }
  func.func @transform_3(%arg0: i32) -> (i32, i32) {
    %c0_i32 = arith.constant 0 : i32
    %c0_i32_0 = arith.constant 0 : i32
    %c0_i32_1 = arith.constant 0 : i32
    return %c0_i32, %c0_i32_0 : i32, i32
  }
  func.func @transform_4(%arg0: i32) -> (i32, i32) {
    %c0_i32 = arith.constant 0 : i32
    %c0_i32_0 = arith.constant 0 : i32
    %c0_i32_1 = arith.constant 0 : i32
    return %c0_i32, %c0_i32_0 : i32, i32
  }
  func.func @transform_5(%arg0: i32) -> (i32, i32, i32) {
    %c0_i32 = arith.constant 0 : i32
    %c0_i32_0 = arith.constant 0 : i32
    %c0_i32_1 = arith.constant 0 : i32
    return %arg0, %c0_i32, %c0_i32_0 : i32, i32, i32
  }
}

</mosaic_0001>

<llo_original>
// kernel: ecg_classifier_forward.2
$region0: #{ecg_classifier_forward.2}
  #allocation0 [shape = 'u32[]', space=smem, size = 0x4, offset = 0x4, fixed_abs, tag = 'smem constant byte address 0x4 - core index']
  #allocation1 [shape = 'u32[144,128]{1,0:T(1,128)}', space=vmem, size = 0x12000, scoped, tag = 'internal scratch']
  %s0 = inlined_call_operand.vmem [shape: f32[2,4,128], index: 0, kind: input, shape index: {}]
  %s1 = inlined_call_operand.vmem [shape: f32[64,12], index: 1, kind: input, shape index: {}]
  %s2 = inlined_call_operand.vmem [shape: f32[64,1], index: 2, kind: input, shape index: {}]
  %s3 = inlined_call_operand.hbm [shape: f32[64,96], index: 3, kind: input, shape index: {}]
  %s4 = inlined_call_operand.vmem [shape: f32[64,1], index: 4, kind: input, shape index: {}]
  %s5 = inlined_call_operand.vmem [shape: bf16[2,32,128], index: 5, kind: output, shape index: {}]
  %s6 = sld [smem:[#allocation0]]
  $region57: #{ecg_classifier_forward.2} parent=0
    _
  %s8 = ssub.s32 1, %s6
  %s9 = scalar_select 0, %s8, %s6
  $region1: #{ecg_classifier_forward.2} parent=0
    #allocation2 [shape = 'u8[32768]{0}', space=vmem, size = 0x8000, scoped, tag = 'input window, operand 3, single buffered']
    #allocation3 [shape = 's32[2]{0}', space=sflag, size = 0x8, scoped, tag = 'scoped memory for ecg_classifier_forward.2']
    %10 = vsyncpa [#allocation3], 0
    loop: start=0, step=1, limit=4
    $region2: #{ecg_classifier_forward.2} parent=1 // loop_pre_header
      _
    $region3: #{ecg_classifier_forward.2} parent=1 // loop_header
      %s12 = sphi 0, %s16
      %p13 = scmp.ge.s32.totalorder %s12, 4
      %s22 = sphi 0, %s24
      %s25 = sphi 0, %s22
      %s26 = sphi 0, %s25
      %s42 = sphi 0, %s26
      %s46 = sphi 0, %s46
      %s48 = sphi 0, %s46
      %s49 = sphi 0, %s48
      %s63 = sphi 0, %s49
      %s67 = sphi 0, %s67
      %s69 = sphi 0, %s67
      %s70 = sphi 0, %s69
      %s84 = sphi 0, %s70
      %s88 = sphi 0, %s88
      %s90 = sphi 0, %s88
      %s91 = sphi 0, %s90
      %s105 = sphi 0, %s91
      %s109 = sphi 0, %s109
      %s111 = sphi 0, %s109
      %s112 = sphi 0, %s111
      %s126 = sphi 0, %s112
      %s132 = sphi 0, %s134
      %s135 = sphi 0, %s132
      %s136 = sphi 0, %s135
      %s152 = sphi 0, %s136
    $region4: #{ecg_classifier_forward.2} parent=1 // loop_header_branch
      %15 = sbr.rel (%p13) target = $region8
    $region5: #{ecg_classifier_forward.2} parent=1 // loop_body
      %s17 = ssub.s32 %s12, 1
      %s18 = ssub.s32 %s12, 2
      %s19 = sadd.s32 %s12, 1
      %s20 = ssub.s32 %s12, %s19
      %p21 = scmp.eq.s32.totalorder %s20, 0
      %s23 = sadd.s32 %s22, 1
      %s24 = scalar_select %p21, %s22, %s23
      %p27 = pneg %p21
      %p28 = scmp.eq.s32.totalorder %s12, 1
      %p29 = por %p27, %p28
      %p30 = scmp.ne.s32.totalorder %s22, %s25
      %p31 = scmp.eq.s32.totalorder %s12, 0
      %p32 = por %p30, %p31
      %p33 = scmp.ne.s32.totalorder %s22, %s25
      %p34 = scmp.eq.s32.totalorder %s17, 1
      %p35 = por %p33, %p34
      %p36 = scmp.ne.s32.totalorder %s25, %s26
      %p37 = scmp.eq.s32.totalorder %s17, 0
      %p38 = por %p36, %p37
      %p39 = scmp.ne.s32.totalorder %s25, %s26
      %p40 = scmp.eq.s32.totalorder %s18, 1
      %p41 = por %p39, %p40
      %p43 = scmp.ne.s32.totalorder %s26, %s42
      %p44 = scmp.eq.s32.totalorder %s18, 0
      %p45 = por %p43, %p44
      %s47 = sadd.s32 %s46, 1
      %p50 = scmp.eq.s32.totalorder %s12, 1
      %p51 = scmp.ne.s32.totalorder %s46, %s48
      %p52 = scmp.eq.s32.totalorder %s12, 0
      %p53 = por %p51, %p52
      %p54 = scmp.ne.s32.totalorder %s46, %s48
      %p55 = scmp.eq.s32.totalorder %s17, 1
      %p56 = por %p54, %p55
      %p57 = scmp.ne.s32.totalorder %s48, %s49
      %p58 = scmp.eq.s32.totalorder %s17, 0
      %p59 = por %p57, %p58
      %p60 = scmp.ne.s32.totalorder %s48, %s49
      %p61 = scmp.eq.s32.totalorder %s18, 1
      %p62 = por %p60, %p61
      %p64 = scmp.ne.s32.totalorder %s49, %s63
      %p65 = scmp.eq.s32.totalorder %s18, 0
      %p66 = por %p64, %p65
      %s68 = sadd.s32 %s67, 1
      %p71 = scmp.eq.s32.totalorder %s12, 1
      %p72 = scmp.ne.s32.totalorder %s67, %s69
      %p73 = scmp.eq.s32.totalorder %s12, 0
      %p74 = por %p72, %p73
      %p75 = scmp.ne.s32.totalorder %s67, %s69
      %p76 = scmp.eq.s32.totalorder %s17, 1
      %p77 = por %p75, %p76
      %p78 = scmp.ne.s32.totalorder %s69, %s70
      %p79 = scmp.eq.s32.totalorder %s17, 0
      %p80 = por %p78, %p79
      %p81 = scmp.ne.s32.totalorder %s69, %s70
      %p82 = scmp.eq.s32.totalorder %s18, 1
      %p83 = por %p81, %p82
      %p85 = scmp.ne.s32.totalorder %s70, %s84
      %p86 = scmp.eq.s32.totalorder %s18, 0
      %p87 = por %p85, %p86
      %s89 = sadd.s32 %s88, 1
      %p92 = scmp.eq.s32.totalorder %s12, 1
      %p93 = scmp.ne.s32.totalorder %s88, %s90
      %p94 = scmp.eq.s32.totalorder %s12, 0
      %p95 = por %p93, %p94
      %p96 = scmp.ne.s32.totalorder %s88, %s90
      %p97 = scmp.eq.s32.totalorder %s17, 1
      %p98 = por %p96, %p97
      %p99 = scmp.ne.s32.totalorder %s90, %s91
      %p100 = scmp.eq.s32.totalorder %s17, 0
      %p101 = por %p99, %p100
      %p102 = scmp.ne.s32.totalorder %s90, %s91
      %p103 = scmp.eq.s32.totalorder %s18, 1
      %p104 = por %p102, %p103
      %p106 = scmp.ne.s32.totalorder %s91, %s105
      %p107 = scmp.eq.s32.totalorder %s18, 0
      %p108 = por %p106, %p107
      %s110 = sadd.s32 %s109, 1
      %p113 = scmp.eq.s32.totalorder %s12, 1
      %p114 = scmp.ne.s32.totalorder %s109, %s111
      %p115 = scmp.eq.s32.totalorder %s12, 0
      %p116 = por %p114, %p115
      %p117 = scmp.ne.s32.totalorder %s109, %s111
      %p118 = scmp.eq.s32.totalorder %s17, 1
      %p119 = por %p117, %p118
      %p120 = scmp.ne.s32.totalorder %s111, %s112
      %p121 = scmp.eq.s32.totalorder %s17, 0
      %p122 = por %p120, %p121
      %p123 = scmp.ne.s32.totalorder %s111, %s112
      %p124 = scmp.eq.s32.totalorder %s18, 1
      %p125 = por %p123, %p124
      %p127 = scmp.ne.s32.totalorder %s112, %s126
      %p128 = scmp.eq.s32.totalorder %s18, 0
      %p129 = por %p127, %p128
      %s130 = ssub.s32 %s12, %s19
      %p131 = scmp.eq.s32.totalorder %s130, 0
      %s133 = sadd.s32 %s132, 1
      %s134 = scalar_select %p131, %s132, %s133
      %p137 = pneg %p131
      %p138 = scmp.eq.s32.totalorder %s12, 1
      %p139 = por %p137, %p138
      %p140 = scmp.ne.s32.totalorder %s132, %s135
      %p141 = scmp.eq.s32.totalorder %s12, 0
      %p142 = por %p140, %p141
      %p143 = scmp.ne.s32.totalorder %s132, %s135
      %p144 = scmp.eq.s32.totalorder %s17, 1
      %p145 = por %p143, %p144
      %p146 = scmp.ne.s32.totalorder %s135, %s136
      %p147 = scmp.eq.s32.totalorder %s17, 0
      %p148 = por %p146, %p147
      %p149 = scmp.ne.s32.totalorder %s135, %s136
      %p150 = scmp.eq.s32.totalorder %s18, 1
      %p151 = por %p149, %p150
      %p153 = scmp.ne.s32.totalorder %s136, %s152
      %p154 = scmp.eq.s32.totalorder %s18, 0
      %p155 = por %p153, %p154
      %p156 = scmp.le.s32.totalorder 1, %s12
      %p157 = scmp.lt.s32.totalorder %s12, 3
      %p158 = pnand %p156, %p157
      %p159 = pneg %p158
      // Predicated region
      $region9: #{ecg_classifier_forward.2} parent=5 // pred_check
        _
      $region10: #{ecg_classifier_forward.2} parent=5 // pred_check_branch
        %161 = sbr.rel (%p158) target = $region12
      $region11: #{ecg_classifier_forward.2} parent=5 // pred_region
        %s162 = ssub.s32 %s12, 1
        // Predicated region
        $region13: #{ecg_classifier_forward.2} parent=11 // pred_check
          %p163 = pneg %p59
        $region14: #{ecg_classifier_forward.2} parent=11 // pred_check_branch
          %165 = sbr.rel (%p163) target = $region16
        $region15: #{ecg_classifier_forward.2} parent=11 // pred_region
          _
        $region16: #{ecg_classifier_forward.2} parent=11 // pred_fallthru
          _
        // Predicated region
        $region17: #{ecg_classifier_forward.2} parent=11 // pred_check
          %p166 = pneg %p80
        $region18: #{ecg_classifier_forward.2} parent=11 // pred_check_branch
          %168 = sbr.rel (%p166) target = $region20
        $region19: #{ecg_classifier_forward.2} parent=11 // pred_region
          _
        $region20: #{ecg_classifier_forward.2} parent=11 // pred_fallthru
          _
        // Predicated region
        $region21: #{ecg_classifier_forward.2} parent=11 // pred_check
          %p169 = pneg %p101
        $region22: #{ecg_classifier_forward.2} parent=11 // pred_check_branch
          %171 = sbr.rel (%p169) target = $region24
        $region23: #{ecg_classifier_forward.2} parent=11 // pred_region
          %s173 = ssub.s32 1024, 1024
          %174 = vsyncadd [#allocation3], %s173
          %s175 = sshll.u32 [#allocation2], 4
          %s176 = int_to_ptr.vmem [resolvable:$true] %s175
          %181 = dma.hbm_to_vmem [thread:$0]  %s3, 1024, %s176, [#allocation3], 128, 128, 8
        $region24: #{ecg_classifier_forward.2} parent=11 // pred_fallthru
          _
        // Predicated region
        $region25: #{ecg_classifier_forward.2} parent=11 // pred_check
          %p182 = pneg %p122
        $region26: #{ecg_classifier_forward.2} parent=11 // pred_check_branch
          %184 = sbr.rel (%p182) target = $region28
        $region27: #{ecg_classifier_forward.2} parent=11 // pred_region
          _
        $region28: #{ecg_classifier_forward.2} parent=11 // pred_fallthru
          _
      $region12: #{ecg_classifier_forward.2} parent=5 // pred_fallthru
        _
      %p185 = scmp.lt.s32.totalorder %s12, 2
      // Predicated region
      $region29: #{ecg_classifier_forward.2} parent=5 // pred_check
        %p186 = pneg %p185
      $region30: #{ecg_classifier_forward.2} parent=5 // pred_check_branch
        %188 = sbr.rel (%p186) target = $region32
      $region31: #{ecg_classifier_forward.2} parent=5 // pred_region
        // Predicated region
        $region33: #{ecg_classifier_forward.2} parent=31 // pred_check
          %p189 = pneg %p32
        $region34: #{ecg_classifier_forward.2} parent=31 // pred_check_branch
          %191 = sbr.rel (%p189) target = $region36
        $region35: #{ecg_classifier_forward.2} parent=31 // pred_region
          %p192 = scmp.lt.s32.totalorder %s12, 1
          %s193 = scalar_select %p192, %s12, 1
          %s194 = smul.addr %s193, 4
          %s195 = scalar_lea.vmem %s0, %s194
        $region36: #{ecg_classifier_forward.2} parent=31 // pred_fallthru
          _
      $region32: #{ecg_classifier_forward.2} parent=5 // pred_fallthru
        _
      %p196 = scmp.le.s32.totalorder 1, %s12
      %p197 = scmp.lt.s32.totalorder %s12, 3
      %p198 = pnand %p196, %p197
      %p199 = pneg %p198
      // Predicated region
      $region37: #{ecg_classifier_forward.2} parent=5 // pred_check
        _
      $region38: #{ecg_classifier_forward.2} parent=5 // pred_check_branch
        %201 = sbr.rel (%p198) target = $region40
      $region39: #{ecg_classifier_forward.2} parent=5 // pred_region
        %s202 = ssub.s32 %s12, 1
        // Predicated region
        $region41: #{ecg_classifier_forward.2} parent=39 // pred_check
          %p203 = pneg %p101
        $region42: #{ecg_classifier_forward.2} parent=39 // pred_check_branch
          %205 = sbr.rel (%p203) target = $region44
        $region43: #{ecg_classifier_forward.2} parent=39 // pred_region
          %206 = dma.done [#allocation3], 1024
        $region44: #{ecg_classifier_forward.2} parent=39 // pred_fallthru
          _
        %p207 = scmp.lt.s32.totalorder %s17, 1
        %s208 = scalar_select %p207, %s17, 1
        %s209 = smul.addr %s208, 4
        %s210 = scalar_lea.vmem %s0, %s209
        %p211 = pneg %p38
        %p212 = pneg %p35
        %p213 = pneg %p59
        %p214 = pneg %p56
        %p215 = pneg %p80
        %p216 = pneg %p77
        %p217 = pneg %p101
        %p218 = pneg %p98
        %p219 = pneg %p122
        %p220 = pneg %p119
        %p221 = pneg %p148
        %p222 = pneg %p145
        %p223 = scmp.lt.s32.totalorder %s17, 1
        %s224 = scalar_select %p223, %s17, 1
        %s225 = smul.addr %s224, 4
        %s226 = smul.addr %s225, 4
        %s227 = scalar_lea.vmem %s5, %s226
        %p228 = scmp.lt.s32.totalorder %s17, 1
        %s229 = scalar_select %p228, %s17, 1
        %s230 = smul.addr %s229, 4
        %s231 = scalar_lea.vmem %s0, %s230
        %p232 = scmp.lt.s32.totalorder %s17, 1
        %s233 = scalar_select %p232, %s17, 1
        %s234 = smul.addr %s233, 4
        %s235 = smul.addr %s234, 4
        %s236 = scalar_lea.vmem %s5, %s235
        %v237 = vld [vmem:[%s231] sm:$0xf]
        %v238 = vlaneseq
        %v239 = vand.u32 %v238, 127
        %vm240 = vcmp.lt.s32.totalorder %v239, 0
        %v241 = vsub.s32 0, %v239
        %v242 = vsel %vm240, %v241, %v239
        %v243 = vshrl.u32 %v242, 7
        %v244 = vand.u32 %v242, 127
        %v245 = vsub.s32 0, %v244
        %v246 = vsel %vm240, %v245, %v244
        %vm247 = vcmp.ne.s32.totalorder %v246, 0
        %vm248 = vcmp.lt.s32.totalorder %v246, 0
        %vm249 = vmand %vm248, %vm247
        %v250 = vadd.s32 %v246, 128
        %v251 = vsel %vm249, %v250, %v246
        %vm252 = vcmp.eq.s32.totalorder %v251, 0
        %vm253 = vcmp.eq.s32.totalorder %v251, 127
        %255 = vrot.lane.b32.xlu0 %v237, 1
        %v256 = vpop.permute.xlu0 %255
        %v258 = vsel %vm252, 1, 0
        %vm259 = vcmp.eq.s32.totalorder %v258, 1
        %v260 = vsel %vm259, 0.0, %v256
        %261 = vrot.lane.b32.xlu0 %v237, 127
        %v262 = vpop.permute.xlu0 %261
        %v264 = vsel %vm253, 1, 0
        %vm265 = vcmp.eq.s32.totalorder %v264, 1
        %v266 = vsel %vm265, 0.0, %v262
        %v267 = vrot.slane %v237, 4
        %vm269 = vcmask 1043456
        %v270 = vsel %vm269, %v260, %v267
        %v271 = vld [vmem:[%s1] sm:$0xff]
        %v272 = vld [vmem:[%s1 + $0x8] sm:$0xff]
        %v273 = vld [vmem:[%s1 + $0x10] sm:$0xff]
        %v274 = vld [vmem:[%s1 + $0x18] sm:$0xff]
        %v275 = vld [vmem:[%s1 + $0x20] sm:$0xff]
        %v276 = vld [vmem:[%s1 + $0x28] sm:$0xff]
        %v277 = vld [vmem:[%s1 + $0x30] sm:$0xff]
        %v278 = vld [vmem:[%s1 + $0x38] sm:$0xff]
        %v279 = vld [vmem:[%s2] sm:$0xff]
        %v280 = vld [vmem:[%s2 + $0x8] sm:$0xff]
        %v281 = vld [vmem:[%s2 + $0x10] sm:$0xff]
        %v282 = vld [vmem:[%s2 + $0x18] sm:$0xff]
        %v283 = vld [vmem:[%s2 + $0x20] sm:$0xff]
        %v284 = vld [vmem:[%s2 + $0x28] sm:$0xff]
        %v285 = vld [vmem:[%s2 + $0x30] sm:$0xff]
        %v286 = vld [vmem:[%s2 + $0x38] sm:$0xff]
        %288 = vset.pattern.permute.xlu0 0
        %289 = vperm.xlu0 %288, %v279
        %v290 = vpop.permute.xlu0 %289
        %293 = vset.pattern.permute.xlu0 0
        %294 = vperm.xlu0 %293, %v280
        %v295 = vpop.permute.xlu0 %294
        %298 = vset.pattern.permute.xlu0 0
        %299 = vperm.xlu0 %298, %v281
        %v300 = vpop.permute.xlu0 %299
        %303 = vset.pattern.permute.xlu0 0
        %304 = vperm.xlu0 %303, %v282
        %v305 = vpop.permute.xlu0 %304
        %308 = vset.pattern.permute.xlu0 0
        %309 = vperm.xlu0 %308, %v283
        %v310 = vpop.permute.xlu0 %309
        %313 = vset.pattern.permute.xlu0 0
        %314 = vperm.xlu0 %313, %v284
        %v315 = vpop.permute.xlu0 %314
        %318 = vset.pattern.permute.xlu0 0
        %319 = vperm.xlu0 %318, %v285
        %v320 = vpop.permute.xlu0 %319
        %323 = vset.pattern.permute.xlu0 0
        %324 = vperm.xlu0 %323, %v286
        %v325 = vpop.permute.xlu0 %324
        %vm327 = vcmask 97280
        %v329 = vsel %vm327, %v271, 0
        %v332 = vsel %vm327, %v272, 0
        %v335 = vsel %vm327, %v273, 0
        %v338 = vsel %vm327, %v274, 0
        %v341 = vsel %vm327, %v275, 0
        %v344 = vsel %vm327, %v276, 0
        %v347 = vsel %vm327, %v277, 0
        %v350 = vsel %vm327, %v278, 0
        %v353 = vsel %vm269, %v266, 0
        %355 = vmatprep.subr.mxu0 0.0
        %356 = vmatpush1.msra.mxu0 %v270
        %357 = vmatprep.subr.mxu0 0.0
        %358 = vmatpush1.msra.mxu0 %v353
        %359 = vmatprep.subr.mxu0 0.0
        %360 = vmatpush1.msra.mxu0 0.0
        %361 = vmatprep.subr.mxu0 0.0
        %362 = vmatpush1.msra.mxu0 0.0
        %363 = vmatprep.subr.mxu0 0.0
        %364 = vmatpush1.msra.mxu0 0.0
        %365 = vmatprep.subr.mxu0 0.0
        %366 = vmatpush1.msra.mxu0 0.0
        %367 = vmatprep.subr.mxu0 0.0
        %368 = vmatpush1.msra.mxu0 0.0
        %369 = vmatprep.subr.mxu0 0.0
        %370 = vmatpush1.msra.mxu0 0.0
        %371 = vmatprep.subr.mxu0 0.0
        %372 = vmatpush1.msra.mxu0 0.0
        %373 = vmatprep.subr.mxu0 0.0
        %374 = vmatpush1.msra.mxu0 0.0
        %375 = vmatprep.subr.mxu0 0.0
        %376 = vmatpush1.msra.mxu0 0.0
        %377 = vmatprep.subr.mxu0 0.0
        %378 = vmatpush1.msra.mxu0 0.0
        %379 = vmatprep.subr.mxu0 0.0
        %380 = vmatpush1.msra.mxu0 0.0
        %381 = vmatprep.subr.mxu0 0.0
        %382 = vmatpush1.msra.mxu0 0.0
        %383 = vmatprep.subr.mxu0 0.0
        %384 = vmatpush1.msra.mxu0 0.0
        %385 = vmatprep.subr.mxu0 0.0
        %386 = vmatpush1.msra.mxu0 0.0
        %387 = vmatprep.subr.mxu0 0.0
        %388 = vmatpush1.msra.mxu0 0.0
        %389 = vmatprep.subr.mxu0 0.0
        %390 = vmatpush1.msra.mxu0 0.0
        %391 = vmatprep.subr.mxu0 0.0
        %392 = vmatpush1.msra.mxu0 0.0
        %393 = vmatprep.subr.mxu0 0.0
        %394 = vmatpush1.msra.mxu0 0.0
        %395 = vmatprep.subr.mxu0 0.0
        %396 = vmatpush1.msra.mxu0 0.0
        %397 = vmatprep.subr.mxu0 0.0
        %398 = vmatpush1.msra.mxu0 0.0
        %399 = vmatprep.subr.mxu0 0.0
        %400 = vmatpush1.msra.mxu0 0.0
        %401 = vmatprep.subr.mxu0 0.0
        %402 = vmatpush1.msra.mxu0 0.0
        %403 = vmatprep.subr.mxu0 0.0
        %404 = vmatpush1.msra.mxu0 0.0
        %405 = vmatprep.subr.mxu0 0.0
        %406 = vmatpush1.msra.mxu0 0.0
        %407 = vmatprep.subr.mxu0 0.0
        %408 = vmatpush1.msra.mxu0 0.0
        %409 = vmatprep.subr.mxu0 0.0
        %410 = vmatpush1.msra.mxu0 0.0
        %411 = vmatprep.subr.mxu0 0.0
        %412 = vmatpush1.msra.mxu0 0.0
        %413 = vmatprep.subr.mxu0 0.0
        %414 = vmatpush1.msra.mxu0 0.0
        %415 = vmatprep.subr.mxu0 0.0
        %416 = vmatpush1.msra.mxu0 0.0
        %417 = vmatprep.subr.mxu0 0.0
        %418 = vmatpush1.msra.mxu0 0.0
        %419 = vmatprep.mubr.f32.mxu0 0.0
        %420 = vmatmul.mubr.f32.gmra.mrb[0].mxu0 %v329
        %v421 = vpop.f32.mrb[0].mxu0
        %v422 = vadd.f32 %v290, %v421
        %v423 = vpop.f32.mrb[0].mxu0
        %424 = vmatprep.mubr.f32.mxu0 0.0
        %425 = vmatmul.mubr.f32.gmra.mrb[0].mxu0 %v332
        %v426 = vpop.f32.mrb[0].mxu0
        %v427 = vadd.f32 %v295, %v426
        %v428 = vpop.f32.mrb[0].mxu0
        %429 = vmatprep.mubr.f32.mxu0 0.0
        %430 = vmatmul.mubr.f32.gmra.mrb[0].mxu0 %v335
        %v431 = vpop.f32.mrb[0].mxu0
        %v432 = vadd.f32 %v300, %v431
        %v433 = vpop.f32.mrb[0].mxu0
        %434 = vmatprep.mubr.f32.mxu0 0.0
        %435 = vmatmul.mubr.f32.gmra.mrb[0].mxu0 %v338
        %v436 = vpop.f32.mrb[0].mxu0
        %v437 = vadd.f32 %v305, %v436
        %v438 = vpop.f32.mrb[0].mxu0
        %439 = vmatprep.mubr.f32.mxu0 0.0
        %440 = vmatmul.mubr.f32.gmra.mrb[0].mxu0 %v341
        %v441 = vpop.f32.mrb[0].mxu0
        %v442 = vadd.f32 %v310, %v441
        %v443 = vpop.f32.mrb[0].mxu0
        %444 = vmatprep.mubr.f32.mxu0 0.0
        %445 = vmatmul.mubr.f32.gmra.mrb[0].mxu0 %v344
        %v446 = vpop.f32.mrb[0].mxu0
        %v447 = vadd.f32 %v315, %v446
        %v448 = vpop.f32.mrb[0].mxu0
        %449 = vmatprep.mubr.f32.mxu0 0.0
        %450 = vmatmul.mubr.f32.gmra.mrb[0].mxu0 %v347
        %v451 = vpop.f32.mrb[0].mxu0
        %v452 = vadd.f32 %v320, %v451
        %v453 = vpop.f32.mrb[0].mxu0
        %454 = vmatprep.mubr.f32.mxu0 0.0
        %455 = vmatmul.mubr.f32.gmra.mrb[0].mxu0 %v350
        %v456 = vpop.f32.mrb[0].mxu0
        %v457 = vadd.f32 %v325, %v456
        %v458 = vpop.f32.mrb[0].mxu0
        %459 = vdwg.mxu0
        %v460 = vmax.f32 %v422, 0.0
        %v461 = vmax.f32 %v427, 0.0
        %v462 = vmax.f32 %v432, 0.0
        %v463 = vmax.f32 %v437, 0.0
        %v464 = vmax.f32 %v442, 0.0
        %v465 = vmax.f32 %v447, 0.0
        %v466 = vmax.f32 %v452, 0.0
        %v467 = vmax.f32 %v457, 0.0
        %v468 = vmax.f32 %v460, %v462
        %v469 = vmax.f32 %v461, %v463
        %v470 = vmax.f32 %v464, %v466
        %v471 = vmax.f32 %v465, %v467
        %vm472 = vcmp.lt.s32.totalorder %v251, 64
        %v473 = vsel %vm472, 1, 0
        %vm474 = vcmp.eq.s32.totalorder %v473, 1
        %v475 = vsel %vm474, %v468, 0.0
        %v476 = vsel %vm474, %v469, 0.0
        %v477 = vsel %vm474, %v470, 0.0
        %v478 = vsel %vm474, %v471, 0.0
        %481 = vrot.lane.b32.xlu0 %v475, 1
        %v482 = vpop.permute.xlu0 %481
        %483 = vrot.lane.b32.xlu0 %v476, 1
        %v484 = vpop.permute.xlu0 %483
        %v487 = vsel %vm259, 0.0, %v482
        %v488 = vsel %vm259, 0.0, %v484
        %491 = vrot.lane.b32.xlu0 %v477, 1
        %v492 = vpop.permute.xlu0 %491
        %493 = vrot.lane.b32.xlu0 %v478, 1
        %v494 = vpop.permute.xlu0 %493
        %v497 = vsel %vm259, 0.0, %v492
        %v498 = vsel %vm259, 0.0, %v494
        %499 = vrot.lane.b32.xlu0 %v475, 127
        %v500 = vpop.permute.xlu0 %499
        %501 = vrot.lane.b32.xlu0 %v476, 127
        %v502 = vpop.permute.xlu0 %501
        %v505 = vsel %vm265, 0.0, %v500
        %v506 = vsel %vm265, 0.0, %v502
        %507 = vrot.lane.b32.xlu0 %v477, 127
        %v508 = vpop.permute.xlu0 %507
        %509 = vrot.lane.b32.xlu0 %v478, 127
        %v510 = vpop.permute.xlu0 %509
        %v513 = vsel %vm265, 0.0, %v508
        %v514 = vsel %vm265, 0.0, %v510
        %v515 = vld [vmem:[#allocation2] sm:$0xff]
        %v516 = vld [vmem:[#allocation2 + $0x8] sm:$0xff]
        %v517 = vld [vmem:[#allocation2 + $0x10] sm:$0xff]
        %v518 = vld [vmem:[#allocation2 + $0x18] sm:$0xff]
        %v519 = vld [vmem:[#allocation2 + $0x20] sm:$0xff]
        %v520 = vld [vmem:[#allocation2 + $0x28] sm:$0xff]
        %v521 = vld [vmem:[#allocation2 + $0x30] sm:$0xff]
        %v522 = vld [vmem:[#allocation2 + $0x38] sm:$0xff]
        %v523 = vld [vmem:[%s4] sm:$0xff]
        %v524 = vld [vmem:[%s4 + $0x8] sm:$0xff]
        %v525 = vld [vmem:[%s4 + $0x10] sm:$0xff]
        %v526 = vld [vmem:[%s4 + $0x18] sm:$0xff]
        %v527 = vld [vmem:[%s4 + $0x20] sm:$0xff]
        %v528 = vld [vmem:[%s4 + $0x28] sm:$0xff]
        %v529 = vld [vmem:[%s4 + $0x30] sm:$0xff]
        %v530 = vld [vmem:[%s4 + $0x38] sm:$0xff]
        %532 = vset.pattern.permute.xlu0 0
        %533 = vperm.xlu0 %532, %v523
        %v534 = vpop.permute.xlu0 %533
        %537 = vset.pattern.permute.xlu0 0
        %538 = vperm.xlu0 %537, %v524
        %v539 = vpop.permute.xlu0 %538
        %542 = vset.pattern.permute.xlu0 0
        %543 = vperm.xlu0 %542, %v525
        %v544 = vpop.permute.xlu0 %543
        %547 = vset.pattern.permute.xlu0 0
        %548 = vperm.xlu0 %547, %v526
        %v549 = vpop.permute.xlu0 %548
        %552 = vset.pattern.permute.xlu0 0
        %553 = vperm.xlu0 %552, %v527
        %v554 = vpop.permute.xlu0 %553
        %557 = vset.pattern.permute.xlu0 0
        %558 = vperm.xlu0 %557, %v528
        %v559 = vpop.permute.xlu0 %558
        %562 = vset.pattern.permute.xlu0 0
        %563 = vperm.xlu0 %562, %v529
        %v564 = vpop.permute.xlu0 %563
        %567 = vset.pattern.permute.xlu0 0
        %568 = vperm.xlu0 %567, %v530
        %v569 = vpop.permute.xlu0 %568
        %vm571 = vcmask 785408
        %v573 = vsel %vm571, %v515, 0
        %v576 = vsel %vm571, %v516, 0
        %v579 = vsel %vm571, %v517, 0
        %v582 = vsel %vm571, %v518, 0
        %v585 = vsel %vm571, %v519, 0
        %v588 = vsel %vm571, %v520, 0
        %v591 = vsel %vm571, %v521, 0
        %v594 = vsel %vm571, %v522, 0
        %596 = vmatprep.subr.mxu0 0.0
        %597 = vmatpush1.msra.mxu0 %v487
        %598 = vmatprep.subr.mxu0 0.0
        %599 = vmatpush1.msra.mxu0 %v488
        %600 = vmatprep.subr.mxu0 0.0
        %601 = vmatpush1.msra.mxu0 %v497
        %602 = vmatprep.subr.mxu0 0.0
        %603 = vmatpush1.msra.mxu0 %v498
        %604 = vmatprep.subr.mxu0 0.0
        %605 = vmatpush1.msra.mxu0 %v475
        %606 = vmatprep.subr.mxu0 0.0
        %607 = vmatpush1.msra.mxu0 %v476
        %608 = vmatprep.subr.mxu0 0.0
        %609 = vmatpush1.msra.mxu0 %v477
        %610 = vmatprep.subr.mxu0 0.0
        %611 = vmatpush1.msra.mxu0 %v478
        %612 = vmatprep.subr.mxu0 0.0
        %613 = vmatpush1.msra.mxu0 %v505
        %614 = vmatprep.subr.mxu0 0.0
        %615 = vmatpush1.msra.mxu0 %v506
        %616 = vmatprep.subr.mxu0 0.0
        %617 = vmatpush1.msra.mxu0 %v513
        %618 = vmatprep.subr.mxu0 0.0
        %619 = vmatpush1.msra.mxu0 %v514
        %620 = vmatprep.subr.mxu0 0.0
        %621 = vmatpush1.msra.mxu0 0.0
        %622 = vmatprep.subr.mxu0 0.0
        %623 = vmatpush1.msra.mxu0 0.0
        %624 = vmatprep.subr.mxu0 0.0
        %625 = vmatpush1.msra.mxu0 0.0
        %626 = vmatprep.subr.mxu0 0.0
        %627 = vmatpush1.msra.mxu0 0.0
        %628 = vmatprep.subr.mxu0 0.0
        %629 = vmatpush1.msra.mxu0 0.0
        %630 = vmatprep.subr.mxu0 0.0
        %631 = vmatpush1.msra.mxu0 0.0
        %632 = vmatprep.subr.mxu0 0.0
        %633 = vmatpush1.msra.mxu0 0.0
        %634 = vmatprep.subr.mxu0 0.0
        %635 = vmatpush1.msra.mxu0 0.0
        %636 = vmatprep.subr.mxu0 0.0
        %637 = vmatpush1.msra.mxu0 0.0
        %638 = vmatprep.subr.mxu0 0.0
        %639 = vmatpush1.msra.mxu0 0.0
        %640 = vmatprep.subr.mxu0 0.0
        %641 = vmatpush1.msra.mxu0 0.0
        %642 = vmatprep.subr.mxu0 0.0
        %643 = vmatpush1.msra.mxu0 0.0
        %644 = vmatprep.subr.mxu0 0.0
        %645 = vmatpush1.msra.mxu0 0.0
        %646 = vmatprep.subr.mxu0 0.0
        %647 = vmatpush1.msra.mxu0 0.0
        %648 = vmatprep.subr.mxu0 0.0
        %649 = vmatpush1.msra.mxu0 0.0
        %650 = vmatprep.subr.mxu0 0.0
        %651 = vmatpush1.msra.mxu0 0.0
        %652 = vmatprep.subr.mxu0 0.0
        %653 = vmatpush1.msra.mxu0 0.0
        %654 = vmatprep.subr.mxu0 0.0
        %655 = vmatpush1.msra.mxu0 0.0
        %656 = vmatprep.subr.mxu0 0.0
        %657 = vmatpush1.msra.mxu0 0.0
        %658 = vmatprep.subr.mxu0 0.0
        %659 = vmatpush1.msra.mxu0 0.0
        %660 = vmatprep.mubr.f32.mxu0 0.0
        %661 = vmatmul.mubr.f32.gmra.mrb[0].mxu0 %v573
        %v662 = vpop.f32.mrb[0].mxu0
        %v663 = vadd.f32 %v534, %v662
        %v664 = vpop.f32.mrb[0].mxu0
        %665 = vmatprep.mubr.f32.mxu0 0.0
        %666 = vmatmul.mubr.f32.gmra.mrb[0].mxu0 %v576
        %v667 = vpop.f32.mrb[0].mxu0
        %v668 = vadd.f32 %v539, %v667
        %v669 = vpop.f32.mrb[0].mxu0
        %670 = vmatprep.mubr.f32.mxu0 0.0
        %671 = vmatmul.mubr.f32.gmra.mrb[0].mxu0 %v579
        %v672 = vpop.f32.mrb[0].mxu0
        %v673 = vadd.f32 %v544, %v672
        %v674 = vpop.f32.mrb[0].mxu0
        %675 = vmatprep.mubr.f32.mxu0 0.0
        %676 = vmatmul.mubr.f32.gmra.mrb[0].mxu0 %v582
        %v677 = vpop.f32.mrb[0].mxu0
        %v678 = vadd.f32 %v549, %v677
        %v679 = vpop.f32.mrb[0].mxu0
        %680 = vmatprep.mubr.f32.mxu0 0.0
        %681 = vmatmul.mubr.f32.gmra.mrb[0].mxu0 %v585
        %v682 = vpop.f32.mrb[0].mxu0
        %v683 = vadd.f32 %v554, %v682
        %v684 = vpop.f32.mrb[0].mxu0
        %685 = vmatprep.mubr.f32.mxu0 0.0
        %686 = vmatmul.mubr.f32.gmra.mrb[0].mxu0 %v588
        %v687 = vpop.f32.mrb[0].mxu0
        %v688 = vadd.f32 %v559, %v687
        %v689 = vpop.f32.mrb[0].mxu0
        %690 = vmatprep.mubr.f32.mxu0 0.0
        %691 = vmatmul.mubr.f32.gmra.mrb[0].mxu0 %v591
        %v692 = vpop.f32.mrb[0].mxu0
        %v693 = vadd.f32 %v564, %v692
        %v694 = vpop.f32.mrb[0].mxu0
        %695 = vmatprep.mubr.f32.mxu0 0.0
        %696 = vmatmul.mubr.f32.gmra.mrb[0].mxu0 %v594
        %v697 = vpop.f32.mrb[0].mxu0
        %v698 = vadd.f32 %v569, %v697
        %v699 = vpop.f32.mrb[0].mxu0
        %700 = vdwg.mxu0
        %v701 = vmax.f32 %v663, 0.0
        %v702 = vmax.f32 %v668, 0.0
        %v703 = vmax.f32 %v673, 0.0
        %v704 = vmax.f32 %v678, 0.0
        %v705 = vmax.f32 %v683, 0.0
        %v706 = vmax.f32 %v688, 0.0
        %v707 = vmax.f32 %v693, 0.0
        %v708 = vmax.f32 %v698, 0.0
        %v709 = vmax.f32 %v701, %v705
        %v710 = vmax.f32 %v702, %v706
        %v711 = vmax.f32 %v703, %v707
        %v712 = vmax.f32 %v704, %v708
        %v713 = vpack.c.bf16 %v710, %v709
        %v714 = vpack.c.bf16 %v712, %v711
        %v717 = vunpack.c.l.b16 %v713
        %v718 = vunpack.c.h.b16 %v713
        %v719 = vunpack.c.l.b16 %v714
        %v720 = vunpack.c.h.b16 %v714
        %v721 = vpack.c.b16 %v717, %v717
        %v722 = vpack.c.b16 %v718, %v718
        %v723 = vpack.c.b16 %v719, %v719
        %v724 = vpack.c.b16 %v720, %v720
        %729 = vst [vmem:[%s236] sm:$0xf] %v721
        %730 = vst [vmem:[%s236 + $0x4] sm:$0xf] %v722
        %731 = vst [vmem:[%s236 + $0x8] sm:$0xf] %v723
        %732 = vst [vmem:[%s236 + $0xc] sm:$0xf] %v724
        %p733 = scmp.lt.s32.totalorder %s17, 1
        %s734 = scalar_select %p733, %s17, 1
        %s735 = smul.addr %s734, 4
        %s736 = smul.addr %s735, 4
        %s737 = scalar_lea.vmem %s5, %s736
        // Predicated region
        $region45: #{ecg_classifier_forward.2} parent=39 // pred_check
          %p738 = pneg %p145
        $region46: #{ecg_classifier_forward.2} parent=39 // pred_check_branch
          %740 = sbr.rel (%p738) target = $region48
        $region47: #{ecg_classifier_forward.2} parent=39 // pred_region
          _
        $region48: #{ecg_classifier_forward.2} parent=39 // pred_fallthru
          _
      $region40: #{ecg_classifier_forward.2} parent=5 // pred_fallthru
        _
      %p741 = scmp.le.s32.totalorder 2, %s12
      // Predicated region
      $region49: #{ecg_classifier_forward.2} parent=5 // pred_check
        %p742 = pneg %p741
      $region50: #{ecg_classifier_forward.2} parent=5 // pred_check_branch
        %744 = sbr.rel (%p742) target = $region52
      $region51: #{ecg_classifier_forward.2} parent=5 // pred_region
        %s745 = ssub.s32 %s12, 2
        // Predicated region
        $region53: #{ecg_classifier_forward.2} parent=51 // pred_check
          %p746 = pneg %p151
        $region54: #{ecg_classifier_forward.2} parent=51 // pred_check_branch
          %748 = sbr.rel (%p746) target = $region56
        $region55: #{ecg_classifier_forward.2} parent=51 // pred_region
          %p749 = scmp.lt.s32.totalorder %s18, 1
          %s750 = scalar_select %p749, %s18, 1
          %s751 = smul.addr %s750, 4
          %s752 = smul.addr %s751, 4
          %s753 = scalar_lea.vmem %s5, %s752
        $region56: #{ecg_classifier_forward.2} parent=51 // pred_fallthru
          _
      $region52: #{ecg_classifier_forward.2} parent=5 // pred_fallthru
        _
    $region6: #{ecg_classifier_forward.2} parent=1 // loop_footer
      %s16 = sadd.s32 1, %s12
    $region7: #{ecg_classifier_forward.2} parent=1 // loop_footer_branch
      %11 = sbr.rel target = $region3
    $region8: #{ecg_classifier_forward.2} parent=1 // loop_exit
      _
    %754 = vsyncpa [#allocation3], 1
    %s755 = scalar_lea.sflag [#allocation3], 1
    %756 = vsyncpa %s755, 1

// kernel: ecg_classifier_forward.3
$region0: #{ecg_classifier_forward.3}
  #allocation0 [shape = 'u32[]', space=smem, size = 0x4, offset = 0x4, fixed_abs, tag = 'smem constant byte address 0x4 - core index']
  #allocation1 [shape = 'u32[144,128]{1,0:T(1,128)}', space=vmem, size = 0x12000, scoped, tag = 'internal scratch']
  %s0 = inlined_call_operand.vmem [shape: bf16[2,4096], index: 0, kind: input, shape index: {}]
  %s1 = inlined_call_operand.vmem [shape: bf16[4096,64], index: 1, kind: input, shape index: {}]
  %s2 = inlined_call_operand.vmem [shape: f32[1,64], index: 2, kind: input, shape index: {}]
  %s3 = inlined_call_operand.vmem [shape: f32[64,128], index: 3, kind: input, shape index: {}]
  %s4 = inlined_call_operand.vmem [shape: f32[1,128], index: 4, kind: input, shape index: {}]
  %s5 = inlined_call_operand.hbm [shape: f32[2,128], index: 5, kind: output, shape index: {}]
  %s6 = sld [smem:[#allocation0]]
  $region30: #{ecg_classifier_forward.3} parent=0
    _
  %s8 = ssub.s32 1, %s6
  %s9 = scalar_select 0, %s8, %s6
  $region1: #{ecg_classifier_forward.3} parent=0
    #allocation2 [shape = 'u8[1024]{0}', space=vmem, size = 0x400, scoped, tag = 'output window, operand 0, single buffered']
    #allocation3 [shape = 's32[1]{0}', space=sflag, size = 0x4, scoped, tag = 'scoped memory for ecg_classifier_forward.3']
    %10 = vsyncpa [#allocation3], 0
    // Predicated region
    $region2: #{ecg_classifier_forward.3} parent=1 // pred_check
      _
    $region3: #{ecg_classifier_forward.3} parent=1 // pred_check_branch
      %12 = sbr.rel (0) target = $region5
    $region4: #{ecg_classifier_forward.3} parent=1 // pred_region
      _
    $region5: #{ecg_classifier_forward.3} parent=1 // pred_fallthru
      _
    // Predicated region
    $region6: #{ecg_classifier_forward.3} parent=1 // pred_check
      _
    $region7: #{ecg_classifier_forward.3} parent=1 // pred_check_branch
      %14 = sbr.rel (0) target = $region9
    $region8: #{ecg_classifier_forward.3} parent=1 // pred_region
      _
    $region9: #{ecg_classifier_forward.3} parent=1 // pred_fallthru
      _
    // Predicated region
    $region10: #{ecg_classifier_forward.3} parent=1 // pred_check
      _
    $region11: #{ecg_classifier_forward.3} parent=1 // pred_check_branch
      %16 = sbr.rel (0) target = $region13
    $region12: #{ecg_classifier_forward.3} parent=1 // pred_region
      _
    $region13: #{ecg_classifier_forward.3} parent=1 // pred_fallthru
      _
    // Predicated region
    $region14: #{ecg_classifier_forward.3} parent=1 // pred_check
      _
    $region15: #{ecg_classifier_forward.3} parent=1 // pred_check_branch
      %18 = sbr.rel (0) target = $region17
    $region16: #{ecg_classifier_forward.3} parent=1 // pred_region
      _
    $region17: #{ecg_classifier_forward.3} parent=1 // pred_fallthru
      _
    // Predicated region
    $region18: #{ecg_classifier_forward.3} parent=1 // pred_check
      _
    $region19: #{ecg_classifier_forward.3} parent=1 // pred_check_branch
      %20 = sbr.rel (0) target = $region21
    $region20: #{ecg_classifier_forward.3} parent=1 // pred_region
      _
    $region21: #{ecg_classifier_forward.3} parent=1 // pred_fallthru
      _
    %v22 = vld [vmem:[%s0] sm:$0xff]
    %v23 = vld [vmem:[%s0 + $0x8] sm:$0xff]
    %v24 = vld [vmem:[%s0 + $0x10] sm:$0xff]
    %v25 = vld [vmem:[%s0 + $0x18] sm:$0xff]
    %v26 = vld [vmem:[%s1] sm:$0xf]
    %v27 = vld [vmem:[%s1 + $0x4] sm:$0xf]
    %v28 = vld [vmem:[%s1 + $0x8] sm:$0xf]
    %v29 = vld [vmem:[%s1 + $0xc] sm:$0xf]
    %v30 = vld [vmem:[%s1 + $0x10] sm:$0xf]
    %v31 = vld [vmem:[%s1 + $0x14] sm:$0xf]
    %v32 = vld [vmem:[%s1 + $0x18] sm:$0xf]
    %v33 = vld [vmem:[%s1 + $0x1c] sm:$0xf]
    %v34 = vld [vmem:[%s1 + $0x20] sm:$0xf]
    %v35 = vld [vmem:[%s1 + $0x24] sm:$0xf]
    %v36 = vld [vmem:[%s1 + $0x28] sm:$0xf]
    %v37 = vld [vmem:[%s1 + $0x2c] sm:$0xf]
    %v38 = vld [vmem:[%s1 + $0x30] sm:$0xf]
    %v39 = vld [vmem:[%s1 + $0x34] sm:$0xf]
    %v40 = vld [vmem:[%s1 + $0x38] sm:$0xf]
    %v41 = vld [vmem:[%s1 + $0x3c] sm:$0xf]
    %v42 = vld [vmem:[%s1 + $0x40] sm:$0xf]
    %v43 = vld [vmem:[%s1 + $0x44] sm:$0xf]
    %v44 = vld [vmem:[%s1 + $0x48] sm:$0xf]
    %v45 = vld [vmem:[%s1 + $0x4c] sm:$0xf]
    %v46 = vld [vmem:[%s1 + $0x50] sm:$0xf]
    %v47 = vld [vmem:[%s1 + $0x54] sm:$0xf]
    %v48 = vld [vmem:[%s1 + $0x58] sm:$0xf]
    %v49 = vld [vmem:[%s1 + $0x5c] sm:$0xf]
    %v50 = vld [vmem:[%s1 + $0x60] sm:$0xf]
    %v51 = vld [vmem:[%s1 + $0x64] sm:$0xf]
    %v52 = vld [vmem:[%s1 + $0x68] sm:$0xf]
    %v53 = vld [vmem:[%s1 + $0x6c] sm:$0xf]
    %v54 = vld [vmem:[%s1 + $0x70] sm:$0xf]
    %v55 = vld [vmem:[%s1 + $0x74] sm:$0xf]
    %v56 = vld [vmem:[%s1 + $0x78] sm:$0xf]
    %v57 = vld [vmem:[%s1 + $0x7c] sm:$0xf]
    %v58 = vld [vmem:[%s1 + $0x80] sm:$0xf]
    %v59 = vld [vmem:[%s1 + $0x84] sm:$0xf]
    %v60 = vld [vmem:[%s1 + $0x88] sm:$0xf]
    %v61 = vld [vmem:[%s1 + $0x8c] sm:$0xf]
    %v62 = vld [vmem:[%s1 + $0x90] sm:$0xf]
    %v63 = vld [vmem:[%s1 + $0x94] sm:$0xf]
    %v64 = vld [vmem:[%s1 + $0x98] sm:$0xf]
    %v65 = vld [vmem:[%s1 + $0x9c] sm:$0xf]
    %v66 = vld [vmem:[%s1 + $0xa0] sm:$0xf]
    %v67 = vld [vmem:[%s1 + $0xa4] sm:$0xf]
    %v68 = vld [vmem:[%s1 + $0xa8] sm:$0xf]
    %v69 = vld [vmem:[%s1 + $0xac] sm:$0xf]
    %v70 = vld [vmem:[%s1 + $0xb0] sm:$0xf]
    %v71 = vld [vmem:[%s1 + $0xb4] sm:$0xf]
    %v72 = vld [vmem:[%s1 + $0xb8] sm:$0xf]
    %v73 = vld [vmem:[%s1 + $0xbc] sm:$0xf]
    %v74 = vld [vmem:[%s1 + $0xc0] sm:$0xf]
    %v75 = vld [vmem:[%s1 + $0xc4] sm:$0xf]
    %v76 = vld [vmem:[%s1 + $0xc8] sm:$0xf]
    %v77 = vld [vmem:[%s1 + $0xcc] sm:$0xf]
    %v78 = vld [vmem:[%s1 + $0xd0] sm:$0xf]
    %v79 = vld [vmem:[%s1 + $0xd4] sm:$0xf]
    %v80 = vld [vmem:[%s1 + $0xd8] sm:$0xf]
    %v81 = vld [vmem:[%s1 + $0xdc] sm:$0xf]
    %v82 = vld [vmem:[%s1 + $0xe0] sm:$0xf]
    %v83 = vld [vmem:[%s1 + $0xe4] sm:$0xf]
    %v84 = vld [vmem:[%s1 + $0xe8] sm:$0xf]
    %v85 = vld [vmem:[%s1 + $0xec] sm:$0xf]
    %v86 = vld [vmem:[%s1 + $0xf0] sm:$0xf]
    %v87 = vld [vmem:[%s1 + $0xf4] sm:$0xf]
    %v88 = vld [vmem:[%s1 + $0xf8] sm:$0xf]
    %v89 = vld [vmem:[%s1 + $0xfc] sm:$0xf]
    %v90 = vld [vmem:[%s1 + $0x100] sm:$0xf]
    %v91 = vld [vmem:[%s1 + $0x104] sm:$0xf]
    %v92 = vld [vmem:[%s1 + $0x108] sm:$0xf]
    %v93 = vld [vmem:[%s1 + $0x10c] sm:$0xf]
    %v94 = vld [vmem:[%s1 + $0x110] sm:$0xf]
    %v95 = vld [vmem:[%s1 + $0x114] sm:$0xf]
    %v96 = vld [vmem:[%s1 + $0x118] sm:$0xf]
    %v97 = vld [vmem:[%s1 + $0x11c] sm:$0xf]
    %v98 = vld [vmem:[%s1 + $0x120] sm:$0xf]
    %v99 = vld [vmem:[%s1 + $0x124] sm:$0xf]
    %v100 = vld [vmem:[%s1 + $0x128] sm:$0xf]
    %v101 = vld [vmem:[%s1 + $0x12c] sm:$0xf]
    %v102 = vld [vmem:[%s1 + $0x130] sm:$0xf]
    %v103 = vld [vmem:[%s1 + $0x134] sm:$0xf]
    %v104 = vld [vmem:[%s1 + $0x138] sm:$0xf]
    %v105 = vld [vmem:[%s1 + $0x13c] sm:$0xf]
    %v106 = vld [vmem:[%s1 + $0x140] sm:$0xf]
    %v107 = vld [vmem:[%s1 + $0x144] sm:$0xf]
    %v108 = vld [vmem:[%s1 + $0x148] sm:$0xf]
    %v109 = vld [vmem:[%s1 + $0x14c] sm:$0xf]
    %v110 = vld [vmem:[%s1 + $0x150] sm:$0xf]
    %v111 = vld [vmem:[%s1 + $0x154] sm:$0xf]
    %v112 = vld [vmem:[%s1 + $0x158] sm:$0xf]
    %v113 = vld [vmem:[%s1 + $0x15c] sm:$0xf]
    %v114 = vld [vmem:[%s1 + $0x160] sm:$0xf]
    %v115 = vld [vmem:[%s1 + $0x164] sm:$0xf]
    %v116 = vld [vmem:[%s1 + $0x168] sm:$0xf]
    %v117 = vld [vmem:[%s1 + $0x16c] sm:$0xf]
    %v118 = vld [vmem:[%s1 + $0x170] sm:$0xf]
    %v119 = vld [vmem:[%s1 + $0x174] sm:$0xf]
    %v120 = vld [vmem:[%s1 + $0x178] sm:$0xf]
    %v121 = vld [vmem:[%s1 + $0x17c] sm:$0xf]
    %v122 = vld [vmem:[%s1 + $0x180] sm:$0xf]
    %v123 = vld [vmem:[%s1 + $0x184] sm:$0xf]
    %v124 = vld [vmem:[%s1 + $0x188] sm:$0xf]
    %v125 = vld [vmem:[%s1 + $0x18c] sm:$0xf]
    %v126 = vld [vmem:[%s1 + $0x190] sm:$0xf]
    %v127 = vld [vmem:[%s1 + $0x194] sm:$0xf]
    %v128 = vld [vmem:[%s1 + $0x198] sm:$0xf]
    %v129 = vld [vmem:[%s1 + $0x19c] sm:$0xf]
    %v130 = vld [vmem:[%s1 + $0x1a0] sm:$0xf]
    %v131 = vld [vmem:[%s1 + $0x1a4] sm:$0xf]
    %v132 = vld [vmem:[%s1 + $0x1a8] sm:$0xf]
    %v133 = vld [vmem:[%s1 + $0x1ac] sm:$0xf]
    %v134 = vld [vmem:[%s1 + $0x1b0] sm:$0xf]
    %v135 = vld [vmem:[%s1 + $0x1b4] sm:$0xf]
    %v136 = vld [vmem:[%s1 + $0x1b8] sm:$0xf]
    %v137 = vld [vmem:[%s1 + $0x1bc] sm:$0xf]
    %v138 = vld [vmem:[%s1 + $0x1c0] sm:$0xf]
    %v139 = vld [vmem:[%s1 + $0x1c4] sm:$0xf]
    %v140 = vld [vmem:[%s1 + $0x1c8] sm:$0xf]
    %v141 = vld [vmem:[%s1 + $0x1cc] sm:$0xf]
    %v142 = vld [vmem:[%s1 + $0x1d0] sm:$0xf]
    %v143 = vld [vmem:[%s1 + $0x1d4] sm:$0xf]
    %v144 = vld [vmem:[%s1 + $0x1d8] sm:$0xf]
    %v145 = vld [vmem:[%s1 + $0x1dc] sm:$0xf]
    %v146 = vld [vmem:[%s1 + $0x1e0] sm:$0xf]
    %v147 = vld [vmem:[%s1 + $0x1e4] sm:$0xf]
    %v148 = vld [vmem:[%s1 + $0x1e8] sm:$0xf]
    %v149 = vld [vmem:[%s1 + $0x1ec] sm:$0xf]
    %v150 = vld [vmem:[%s1 + $0x1f0] sm:$0xf]
    %v151 = vld [vmem:[%s1 + $0x1f4] sm:$0xf]
    %v152 = vld [vmem:[%s1 + $0x1f8] sm:$0xf]
    %v153 = vld [vmem:[%s1 + $0x1fc] sm:$0xf]
    %v154 = vld [vmem:[%s1 + $0x200] sm:$0xf]
    %v155 = vld [vmem:[%s1 + $0x204] sm:$0xf]
    %v156 = vld [vmem:[%s1 + $0x208] sm:$0xf]
    %v157 = vld [vmem:[%s1 + $0x20c] sm:$0xf]
    %v158 = vld [vmem:[%s1 + $0x210] sm:$0xf]
    %v159 = vld [vmem:[%s1 + $0x214] sm:$0xf]
    %v160 = vld [vmem:[%s1 + $0x218] sm:$0xf]
    %v161 = vld [vmem:[%s1 + $0x21c] sm:$0xf]
    %v162 = vld [vmem:[%s1 + $0x220] sm:$0xf]
    %v163 = vld [vmem:[%s1 + $0x224] sm:$0xf]
    %v164 = vld [vmem:[%s1 + $0x228] sm:$0xf]
    %v165 = vld [vmem:[%s1 + $0x22c] sm:$0xf]
    %v166 = vld [vmem:[%s1 + $0x230] sm:$0xf]
    %v167 = vld [vmem:[%s1 + $0x234] sm:$0xf]
    %v168 = vld [vmem:[%s1 + $0x238] sm:$0xf]
    %v169 = vld [vmem:[%s1 + $0x23c] sm:$0xf]
    %v170 = vld [vmem:[%s1 + $0x240] sm:$0xf]
    %v171 = vld [vmem:[%s1 + $0x244] sm:$0xf]
    %v172 = vld [vmem:[%s1 + $0x248] sm:$0xf]
    %v173 = vld [vmem:[%s1 + $0x24c] sm:$0xf]
    %v174 = vld [vmem:[%s1 + $0x250] sm:$0xf]
    %v175 = vld [vmem:[%s1 + $0x254] sm:$0xf]
    %v176 = vld [vmem:[%s1 + $0x258] sm:$0xf]
    %v177 = vld [vmem:[%s1 + $0x25c] sm:$0xf]
    %v178 = vld [vmem:[%s1 + $0x260] sm:$0xf]
    %v179 = vld [vmem:[%s1 + $0x264] sm:$0xf]
    %v180 = vld [vmem:[%s1 + $0x268] sm:$0xf]
    %v181 = vld [vmem:[%s1 + $0x26c] sm:$0xf]
    %v182 = vld [vmem:[%s1 + $0x270] sm:$0xf]
    %v183 = vld [vmem:[%s1 + $0x274] sm:$0xf]
    %v184 = vld [vmem:[%s1 + $0x278] sm:$0xf]
    %v185 = vld [vmem:[%s1 + $0x27c] sm:$0xf]
    %v186 = vld [vmem:[%s1 + $0x280] sm:$0xf]
    %v187 = vld [vmem:[%s1 + $0x284] sm:$0xf]
    %v188 = vld [vmem:[%s1 + $0x288] sm:$0xf]
    %v189 = vld [vmem:[%s1 + $0x28c] sm:$0xf]
    %v190 = vld [vmem:[%s1 + $0x290] sm:$0xf]
    %v191 = vld [vmem:[%s1 + $0x294] sm:$0xf]
    %v192 = vld [vmem:[%s1 + $0x298] sm:$0xf]
    %v193 = vld [vmem:[%s1 + $0x29c] sm:$0xf]
    %v194 = vld [vmem:[%s1 + $0x2a0] sm:$0xf]
    %v195 = vld [vmem:[%s1 + $0x2a4] sm:$0xf]
    %v196 = vld [vmem:[%s1 + $0x2a8] sm:$0xf]
    %v197 = vld [vmem:[%s1 + $0x2ac] sm:$0xf]
    %v198 = vld [vmem:[%s1 + $0x2b0] sm:$0xf]
    %v199 = vld [vmem:[%s1 + $0x2b4] sm:$0xf]
    %v200 = vld [vmem:[%s1 + $0x2b8] sm:$0xf]
    %v201 = vld [vmem:[%s1 + $0x2bc] sm:$0xf]
    %v202 = vld [vmem:[%s1 + $0x2c0] sm:$0xf]
    %v203 = vld [vmem:[%s1 + $0x2c4] sm:$0xf]
    %v204 = vld [vmem:[%s1 + $0x2c8] sm:$0xf]
    %v205 = vld [vmem:[%s1 + $0x2cc] sm:$0xf]
    %v206 = vld [vmem:[%s1 + $0x2d0] sm:$0xf]
    %v207 = vld [vmem:[%s1 + $0x2d4] sm:$0xf]
    %v208 = vld [vmem:[%s1 + $0x2d8] sm:$0xf]
    %v209 = vld [vmem:[%s1 + $0x2dc] sm:$0xf]
    %v210 = vld [vmem:[%s1 + $0x2e0] sm:$0xf]
    %v211 = vld [vmem:[%s1 + $0x2e4] sm:$0xf]
    %v212 = vld [vmem:[%s1 + $0x2e8] sm:$0xf]
    %v213 = vld [vmem:[%s1 + $0x2ec] sm:$0xf]
    %v214 = vld [vmem:[%s1 + $0x2f0] sm:$0xf]
    %v215 = vld [vmem:[%s1 + $0x2f4] sm:$0xf]
    %v216 = vld [vmem:[%s1 + $0x2f8] sm:$0xf]
    %v217 = vld [vmem:[%s1 + $0x2fc] sm:$0xf]
    %v218 = vld [vmem:[%s1 + $0x300] sm:$0xf]
    %v219 = vld [vmem:[%s1 + $0x304] sm:$0xf]
    %v220 = vld [vmem:[%s1 + $0x308] sm:$0xf]
    %v221 = vld [vmem:[%s1 + $0x30c] sm:$0xf]
    %v222 = vld [vmem:[%s1 + $0x310] sm:$0xf]
    %v223 = vld [vmem:[%s1 + $0x314] sm:$0xf]
    %v224 = vld [vmem:[%s1 + $0x318] sm:$0xf]
    %v225 = vld [vmem:[%s1 + $0x31c] sm:$0xf]
    %v226 = vld [vmem:[%s1 + $0x320] sm:$0xf]
    %v227 = vld [vmem:[%s1 + $0x324] sm:$0xf]
    %v228 = vld [vmem:[%s1 + $0x328] sm:$0xf]
    %v229 = vld [vmem:[%s1 + $0x32c] sm:$0xf]
    %v230 = vld [vmem:[%s1 + $0x330] sm:$0xf]
    %v231 = vld [vmem:[%s1 + $0x334] sm:$0xf]
    %v232 = vld [vmem:[%s1 + $0x338] sm:$0xf]
    %v233 = vld [vmem:[%s1 + $0x33c] sm:$0xf]
    %v234 = vld [vmem:[%s1 + $0x340] sm:$0xf]
    %v235 = vld [vmem:[%s1 + $0x344] sm:$0xf]
    %v236 = vld [vmem:[%s1 + $0x348] sm:$0xf]
    %v237 = vld [vmem:[%s1 + $0x34c] sm:$0xf]
    %v238 = vld [vmem:[%s1 + $0x350] sm:$0xf]
    %v239 = vld [vmem:[%s1 + $0x354] sm:$0xf]
    %v240 = vld [vmem:[%s1 + $0x358] sm:$0xf]
    %v241 = vld [vmem:[%s1 + $0x35c] sm:$0xf]
    %v242 = vld [vmem:[%s1 + $0x360] sm:$0xf]
    %v243 = vld [vmem:[%s1 + $0x364] sm:$0xf]
    %v244 = vld [vmem:[%s1 + $0x368] sm:$0xf]
    %v245 = vld [vmem:[%s1 + $0x36c] sm:$0xf]
    %v246 = vld [vmem:[%s1 + $0x370] sm:$0xf]
    %v247 = vld [vmem:[%s1 + $0x374] sm:$0xf]
    %v248 = vld [vmem:[%s1 + $0x378] sm:$0xf]
    %v249 = vld [vmem:[%s1 + $0x37c] sm:$0xf]
    %v250 = vld [vmem:[%s1 + $0x380] sm:$0xf]
    %v251 = vld [vmem:[%s1 + $0x384] sm:$0xf]
    %v252 = vld [vmem:[%s1 + $0x388] sm:$0xf]
    %v253 = vld [vmem:[%s1 + $0x38c] sm:$0xf]
    %v254 = vld [vmem:[%s1 + $0x390] sm:$0xf]
    %v255 = vld [vmem:[%s1 + $0x394] sm:$0xf]
    %v256 = vld [vmem:[%s1 + $0x398] sm:$0xf]
    %v257 = vld [vmem:[%s1 + $0x39c] sm:$0xf]
    %v258 = vld [vmem:[%s1 + $0x3a0] sm:$0xf]
    %v259 = vld [vmem:[%s1 + $0x3a4] sm:$0xf]
    %v260 = vld [vmem:[%s1 + $0x3a8] sm:$0xf]
    %v261 = vld [vmem:[%s1 + $0x3ac] sm:$0xf]
    %v262 = vld [vmem:[%s1 + $0x3b0] sm:$0xf]
    %v263 = vld [vmem:[%s1 + $0x3b4] sm:$0xf]
    %v264 = vld [vmem:[%s1 + $0x3b8] sm:$0xf]
    %v265 = vld [vmem:[%s1 + $0x3bc] sm:$0xf]
    %v266 = vld [vmem:[%s1 + $0x3c0] sm:$0xf]
    %v267 = vld [vmem:[%s1 + $0x3c4] sm:$0xf]
    %v268 = vld [vmem:[%s1 + $0x3c8] sm:$0xf]
    %v269 = vld [vmem:[%s1 + $0x3cc] sm:$0xf]
    %v270 = vld [vmem:[%s1 + $0x3d0] sm:$0xf]
    %v271 = vld [vmem:[%s1 + $0x3d4] sm:$0xf]
    %v272 = vld [vmem:[%s1 + $0x3d8] sm:$0xf]
    %v273 = vld [vmem:[%s1 + $0x3dc] sm:$0xf]
    %v274 = vld [vmem:[%s1 + $0x3e0] sm:$0xf]
    %v275 = vld [vmem:[%s1 + $0x3e4] sm:$0xf]
    %v276 = vld [vmem:[%s1 + $0x3e8] sm:$0xf]
    %v277 = vld [vmem:[%s1 + $0x3ec] sm:$0xf]
    %v278 = vld [vmem:[%s1 + $0x3f0] sm:$0xf]
    %v279 = vld [vmem:[%s1 + $0x3f4] sm:$0xf]
    %v280 = vld [vmem:[%s1 + $0x3f8] sm:$0xf]
    %v281 = vld [vmem:[%s1 + $0x3fc] sm:$0xf]
    %v282 = vld [vmem:[%s1 + $0x400] sm:$0xf]
    %v283 = vld [vmem:[%s1 + $0x404] sm:$0xf]
    %v284 = vld [vmem:[%s1 + $0x408] sm:$0xf]
    %v285 = vld [vmem:[%s1 + $0x40c] sm:$0xf]
    %v286 = vld [vmem:[%s1 + $0x410] sm:$0xf]
    %v287 = vld [vmem:[%s1 + $0x414] sm:$0xf]
    %v288 = vld [vmem:[%s1 + $0x418] sm:$0xf]
    %v289 = vld [vmem:[%s1 + $0x41c] sm:$0xf]
    %v290 = vld [vmem:[%s1 + $0x420] sm:$0xf]
    %v291 = vld [vmem:[%s1 + $0x424] sm:$0xf]
    %v292 = vld [vmem:[%s1 + $0x428] sm:$0xf]
    %v293 = vld [vmem:[%s1 + $0x42c] sm:$0xf]
    %v294 = vld [vmem:[%s1 + $0x430] sm:$0xf]
    %v295 = vld [vmem:[%s1 + $0x434] sm:$0xf]
    %v296 = vld [vmem:[%s1 + $0x438] sm:$0xf]
    %v297 = vld [vmem:[%s1 + $0x43c] sm:$0xf]
    %v298 = vld [vmem:[%s1 + $0x440] sm:$0xf]
    %v299 = vld [vmem:[%s1 + $0x444] sm:$0xf]
    %v300 = vld [vmem:[%s1 + $0x448] sm:$0xf]
    %v301 = vld [vmem:[%s1 + $0x44c] sm:$0xf]
    %v302 = vld [vmem:[%s1 + $0x450] sm:$0xf]
    %v303 = vld [vmem:[%s1 + $0x454] sm:$0xf]
    %v304 = vld [vmem:[%s1 + $0x458] sm:$0xf]
    %v305 = vld [vmem:[%s1 + $0x45c] sm:$0xf]
    %v306 = vld [vmem:[%s1 + $0x460] sm:$0xf]
    %v307 = vld [vmem:[%s1 + $0x464] sm:$0xf]
    %v308 = vld [vmem:[%s1 + $0x468] sm:$0xf]
    %v309 = vld [vmem:[%s1 + $0x46c] sm:$0xf]
    %v310 = vld [vmem:[%s1 + $0x470] sm:$0xf]
    %v311 = vld [vmem:[%s1 + $0x474] sm:$0xf]
    %v312 = vld [vmem:[%s1 + $0x478] sm:$0xf]
    %v313 = vld [vmem:[%s1 + $0x47c] sm:$0xf]
    %v314 = vld [vmem:[%s1 + $0x480] sm:$0xf]
    %v315 = vld [vmem:[%s1 + $0x484] sm:$0xf]
    %v316 = vld [vmem:[%s1 + $0x488] sm:$0xf]
    %v317 = vld [vmem:[%s1 + $0x48c] sm:$0xf]
    %v318 = vld [vmem:[%s1 + $0x490] sm:$0xf]
    %v319 = vld [vmem:[%s1 + $0x494] sm:$0xf]
    %v320 = vld [vmem:[%s1 + $0x498] sm:$0xf]
    %v321 = vld [vmem:[%s1 + $0x49c] sm:$0xf]
    %v322 = vld [vmem:[%s1 + $0x4a0] sm:$0xf]
    %v323 = vld [vmem:[%s1 + $0x4a4] sm:$0xf]
    %v324 = vld [vmem:[%s1 + $0x4a8] sm:$0xf]
    %v325 = vld [vmem:[%s1 + $0x4ac] sm:$0xf]
    %v326 = vld [vmem:[%s1 + $0x4b0] sm:$0xf]
    %v327 = vld [vmem:[%s1 + $0x4b4] sm:$0xf]
    %v328 = vld [vmem:[%s1 + $0x4b8] sm:$0xf]
    %v329 = vld [vmem:[%s1 + $0x4bc] sm:$0xf]
    %v330 = vld [vmem:[%s1 + $0x4c0] sm:$0xf]
    %v331 = vld [vmem:[%s1 + $0x4c4] sm:$0xf]
    %v332 = vld [vmem:[%s1 + $0x4c8] sm:$0xf]
    %v333 = vld [vmem:[%s1 + $0x4cc] sm:$0xf]
    %v334 = vld [vmem:[%s1 + $0x4d0] sm:$0xf]
    %v335 = vld [vmem:[%s1 + $0x4d4] sm:$0xf]
    %v336 = vld [vmem:[%s1 + $0x4d8] sm:$0xf]
    %v337 = vld [vmem:[%s1 + $0x4dc] sm:$0xf]
    %v338 = vld [vmem:[%s1 + $0x4e0] sm:$0xf]
    %v339 = vld [vmem:[%s1 + $0x4e4] sm:$0xf]
    %v340 = vld [vmem:[%s1 + $0x4e8] sm:$0xf]
    %v341 = vld [vmem:[%s1 + $0x4ec] sm:$0xf]
    %v342 = vld [vmem:[%s1 + $0x4f0] sm:$0xf]
    %v343 = vld [vmem:[%s1 + $0x4f4] sm:$0xf]
    %v344 = vld [vmem:[%s1 + $0x4f8] sm:$0xf]
    %v345 = vld [vmem:[%s1 + $0x4fc] sm:$0xf]
    %v346 = vld [vmem:[%s1 + $0x500] sm:$0xf]
    %v347 = vld [vmem:[%s1 + $0x504] sm:$0xf]
    %v348 = vld [vmem:[%s1 + $0x508] sm:$0xf]
    %v349 = vld [vmem:[%s1 + $0x50c] sm:$0xf]
    %v350 = vld [vmem:[%s1 + $0x510] sm:$0xf]
    %v351 = vld [vmem:[%s1 + $0x514] sm:$0xf]
    %v352 = vld [vmem:[%s1 + $0x518] sm:$0xf]
    %v353 = vld [vmem:[%s1 + $0x51c] sm:$0xf]
    %v354 = vld [vmem:[%s1 + $0x520] sm:$0xf]
    %v355 = vld [vmem:[%s1 + $0x524] sm:$0xf]
    %v356 = vld [vmem:[%s1 + $0x528] sm:$0xf]
    %v357 = vld [vmem:[%s1 + $0x52c] sm:$0xf]
    %v358 = vld [vmem:[%s1 + $0x530] sm:$0xf]
    %v359 = vld [vmem:[%s1 + $0x534] sm:$0xf]
    %v360 = vld [vmem:[%s1 + $0x538] sm:$0xf]
    %v361 = vld [vmem:[%s1 + $0x53c] sm:$0xf]
    %v362 = vld [vmem:[%s1 + $0x540] sm:$0xf]
    %v363 = vld [vmem:[%s1 + $0x544] sm:$0xf]
    %v364 = vld [vmem:[%s1 + $0x548] sm:$0xf]
    %v365 = vld [vmem:[%s1 + $0x54c] sm:$0xf]
    %v366 = vld [vmem:[%s1 + $0x550] sm:$0xf]
    %v367 = vld [vmem:[%s1 + $0x554] sm:$0xf]
    %v368 = vld [vmem:[%s1 + $0x558] sm:$0xf]
    %v369 = vld [vmem:[%s1 + $0x55c] sm:$0xf]
    %v370 = vld [vmem:[%s1 + $0x560] sm:$0xf]
    %v371 = vld [vmem:[%s1 + $0x564] sm:$0xf]
    %v372 = vld [vmem:[%s1 + $0x568] sm:$0xf]
    %v373 = vld [vmem:[%s1 + $0x56c] sm:$0xf]
    %v374 = vld [vmem:[%s1 + $0x570] sm:$0xf]
    %v375 = vld [vmem:[%s1 + $0x574] sm:$0xf]
    %v376 = vld [vmem:[%s1 + $0x578] sm:$0xf]
    %v377 = vld [vmem:[%s1 + $0x57c] sm:$0xf]
    %v378 = vld [vmem:[%s1 + $0x580] sm:$0xf]
    %v379 = vld [vmem:[%s1 + $0x584] sm:$0xf]
    %v380 = vld [vmem:[%s1 + $0x588] sm:$0xf]
    %v381 = vld [vmem:[%s1 + $0x58c] sm:$0xf]
    %v382 = vld [vmem:[%s1 + $0x590] sm:$0xf]
    %v383 = vld [vmem:[%s1 + $0x594] sm:$0xf]
    %v384 = vld [vmem:[%s1 + $0x598] sm:$0xf]
    %v385 = vld [vmem:[%s1 + $0x59c] sm:$0xf]
    %v386 = vld [vmem:[%s1 + $0x5a0] sm:$0xf]
    %v387 = vld [vmem:[%s1 + $0x5a4] sm:$0xf]
    %v388 = vld [vmem:[%s1 + $0x5a8] sm:$0xf]
    %v389 = vld [vmem:[%s1 + $0x5ac] sm:$0xf]
    %v390 = vld [vmem:[%s1 + $0x5b0] sm:$0xf]
    %v391 = vld [vmem:[%s1 + $0x5b4] sm:$0xf]
    %v392 = vld [vmem:[%s1 + $0x5b8] sm:$0xf]
    %v393 = vld [vmem:[%s1 + $0x5bc] sm:$0xf]
    %v394 = vld [vmem:[%s1 + $0x5c0] sm:$0xf]
    %v395 = vld [vmem:[%s1 + $0x5c4] sm:$0xf]
    %v396 = vld [vmem:[%s1 + $0x5c8] sm:$0xf]
    %v397 = vld [vmem:[%s1 + $0x5cc] sm:$0xf]
    %v398 = vld [vmem:[%s1 + $0x5d0] sm:$0xf]
    %v399 = vld [vmem:[%s1 + $0x5d4] sm:$0xf]
    %v400 = vld [vmem:[%s1 + $0x5d8] sm:$0xf]
    %v401 = vld [vmem:[%s1 + $0x5dc] sm:$0xf]
    %v402 = vld [vmem:[%s1 + $0x5e0] sm:$0xf]
    %v403 = vld [vmem:[%s1 + $0x5e4] sm:$0xf]
    %v404 = vld [vmem:[%s1 + $0x5e8] sm:$0xf]
    %v405 = vld [vmem:[%s1 + $0x5ec] sm:$0xf]
    %v406 = vld [vmem:[%s1 + $0x5f0] sm:$0xf]
    %v407 = vld [vmem:[%s1 + $0x5f4] sm:$0xf]
    %v408 = vld [vmem:[%s1 + $0x5f8] sm:$0xf]
    %v409 = vld [vmem:[%s1 + $0x5fc] sm:$0xf]
    %v410 = vld [vmem:[%s1 + $0x600] sm:$0xf]
    %v411 = vld [vmem:[%s1 + $0x604] sm:$0xf]
    %v412 = vld [vmem:[%s1 + $0x608] sm:$0xf]
    %v413 = vld [vmem:[%s1 + $0x60c] sm:$0xf]
    %v414 = vld [vmem:[%s1 + $0x610] sm:$0xf]
    %v415 = vld [vmem:[%s1 + $0x614] sm:$0xf]
    %v416 = vld [vmem:[%s1 + $0x618] sm:$0xf]
    %v417 = vld [vmem:[%s1 + $0x61c] sm:$0xf]
    %v418 = vld [vmem:[%s1 + $0x620] sm:$0xf]
    %v419 = vld [vmem:[%s1 + $0x624] sm:$0xf]
    %v420 = vld [vmem:[%s1 + $0x628] sm:$0xf]
    %v421 = vld [vmem:[%s1 + $0x62c] sm:$0xf]
    %v422 = vld [vmem:[%s1 + $0x630] sm:$0xf]
    %v423 = vld [vmem:[%s1 + $0x634] sm:$0xf]
    %v424 = vld [vmem:[%s1 + $0x638] sm:$0xf]
    %v425 = vld [vmem:[%s1 + $0x63c] sm:$0xf]
    %v426 = vld [vmem:[%s1 + $0x640] sm:$0xf]
    %v427 = vld [vmem:[%s1 + $0x644] sm:$0xf]
    %v428 = vld [vmem:[%s1 + $0x648] sm:$0xf]
    %v429 = vld [vmem:[%s1 + $0x64c] sm:$0xf]
    %v430 = vld [vmem:[%s1 + $0x650] sm:$0xf]
    %v431 = vld [vmem:[%s1 + $0x654] sm:$0xf]
    %v432 = vld [vmem:[%s1 + $0x658] sm:$0xf]
    %v433 = vld [vmem:[%s1 + $0x65c] sm:$0xf]
    %v434 = vld [vmem:[%s1 + $0x660] sm:$0xf]
    %v435 = vld [vmem:[%s1 + $0x664] sm:$0xf]
    %v436 = vld [vmem:[%s1 + $0x668] sm:$0xf]
    %v437 = vld [vmem:[%s1 + $0x66c] sm:$0xf]
    %v438 = vld [vmem:[%s1 + $0x670] sm:$0xf]
    %v439 = vld [vmem:[%s1 + $0x674] sm:$0xf]
    %v440 = vld [vmem:[%s1 + $0x678] sm:$0xf]
    %v441 = vld [vmem:[%s1 + $0x67c] sm:$0xf]
    %v442 = vld [vmem:[%s1 + $0x680] sm:$0xf]
    %v443 = vld [vmem:[%s1 + $0x684] sm:$0xf]
    %v444 = vld [vmem:[%s1 + $0x688] sm:$0xf]
    %v445 = vld [vmem:[%s1 + $0x68c] sm:$0xf]
    %v446 = vld [vmem:[%s1 + $0x690] sm:$0xf]
    %v447 = vld [vmem:[%s1 + $0x694] sm:$0xf]
    %v448 = vld [vmem:[%s1 + $0x698] sm:$0xf]
    %v449 = vld [vmem:[%s1 + $0x69c] sm:$0xf]
    %v450 = vld [vmem:[%s1 + $0x6a0] sm:$0xf]
    %v451 = vld [vmem:[%s1 + $0x6a4] sm:$0xf]
    %v452 = vld [vmem:[%s1 + $0x6a8] sm:$0xf]
    %v453 = vld [vmem:[%s1 + $0x6ac] sm:$0xf]
    %v454 = vld [vmem:[%s1 + $0x6b0] sm:$0xf]
    %v455 = vld [vmem:[%s1 + $0x6b4] sm:$0xf]
    %v456 = vld [vmem:[%s1 + $0x6b8] sm:$0xf]
    %v457 = vld [vmem:[%s1 + $0x6bc] sm:$0xf]
    %v458 = vld [vmem:[%s1 + $0x6c0] sm:$0xf]
    %v459 = vld [vmem:[%s1 + $0x6c4] sm:$0xf]
    %v460 = vld [vmem:[%s1 + $0x6c8] sm:$0xf]
    %v461 = vld [vmem:[%s1 + $0x6cc] sm:$0xf]
    %v462 = vld [vmem:[%s1 + $0x6d0] sm:$0xf]
    %v463 = vld [vmem:[%s1 + $0x6d4] sm:$0xf]
    %v464 = vld [vmem:[%s1 + $0x6d8] sm:$0xf]
    %v465 = vld [vmem:[%s1 + $0x6dc] sm:$0xf]
    %v466 = vld [vmem:[%s1 + $0x6e0] sm:$0xf]
    %v467 = vld [vmem:[%s1 + $0x6e4] sm:$0xf]
    %v468 = vld [vmem:[%s1 + $0x6e8] sm:$0xf]
    %v469 = vld [vmem:[%s1 + $0x6ec] sm:$0xf]
    %v470 = vld [vmem:[%s1 + $0x6f0] sm:$0xf]
    %v471 = vld [vmem:[%s1 + $0x6f4] sm:$0xf]
    %v472 = vld [vmem:[%s1 + $0x6f8] sm:$0xf]
    %v473 = vld [vmem:[%s1 + $0x6fc] sm:$0xf]
    %v474 = vld [vmem:[%s1 + $0x700] sm:$0xf]
    %v475 = vld [vmem:[%s1 + $0x704] sm:$0xf]
    %v476 = vld [vmem:[%s1 + $0x708] sm:$0xf]
    %v477 = vld [vmem:[%s1 + $0x70c] sm:$0xf]
    %v478 = vld [vmem:[%s1 + $0x710] sm:$0xf]
    %v479 = vld [vmem:[%s1 + $0x714] sm:$0xf]
    %v480 = vld [vmem:[%s1 + $0x718] sm:$0xf]
    %v481 = vld [vmem:[%s1 + $0x71c] sm:$0xf]
    %v482 = vld [vmem:[%s1 + $0x720] sm:$0xf]
    %v483 = vld [vmem:[%s1 + $0x724] sm:$0xf]
    %v484 = vld [vmem:[%s1 + $0x728] sm:$0xf]
    %v485 = vld [vmem:[%s1 + $0x72c] sm:$0xf]
    %v486 = vld [vmem:[%s1 + $0x730] sm:$0xf]
    %v487 = vld [vmem:[%s1 + $0x734] sm:$0xf]
    %v488 = vld [vmem:[%s1 + $0x738] sm:$0xf]
    %v489 = vld [vmem:[%s1 + $0x73c] sm:$0xf]
    %v490 = vld [vmem:[%s1 + $0x740] sm:$0xf]
    %v491 = vld [vmem:[%s1 + $0x744] sm:$0xf]
    %v492 = vld [vmem:[%s1 + $0x748] sm:$0xf]
    %v493 = vld [vmem:[%s1 + $0x74c] sm:$0xf]
    %v494 = vld [vmem:[%s1 + $0x750] sm:$0xf]
    %v495 = vld [vmem:[%s1 + $0x754] sm:$0xf]
    %v496 = vld [vmem:[%s1 + $0x758] sm:$0xf]
    %v497 = vld [vmem:[%s1 + $0x75c] sm:$0xf]
    %v498 = vld [vmem:[%s1 + $0x760] sm:$0xf]
    %v499 = vld [vmem:[%s1 + $0x764] sm:$0xf]
    %v500 = vld [vmem:[%s1 + $0x768] sm:$0xf]
    %v501 = vld [vmem:[%s1 + $0x76c] sm:$0xf]
    %v502 = vld [vmem:[%s1 + $0x770] sm:$0xf]
    %v503 = vld [vmem:[%s1 + $0x774] sm:$0xf]
    %v504 = vld [vmem:[%s1 + $0x778] sm:$0xf]
    %v505 = vld [vmem:[%s1 + $0x77c] sm:$0xf]
    %v506 = vld [vmem:[%s1 + $0x780] sm:$0xf]
    %v507 = vld [vmem:[%s1 + $0x784] sm:$0xf]
    %v508 = vld [vmem:[%s1 + $0x788] sm:$0xf]
    %v509 = vld [vmem:[%s1 + $0x78c] sm:$0xf]
    %v510 = vld [vmem:[%s1 + $0x790] sm:$0xf]
    %v511 = vld [vmem:[%s1 + $0x794] sm:$0xf]
    %v512 = vld [vmem:[%s1 + $0x798] sm:$0xf]
    %v513 = vld [vmem:[%s1 + $0x79c] sm:$0xf]
    %v514 = vld [vmem:[%s1 + $0x7a0] sm:$0xf]
    %v515 = vld [vmem:[%s1 + $0x7a4] sm:$0xf]
    %v516 = vld [vmem:[%s1 + $0x7a8] sm:$0xf]
    %v517 = vld [vmem:[%s1 + $0x7ac] sm:$0xf]
    %v518 = vld [vmem:[%s1 + $0x7b0] sm:$0xf]
    %v519 = vld [vmem:[%s1 + $0x7b4] sm:$0xf]
    %v520 = vld [vmem:[%s1 + $0x7b8] sm:$0xf]
    %v521 = vld [vmem:[%s1 + $0x7bc] sm:$0xf]
    %v522 = vld [vmem:[%s1 + $0x7c0] sm:$0xf]
    %v523 = vld [vmem:[%s1 + $0x7c4] sm:$0xf]
    %v524 = vld [vmem:[%s1 + $0x7c8] sm:$0xf]
    %v525 = vld [vmem:[%s1 + $0x7cc] sm:$0xf]
    %v526 = vld [vmem:[%s1 + $0x7d0] sm:$0xf]
    %v527 = vld [vmem:[%s1 + $0x7d4] sm:$0xf]
    %v528 = vld [vmem:[%s1 + $0x7d8] sm:$0xf]
    %v529 = vld [vmem:[%s1 + $0x7dc] sm:$0xf]
    %v530 = vld [vmem:[%s1 + $0x7e0] sm:$0xf]
    %v531 = vld [vmem:[%s1 + $0x7e4] sm:$0xf]
    %v532 = vld [vmem:[%s1 + $0x7e8] sm:$0xf]
    %v533 = vld [vmem:[%s1 + $0x7ec] sm:$0xf]
    %v534 = vld [vmem:[%s1 + $0x7f0] sm:$0xf]
    %v535 = vld [vmem:[%s1 + $0x7f4] sm:$0xf]
    %v536 = vld [vmem:[%s1 + $0x7f8] sm:$0xf]
    %v537 = vld [vmem:[%s1 + $0x7fc] sm:$0xf]
    %v538 = vld [vmem:[%s2] sm:$0x1]
    %v540 = vlaneseq
    %v541 = vshrl.u32 %v540, 7
    %v542 = vsub.s32 0, %v541
    %v543 = vrot.slane %v538, %v542
    %v549 = vcombine.high %v22, %v22
    %v551 = vunpack.c.l.s4 1966171168
    %v552 = vunpack.c.0.s8 %v551
    %v553 = vlaneseq
    %v554 = vshrl.u32 %v553, 7
    %v555 = vsub.s32 %v552, %v554
    %v556 = vrot.slane %v22, %v555
    %v558 = vunpack.c.l.s4 1966171168
    %v559 = vunpack.c.0.s8 %v558
    %v560 = vlaneseq
    %v561 = vshrl.u32 %v560, 7
    %v562 = vsub.s32 %v559, %v561
    %v563 = vrot.slane %v549, %v562
    %v564 = vcombine.high %v556, %v556
    %v565 = vcombine.high %v563, %v563
    %v567 = vunpack.c.l.s4 1966171168
    %v568 = vunpack.c.0.s8 %v567
    %v569 = vlaneseq
    %v570 = vshrl.u32 %v569, 7
    %v571 = vsub.s32 %v568, %v570
    %v572 = vrot.slane %v556, %v571
    %v574 = vunpack.c.l.s4 1966171168
    %v575 = vunpack.c.0.s8 %v574
    %v576 = vlaneseq
    %v577 = vshrl.u32 %v576, 7
    %v578 = vsub.s32 %v575, %v577
    %v579 = vrot.slane %v563, %v578
    %v581 = vunpack.c.l.s4 1966171168
    %v582 = vunpack.c.0.s8 %v581
    %v583 = vlaneseq
    %v584 = vshrl.u32 %v583, 7
    %v585 = vsub.s32 %v582, %v584
    %v586 = vrot.slane %v564, %v585
    %v588 = vunpack.c.l.s4 1966171168
    %v589 = vunpack.c.0.s8 %v588
    %v590 = vlaneseq
    %v591 = vshrl.u32 %v590, 7
    %v592 = vsub.s32 %v589, %v591
    %v593 = vrot.slane %v565, %v592
    %v594 = vcombine.high %v572, %v572
    %v595 = vcombine.high %v579, %v579
    %v596 = vcombine.high %v586, %v586
    %v597 = vcombine.high %v593, %v593
    %v598 = vcombine.high %v23, %v23
    %v600 = vunpack.c.l.s4 1966171168
    %v601 = vunpack.c.0.s8 %v600
    %v602 = vlaneseq
    %v603 = vshrl.u32 %v602, 7
    %v604 = vsub.s32 %v601, %v603
    %v605 = vrot.slane %v23, %v604
    %v607 = vunpack.c.l.s4 1966171168
    %v608 = vunpack.c.0.s8 %v607
    %v609 = vlaneseq
    %v610 = vshrl.u32 %v609, 7
    %v611 = vsub.s32 %v608, %v610
    %v612 = vrot.slane %v598, %v611
    %v613 = vcombine.high %v605, %v605
    %v614 = vcombine.high %v612, %v612
    %v616 = vunpack.c.l.s4 1966171168
    %v617 = vunpack.c.0.s8 %v616
    %v618 = vlaneseq
    %v619 = vshrl.u32 %v618, 7
    %v620 = vsub.s32 %v617, %v619
    %v621 = vrot.slane %v605, %v620
    %v623 = vunpack.c.l.s4 1966171168
    %v624 = vunpack.c.0.s8 %v623
    %v625 = vlaneseq
    %v626 = vshrl.u32 %v625, 7
    %v627 = vsub.s32 %v624, %v626
    %v628 = vrot.slane %v612, %v627
    %v630 = vunpack.c.l.s4 1966171168
    %v631 = vunpack.c.0.s8 %v630
    %v632 = vlaneseq
    %v633 = vshrl.u32 %v632, 7
    %v634 = vsub.s32 %v631, %v633
    %v635 = vrot.slane %v613, %v634
    %v637 = vunpack.c.l.s4 1966171168
    %v638 = vunpack.c.0.s8 %v637
    %v639 = vlaneseq
    %v640 = vshrl.u32 %v639, 7
    %v641 = vsub.s32 %v638, %v640
    %v642 = vrot.slane %v614, %v641
    %v643 = vcombine.high %v621, %v621
    %v644 = vcombine.high %v628, %v628
    %v645 = vcombine.high %v635, %v635
    %v646 = vcombine.high %v642, %v642
    %v647 = vcombine.high %v24, %v24
    %v649 = vunpack.c.l.s4 1966171168
    %v650 = vunpack.c.0.s8 %v649
    %v651 = vlaneseq
    %v652 = vshrl.u32 %v651, 7
    %v653 = vsub.s32 %v650, %v652
    %v654 = vrot.slane %v24, %v653
    %v656 = vunpack.c.l.s4 1966171168
    %v657 = vunpack.c.0.s8 %v656
    %v658 = vlaneseq
    %v659 = vshrl.u32 %v658, 7
    %v660 = vsub.s32 %v657, %v659
    %v661 = vrot.slane %v647, %v660
    %v662 = vcombine.high %v654, %v654
    %v663 = vcombine.high %v661, %v661
    %v665 = vunpack.c.l.s4 1966171168
    %v666 = vunpack.c.0.s8 %v665
    %v667 = vlaneseq
    %v668 = vshrl.u32 %v667, 7
    %v669 = vsub.s32 %v666, %v668
    %v670 = vrot.slane %v654, %v669
    %v672 = vunpack.c.l.s4 1966171168
    %v673 = vunpack.c.0.s8 %v672
    %v674 = vlaneseq
    %v675 = vshrl.u32 %v674, 7
    %v676 = vsub.s32 %v673, %v675
    %v677 = vrot.slane %v661, %v676
    %v679 = vunpack.c.l.s4 1966171168
    %v680 = vunpack.c.0.s8 %v679
    %v681 = vlaneseq
    %v682 = vshrl.u32 %v681, 7
    %v683 = vsub.s32 %v680, %v682
    %v684 = vrot.slane %v662, %v683
    %v686 = vunpack.c.l.s4 1966171168
    %v687 = vunpack.c.0.s8 %v686
    %v688 = vlaneseq
    %v689 = vshrl.u32 %v688, 7
    %v690 = vsub.s32 %v687, %v689
    %v691 = vrot.slane %v663, %v690
    %v692 = vcombine.high %v670, %v670
    %v693 = vcombine.high %v677, %v677
    %v694 = vcombine.high %v684, %v684
    %v695 = vcombine.high %v691, %v691
    %v696 = vcombine.high %v25, %v25
    %v698 = vunpack.c.l.s4 1966171168
    %v699 = vunpack.c.0.s8 %v698
    %v700 = vlaneseq
    %v701 = vshrl.u32 %v700, 7
    %v702 = vsub.s32 %v699, %v701
    %v703 = vrot.slane %v25, %v702
    %v705 = vunpack.c.l.s4 1966171168
    %v706 = vunpack.c.0.s8 %v705
    %v707 = vlaneseq
    %v708 = vshrl.u32 %v707, 7
    %v709 = vsub.s32 %v706, %v708
    %v710 = vrot.slane %v696, %v709
    %v711 = vcombine.high %v703, %v703
    %v712 = vcombine.high %v710, %v710
    %v714 = vunpack.c.l.s4 1966171168
    %v715 = vunpack.c.0.s8 %v714
    %v716 = vlaneseq
    %v717 = vshrl.u32 %v716, 7
    %v718 = vsub.s32 %v715, %v717
    %v719 = vrot.slane %v703, %v718
    %v721 = vunpack.c.l.s4 1966171168
    %v722 = vunpack.c.0.s8 %v721
    %v723 = vlaneseq
    %v724 = vshrl.u32 %v723, 7
    %v725 = vsub.s32 %v722, %v724
    %v726 = vrot.slane %v710, %v725
    %v728 = vunpack.c.l.s4 1966171168
    %v729 = vunpack.c.0.s8 %v728
    %v730 = vlaneseq
    %v731 = vshrl.u32 %v730, 7
    %v732 = vsub.s32 %v729, %v731
    %v733 = vrot.slane %v711, %v732
    %v735 = vunpack.c.l.s4 1966171168
    %v736 = vunpack.c.0.s8 %v735
    %v737 = vlaneseq
    %v738 = vshrl.u32 %v737, 7
    %v739 = vsub.s32 %v736, %v738
    %v740 = vrot.slane %v712, %v739
    %v741 = vcombine.high %v719, %v719
    %v742 = vcombine.high %v726, %v726
    %v743 = vcombine.high %v733, %v733
    %v744 = vcombine.high %v740, %v740
    %v1289 = vunpack.c.l.b16 %v26
    %v1290 = vunpack.c.l.b16 %v27
    %v1291 = vunpack.c.l.b16 %v28
    %v1292 = vunpack.c.l.b16 %v29
    %v1293 = vunpack.c.l.b16 %v30
    %v1294 = vunpack.c.l.b16 %v31
    %v1295 = vunpack.c.l.b16 %v32
    %v1296 = vunpack.c.l.b16 %v33
    %v1297 = vunpack.c.l.b16 %v34
    %v1298 = vunpack.c.l.b16 %v35
    %v1299 = vunpack.c.l.b16 %v36
    %v1300 = vunpack.c.l.b16 %v37
    %v1301 = vunpack.c.l.b16 %v38
    %v1302 = vunpack.c.l.b16 %v39
    %v1303 = vunpack.c.l.b16 %v40
    %v1304 = vunpack.c.l.b16 %v41
    %v1305 = vunpack.c.l.b16 %v42
    %v1306 = vunpack.c.l.b16 %v43
    %v1307 = vunpack.c.l.b16 %v44
    %v1308 = vunpack.c.l.b16 %v45
    %v1309 = vunpack.c.l.b16 %v46
    %v1310 = vunpack.c.l.b16 %v47
    %v1311 = vunpack.c.l.b16 %v48
    %v1312 = vunpack.c.l.b16 %v49
    %v1313 = vunpack.c.l.b16 %v50
    %v1314 = vunpack.c.l.b16 %v51
    %v1315 = vunpack.c.l.b16 %v52
    %v1316 = vunpack.c.l.b16 %v53
    %v1317 = vunpack.c.l.b16 %v54
    %v1318 = vunpack.c.l.b16 %v55
    %v1319 = vunpack.c.l.b16 %v56
    %v1320 = vunpack.c.l.b16 %v57
    %v1321 = vunpack.c.l.b16 %v58
    %v1322 = vunpack.c.l.b16 %v59
    %v1323 = vunpack.c.l.b16 %v60
    %v1324 = vunpack.c.l.b16 %v61
    %v1325 = vunpack.c.l.b16 %v62
    %v1326 = vunpack.c.l.b16 %v63
    %v1327 = vunpack.c.l.b16 %v64
    %v1328 = vunpack.c.l.b16 %v65
    %v1329 = vunpack.c.l.b16 %v66
    %v1330 = vunpack.c.l.b16 %v67
    %v1331 = vunpack.c.l.b16 %v68
    %v1332 = vunpack.c.l.b16 %v69
    %v1333 = vunpack.c.l.b16 %v70
    %v1334 = vunpack.c.l.b16 %v71
    %v1335 = vunpack.c.l.b16 %v72
    %v1336 = vunpack.c.l.b16 %v73
    %v1337 = vunpack.c.l.b16 %v74
    %v1338 = vunpack.c.l.b16 %v75
    %v1339 = vunpack.c.l.b16 %v76
    %v1340 = vunpack.c.l.b16 %v77
    %v1341 = vunpack.c.l.b16 %v78
    %v1342 = vunpack.c.l.b16 %v79
    %v1343 = vunpack.c.l.b16 %v80
    %v1344 = vunpack.c.l.b16 %v81
    %v1345 = vunpack.c.l.b16 %v82
    %v1346 = vunpack.c.l.b16 %v83
    %v1347 = vunpack.c.l.b16 %v84
    %v1348 = vunpack.c.l.b16 %v85
    %v1349 = vunpack.c.l.b16 %v86
    %v1350 = vunpack.c.l.b16 %v87
    %v1351 = vunpack.c.l.b16 %v88
    %v1352 = vunpack.c.l.b16 %v89
    %v1353 = vunpack.c.l.b16 %v90
    %v1354 = vunpack.c.l.b16 %v91
    %v1355 = vunpack.c.l.b16 %v92
    %v1356 = vunpack.c.l.b16 %v93
    %v1357 = vunpack.c.l.b16 %v94
    %v1358 = vunpack.c.l.b16 %v95
    %v1359 = vunpack.c.l.b16 %v96
    %v1360 = vunpack.c.l.b16 %v97
    %v1361 = vunpack.c.l.b16 %v98
    %v1362 = vunpack.c.l.b16 %v99
    %v1363 = vunpack.c.l.b16 %v100
    %v1364 = vunpack.c.l.b16 %v101
    %v1365 = vunpack.c.l.b16 %v102
    %v1366 = vunpack.c.l.b16 %v103
    %v1367 = vunpack.c.l.b16 %v104
    %v1368 = vunpack.c.l.b16 %v105
    %v1369 = vunpack.c.l.b16 %v106
    %v1370 = vunpack.c.l.b16 %v107
    %v1371 = vunpack.c.l.b16 %v108
    %v1372 = vunpack.c.l.b16 %v109
    %v1373 = vunpack.c.l.b16 %v110
    %v1374 = vunpack.c.l.b16 %v111
    %v1375 = vunpack.c.l.b16 %v112
    %v1376 = vunpack.c.l.b16 %v113
    %v1377 = vunpack.c.l.b16 %v114
    %v1378 = vunpack.c.l.b16 %v115
    %v1379 = vunpack.c.l.b16 %v116
    %v1380 = vunpack.c.l.b16 %v117
    %v1381 = vunpack.c.l.b16 %v118
    %v1382 = vunpack.c.l.b16 %v119
    %v1383 = vunpack.c.l.b16 %v120
    %v1384 = vunpack.c.l.b16 %v121
    %v1385 = vunpack.c.l.b16 %v122
    %v1386 = vunpack.c.l.b16 %v123
    %v1387 = vunpack.c.l.b16 %v124
    %v1388 = vunpack.c.l.b16 %v125
    %v1389 = vunpack.c.l.b16 %v126
    %v1390 = vunpack.c.l.b16 %v127
    %v1391 = vunpack.c.l.b16 %v128
    %v1392 = vunpack.c.l.b16 %v129
    %v1393 = vunpack.c.l.b16 %v130
    %v1394 = vunpack.c.l.b16 %v131
    %v1395 = vunpack.c.l.b16 %v132
    %v1396 = vunpack.c.l.b16 %v133
    %v1397 = vunpack.c.l.b16 %v134
    %v1398 = vunpack.c.l.b16 %v135
    %v1399 = vunpack.c.l.b16 %v136
    %v1400 = vunpack.c.l.b16 %v137
    %v1401 = vunpack.c.l.b16 %v138
    %v1402 = vunpack.c.l.b16 %v139
    %v1403 = vunpack.c.l.b16 %v140
    %v1404 = vunpack.c.l.b16 %v141
    %v1405 = vunpack.c.l.b16 %v142
    %v1406 = vunpack.c.l.b16 %v143
    %v1407 = vunpack.c.l.b16 %v144
    %v1408 = vunpack.c.l.b16 %v145
    %v1409 = vunpack.c.l.b16 %v146
    %v1410 = vunpack.c.l.b16 %v147
    %v1411 = vunpack.c.l.b16 %v148
    %v1412 = vunpack.c.l.b16 %v149
    %v1413 = vunpack.c.l.b16 %v150
    %v1414 = vunpack.c.l.b16 %v151
    %v1415 = vunpack.c.l.b16 %v152
    %v1416 = vunpack.c.l.b16 %v153
    %v1417 = vunpack.c.l.b16 %v154
    %v1418 = vunpack.c.l.b16 %v155
    %v1419 = vunpack.c.l.b16 %v156
    %v1420 = vunpack.c.l.b16 %v157
    %v1421 = vunpack.c.l.b16 %v158
    %v1422 = vunpack.c.l.b16 %v159
    %v1423 = vunpack.c.l.b16 %v160
    %v1424 = vunpack.c.l.b16 %v161
    %v1425 = vunpack.c.l.b16 %v162
    %v1426 = vunpack.c.l.b16 %v163
    %v1427 = vunpack.c.l.b16 %v164
    %v1428 = vunpack.c.l.b16 %v165
    %v1429 = vunpack.c.l.b16 %v166
    %v1430 = vunpack.c.l.b16 %v167
    %v1431 = vunpack.c.l.b16 %v168
    %v1432 = vunpack.c.l.b16 %v169
    %v1433 = vunpack.c.l.b16 %v170
    %v1434 = vunpack.c.l.b16 %v171
    %v1435 = vunpack.c.l.b16 %v172
    %v1436 = vunpack.c.l.b16 %v173
    %v1437 = vunpack.c.l.b16 %v174
    %v1438 = vunpack.c.l.b16 %v175
    %v1439 = vunpack.c.l.b16 %v176
    %v1440 = vunpack.c.l.b16 %v177
    %v1441 = vunpack.c.l.b16 %v178
    %v1442 = vunpack.c.l.b16 %v179
    %v1443 = vunpack.c.l.b16 %v180
    %v1444 = vunpack.c.l.b16 %v181
    %v1445 = vunpack.c.l.b16 %v182
    %v1446 = vunpack.c.l.b16 %v183
    %v1447 = vunpack.c.l.b16 %v184
    %v1448 = vunpack.c.l.b16 %v185
    %v1449 = vunpack.c.l.b16 %v186
    %v1450 = vunpack.c.l.b16 %v187
    %v1451 = vunpack.c.l.b16 %v188
    %v1452 = vunpack.c.l.b16 %v189
    %v1453 = vunpack.c.l.b16 %v190
    %v1454 = vunpack.c.l.b16 %v191
    %v1455 = vunpack.c.l.b16 %v192
    %v1456 = vunpack.c.l.b16 %v193
    %v1457 = vunpack.c.l.b16 %v194
    %v1458 = vunpack.c.l.b16 %v195
    %v1459 = vunpack.c.l.b16 %v196
    %v1460 = vunpack.c.l.b16 %v197
    %v1461 = vunpack.c.l.b16 %v198
    %v1462 = vunpack.c.l.b16 %v199
    %v1463 = vunpack.c.l.b16 %v200
    %v1464 = vunpack.c.l.b16 %v201
    %v1465 = vunpack.c.l.b16 %v202
    %v1466 = vunpack.c.l.b16 %v203
    %v1467 = vunpack.c.l.b16 %v204
    %v1468 = vunpack.c.l.b16 %v205
    %v1469 = vunpack.c.l.b16 %v206
    %v1470 = vunpack.c.l.b16 %v207
    %v1471 = vunpack.c.l.b16 %v208
    %v1472 = vunpack.c.l.b16 %v209
    %v1473 = vunpack.c.l.b16 %v210
    %v1474 = vunpack.c.l.b16 %v211
    %v1475 = vunpack.c.l.b16 %v212
    %v1476 = vunpack.c.l.b16 %v213
    %v1477 = vunpack.c.l.b16 %v214
    %v1478 = vunpack.c.l.b16 %v215
    %v1479 = vunpack.c.l.b16 %v216
    %v1480 = vunpack.c.l.b16 %v217
    %v1481 = vunpack.c.l.b16 %v218
    %v1482 = vunpack.c.l.b16 %v219
    %v1483 = vunpack.c.l.b16 %v220
    %v1484 = vunpack.c.l.b16 %v221
    %v1485 = vunpack.c.l.b16 %v222
    %v1486 = vunpack.c.l.b16 %v223
    %v1487 = vunpack.c.l.b16 %v224
    %v1488 = vunpack.c.l.b16 %v225
    %v1489 = vunpack.c.l.b16 %v226
    %v1490 = vunpack.c.l.b16 %v227
    %v1491 = vunpack.c.l.b16 %v228
    %v1492 = vunpack.c.l.b16 %v229
    %v1493 = vunpack.c.l.b16 %v230
    %v1494 = vunpack.c.l.b16 %v231
    %v1495 = vunpack.c.l.b16 %v232
    %v1496 = vunpack.c.l.b16 %v233
    %v1497 = vunpack.c.l.b16 %v234
    %v1498 = vunpack.c.l.b16 %v235
    %v1499 = vunpack.c.l.b16 %v236
    %v1500 = vunpack.c.l.b16 %v237
    %v1501 = vunpack.c.l.b16 %v238
    %v1502 = vunpack.c.l.b16 %v239
    %v1503 = vunpack.c.l.b16 %v240
    %v1504 = vunpack.c.l.b16 %v241
    %v1505 = vunpack.c.l.b16 %v242
    %v1506 = vunpack.c.l.b16 %v243
    %v1507 = vunpack.c.l.b16 %v244
    %v1508 = vunpack.c.l.b16 %v245
    %v1509 = vunpack.c.l.b16 %v246
    %v1510 = vunpack.c.l.b16 %v247
    %v1511 = vunpack.c.l.b16 %v248
    %v1512 = vunpack.c.l.b16 %v249
    %v1513 = vunpack.c.l.b16 %v250
    %v1514 = vunpack.c.l.b16 %v251
    %v1515 = vunpack.c.l.b16 %v252
    %v1516 = vunpack.c.l.b16 %v253
    %v1517 = vunpack.c.l.b16 %v254
    %v1518 = vunpack.c.l.b16 %v255
    %v1519 = vunpack.c.l.b16 %v256
    %v1520 = vunpack.c.l.b16 %v257
    %v1521 = vunpack.c.l.b16 %v258
    %v1522 = vunpack.c.l.b16 %v259
    %v1523 = vunpack.c.l.b16 %v260
    %v1524 = vunpack.c.l.b16 %v261
    %v1525 = vunpack.c.l.b16 %v262
    %v1526 = vunpack.c.l.b16 %v263
    %v1527 = vunpack.c.l.b16 %v264
    %v1528 = vunpack.c.l.b16 %v265
    %v1529 = vunpack.c.l.b16 %v266
    %v1530 = vunpack.c.l.b16 %v267
    %v1531 = vunpack.c.l.b16 %v268
    %v1532 = vunpack.c.l.b16 %v269
    %v1533 = vunpack.c.l.b16 %v270
    %v1534 = vunpack.c.l.b16 %v271
    %v1535 = vunpack.c.l.b16 %v272
    %v1536 = vunpack.c.l.b16 %v273
    %v1537 = vunpack.c.l.b16 %v274
    %v1538 = vunpack.c.l.b16 %v275
    %v1539 = vunpack.c.l.b16 %v276
    %v1540 = vunpack.c.l.b16 %v277
    %v1541 = vunpack.c.l.b16 %v278
    %v1542 = vunpack.c.l.b16 %v279
    %v1543 = vunpack.c.l.b16 %v280
    %v1544 = vunpack.c.l.b16 %v281
    %v1545 = vunpack.c.l.b16 %v282
    %v1546 = vunpack.c.l.b16 %v283
    %v1547 = vunpack.c.l.b16 %v284
    %v1548 = vunpack.c.l.b16 %v285
    %v1549 = vunpack.c.l.b16 %v286
    %v1550 = vunpack.c.l.b16 %v287
    %v1551 = vunpack.c.l.b16 %v288
    %v1552 = vunpack.c.l.b16 %v289
    %v1553 = vunpack.c.l.b16 %v290
    %v1554 = vunpack.c.l.b16 %v291
    %v1555 = vunpack.c.l.b16 %v292
    %v1556 = vunpack.c.l.b16 %v293
    %v1557 = vunpack.c.l.b16 %v294
    %v1558 = vunpack.c.l.b16 %v295
    %v1559 = vunpack.c.l.b16 %v296
    %v1560 = vunpack.c.l.b16 %v297
    %v1561 = vunpack.c.l.b16 %v298
    %v1562 = vunpack.c.l.b16 %v299
    %v1563 = vunpack.c.l.b16 %v300
    %v1564 = vunpack.c.l.b16 %v301
    %v1565 = vunpack.c.l.b16 %v302
    %v1566 = vunpack.c.l.b16 %v303
    %v1567 = vunpack.c.l.b16 %v304
    %v1568 = vunpack.c.l.b16 %v305
    %v1569 = vunpack.c.l.b16 %v306
    %v1570 = vunpack.c.l.b16 %v307
    %v1571 = vunpack.c.l.b16 %v308
    %v1572 = vunpack.c.l.b16 %v309
    %v1573 = vunpack.c.l.b16 %v310
    %v1574 = vunpack.c.l.b16 %v311
    %v1575 = vunpack.c.l.b16 %v312
    %v1576 = vunpack.c.l.b16 %v313
    %v1577 = vunpack.c.l.b16 %v314
    %v1578 = vunpack.c.l.b16 %v315
    %v1579 = vunpack.c.l.b16 %v316
    %v1580 = vunpack.c.l.b16 %v317
    %v1581 = vunpack.c.l.b16 %v318
    %v1582 = vunpack.c.l.b16 %v319
    %v1583 = vunpack.c.l.b16 %v320
    %v1584 = vunpack.c.l.b16 %v321
    %v1585 = vunpack.c.l.b16 %v322
    %v1586 = vunpack.c.l.b16 %v323
    %v1587 = vunpack.c.l.b16 %v324
    %v1588 = vunpack.c.l.b16 %v325
    %v1589 = vunpack.c.l.b16 %v326
    %v1590 = vunpack.c.l.b16 %v327
    %v1591 = vunpack.c.l.b16 %v328
    %v1592 = vunpack.c.l.b16 %v329
    %v1593 = vunpack.c.l.b16 %v330
    %v1594 = vunpack.c.l.b16 %v331
    %v1595 = vunpack.c.l.b16 %v332
    %v1596 = vunpack.c.l.b16 %v333
    %v1597 = vunpack.c.l.b16 %v334
    %v1598 = vunpack.c.l.b16 %v335
    %v1599 = vunpack.c.l.b16 %v336
    %v1600 = vunpack.c.l.b16 %v337
    %v1601 = vunpack.c.l.b16 %v338
    %v1602 = vunpack.c.l.b16 %v339
    %v1603 = vunpack.c.l.b16 %v340
    %v1604 = vunpack.c.l.b16 %v341
    %v1605 = vunpack.c.l.b16 %v342
    %v1606 = vunpack.c.l.b16 %v343
    %v1607 = vunpack.c.l.b16 %v344
    %v1608 = vunpack.c.l.b16 %v345
    %v1609 = vunpack.c.l.b16 %v346
    %v1610 = vunpack.c.l.b16 %v347
    %v1611 = vunpack.c.l.b16 %v348
    %v1612 = vunpack.c.l.b16 %v349
    %v1613 = vunpack.c.l.b16 %v350
    %v1614 = vunpack.c.l.b16 %v351
    %v1615 = vunpack.c.l.b16 %v352
    %v1616 = vunpack.c.l.b16 %v353
    %v1617 = vunpack.c.l.b16 %v354
    %v1618 = vunpack.c.l.b16 %v355
    %v1619 = vunpack.c.l.b16 %v356
    %v1620 = vunpack.c.l.b16 %v357
    %v1621 = vunpack.c.l.b16 %v358
    %v1622 = vunpack.c.l.b16 %v359
    %v1623 = vunpack.c.l.b16 %v360
    %v1624 = vunpack.c.l.b16 %v361
    %v1625 = vunpack.c.l.b16 %v362
    %v1626 = vunpack.c.l.b16 %v363
    %v1627 = vunpack.c.l.b16 %v364
    %v1628 = vunpack.c.l.b16 %v365
    %v1629 = vunpack.c.l.b16 %v366
    %v1630 = vunpack.c.l.b16 %v367
    %v1631 = vunpack.c.l.b16 %v368
    %v1632 = vunpack.c.l.b16 %v369
    %v1633 = vunpack.c.l.b16 %v370
    %v1634 = vunpack.c.l.b16 %v371
    %v1635 = vunpack.c.l.b16 %v372
    %v1636 = vunpack.c.l.b16 %v373
    %v1637 = vunpack.c.l.b16 %v374
    %v1638 = vunpack.c.l.b16 %v375
    %v1639 = vunpack.c.l.b16 %v376
    %v1640 = vunpack.c.l.b16 %v377
    %v1641 = vunpack.c.l.b16 %v378
    %v1642 = vunpack.c.l.b16 %v379
    %v1643 = vunpack.c.l.b16 %v380
    %v1644 = vunpack.c.l.b16 %v381
    %v1645 = vunpack.c.l.b16 %v382
    %v1646 = vunpack.c.l.b16 %v383
    %v1647 = vunpack.c.l.b16 %v384
    %v1648 = vunpack.c.l.b16 %v385
    %v1649 = vunpack.c.l.b16 %v386
    %v1650 = vunpack.c.l.b16 %v387
    %v1651 = vunpack.c.l.b16 %v388
    %v1652 = vunpack.c.l.b16 %v389
    %v1653 = vunpack.c.l.b16 %v390
    %v1654 = vunpack.c.l.b16 %v391
    %v1655 = vunpack.c.l.b16 %v392
    %v1656 = vunpack.c.l.b16 %v393
    %v1657 = vunpack.c.l.b16 %v394
    %v1658 = vunpack.c.l.b16 %v395
    %v1659 = vunpack.c.l.b16 %v396
    %v1660 = vunpack.c.l.b16 %v397
    %v1661 = vunpack.c.l.b16 %v398
    %v1662 = vunpack.c.l.b16 %v399
    %v1663 = vunpack.c.l.b16 %v400
    %v1664 = vunpack.c.l.b16 %v401
    %v1665 = vunpack.c.l.b16 %v402
    %v1666 = vunpack.c.l.b16 %v403
    %v1667 = vunpack.c.l.b16 %v404
    %v1668 = vunpack.c.l.b16 %v405
    %v1669 = vunpack.c.l.b16 %v406
    %v1670 = vunpack.c.l.b16 %v407
    %v1671 = vunpack.c.l.b16 %v408
    %v1672 = vunpack.c.l.b16 %v409
    %v1673 = vunpack.c.l.b16 %v410
    %v1674 = vunpack.c.l.b16 %v411
    %v1675 = vunpack.c.l.b16 %v412
    %v1676 = vunpack.c.l.b16 %v413
    %v1677 = vunpack.c.l.b16 %v414
    %v1678 = vunpack.c.l.b16 %v415
    %v1679 = vunpack.c.l.b16 %v416
    %v1680 = vunpack.c.l.b16 %v417
    %v1681 = vunpack.c.l.b16 %v418
    %v1682 = vunpack.c.l.b16 %v419
    %v1683 = vunpack.c.l.b16 %v420
    %v1684 = vunpack.c.l.b16 %v421
    %v1685 = vunpack.c.l.b16 %v422
    %v1686 = vunpack.c.l.b16 %v423
    %v1687 = vunpack.c.l.b16 %v424
    %v1688 = vunpack.c.l.b16 %v425
    %v1689 = vunpack.c.l.b16 %v426
    %v1690 = vunpack.c.l.b16 %v427
    %v1691 = vunpack.c.l.b16 %v428
    %v1692 = vunpack.c.l.b16 %v429
    %v1693 = vunpack.c.l.b16 %v430
    %v1694 = vunpack.c.l.b16 %v431
    %v1695 = vunpack.c.l.b16 %v432
    %v1696 = vunpack.c.l.b16 %v433
    %v1697 = vunpack.c.l.b16 %v434
    %v1698 = vunpack.c.l.b16 %v435
    %v1699 = vunpack.c.l.b16 %v436
    %v1700 = vunpack.c.l.b16 %v437
    %v1701 = vunpack.c.l.b16 %v438
    %v1702 = vunpack.c.l.b16 %v439
    %v1703 = vunpack.c.l.b16 %v440
    %v1704 = vunpack.c.l.b16 %v441
    %v1705 = vunpack.c.l.b16 %v442
    %v1706 = vunpack.c.l.b16 %v443
    %v1707 = vunpack.c.l.b16 %v444
    %v1708 = vunpack.c.l.b16 %v445
    %v1709 = vunpack.c.l.b16 %v446
    %v1710 = vunpack.c.l.b16 %v447
    %v1711 = vunpack.c.l.b16 %v448
    %v1712 = vunpack.c.l.b16 %v449
    %v1713 = vunpack.c.l.b16 %v450
    %v1714 = vunpack.c.l.b16 %v451
    %v1715 = vunpack.c.l.b16 %v452
    %v1716 = vunpack.c.l.b16 %v453
    %v1717 = vunpack.c.l.b16 %v454
    %v1718 = vunpack.c.l.b16 %v455
    %v1719 = vunpack.c.l.b16 %v456
    %v1720 = vunpack.c.l.b16 %v457
    %v1721 = vunpack.c.l.b16 %v458
    %v1722 = vunpack.c.l.b16 %v459
    %v1723 = vunpack.c.l.b16 %v460
    %v1724 = vunpack.c.l.b16 %v461
    %v1725 = vunpack.c.l.b16 %v462
    %v1726 = vunpack.c.l.b16 %v463
    %v1727 = vunpack.c.l.b16 %v464
    %v1728 = vunpack.c.l.b16 %v465
    %v1729 = vunpack.c.l.b16 %v466
    %v1730 = vunpack.c.l.b16 %v467
    %v1731 = vunpack.c.l.b16 %v468
    %v1732 = vunpack.c.l.b16 %v469
    %v1733 = vunpack.c.l.b16 %v470
    %v1734 = vunpack.c.l.b16 %v471
    %v1735 = vunpack.c.l.b16 %v472
    %v1736 = vunpack.c.l.b16 %v473
    %v1737 = vunpack.c.l.b16 %v474
    %v1738 = vunpack.c.l.b16 %v475
    %v1739 = vunpack.c.l.b16 %v476
    %v1740 = vunpack.c.l.b16 %v477
    %v1741 = vunpack.c.l.b16 %v478
    %v1742 = vunpack.c.l.b16 %v479
    %v1743 = vunpack.c.l.b16 %v480
    %v1744 = vunpack.c.l.b16 %v481
    %v1745 = vunpack.c.l.b16 %v482
    %v1746 = vunpack.c.l.b16 %v483
    %v1747 = vunpack.c.l.b16 %v484
    %v1748 = vunpack.c.l.b16 %v485
    %v1749 = vunpack.c.l.b16 %v486
    %v1750 = vunpack.c.l.b16 %v487
    %v1751 = vunpack.c.l.b16 %v488
    %v1752 = vunpack.c.l.b16 %v489
    %v1753 = vunpack.c.l.b16 %v490
    %v1754 = vunpack.c.l.b16 %v491
    %v1755 = vunpack.c.l.b16 %v492
    %v1756 = vunpack.c.l.b16 %v493
    %v1757 = vunpack.c.l.b16 %v494
    %v1758 = vunpack.c.l.b16 %v495
    %v1759 = vunpack.c.l.b16 %v496
    %v1760 = vunpack.c.l.b16 %v497
    %v1761 = vunpack.c.l.b16 %v498
    %v1762 = vunpack.c.l.b16 %v499
    %v1763 = vunpack.c.l.b16 %v500
    %v1764 = vunpack.c.l.b16 %v501
    %v1765 = vunpack.c.l.b16 %v502
    %v1766 = vunpack.c.l.b16 %v503
    %v1767 = vunpack.c.l.b16 %v504
    %v1768 = vunpack.c.l.b16 %v505
    %v1769 = vunpack.c.l.b16 %v506
    %v1770 = vunpack.c.l.b16 %v507
    %v1771 = vunpack.c.l.b16 %v508
    %v1772 = vunpack.c.l.b16 %v509
    %v1773 = vunpack.c.l.b16 %v510
    %v1774 = vunpack.c.l.b16 %v511
    %v1775 = vunpack.c.l.b16 %v512
    %v1776 = vunpack.c.l.b16 %v513
    %v1777 = vunpack.c.l.b16 %v514
    %v1778 = vunpack.c.l.b16 %v515
    %v1779 = vunpack.c.l.b16 %v516
    %v1780 = vunpack.c.l.b16 %v517
    %v1781 = vunpack.c.l.b16 %v518
    %v1782 = vunpack.c.l.b16 %v519
    %v1783 = vunpack.c.l.b16 %v520
    %v1784 = vunpack.c.l.b16 %v521
    %v1785 = vunpack.c.l.b16 %v522
    %v1786 = vunpack.c.l.b16 %v523
    %v1787 = vunpack.c.l.b16 %v524
    %v1788 = vunpack.c.l.b16 %v525
    %v1789 = vunpack.c.l.b16 %v526
    %v1790 = vunpack.c.l.b16 %v527
    %v1791 = vunpack.c.l.b16 %v528
    %v1792 = vunpack.c.l.b16 %v529
    %v1793 = vunpack.c.l.b16 %v530
    %v1794 = vunpack.c.l.b16 %v531
    %v1795 = vunpack.c.l.b16 %v532
    %v1796 = vunpack.c.l.b16 %v533
    %v1797 = vunpack.c.l.b16 %v534
    %v1798 = vunpack.c.l.b16 %v535
    %v1799 = vunpack.c.l.b16 %v536
    %v1800 = vunpack.c.l.b16 %v537
    %v1801 = vpack.c.b16 %v1290, %v1289
    %v1802 = vpack.c.b16 %v1292, %v1291
    %v1803 = vpack.c.b16 %v1294, %v1293
    %v1804 = vpack.c.b16 %v1296, %v1295
    %v1805 = vpack.c.b16 %v1298, %v1297
    %v1806 = vpack.c.b16 %v1300, %v1299
    %v1807 = vpack.c.b16 %v1302, %v1301
    %v1808 = vpack.c.b16 %v1304, %v1303
    %v1809 = vpack.c.b16 %v1306, %v1305
    %v1810 = vpack.c.b16 %v1308, %v1307
    %v1811 = vpack.c.b16 %v1310, %v1309
    %v1812 = vpack.c.b16 %v1312, %v1311
    %v1813 = vpack.c.b16 %v1314, %v1313
    %v1814 = vpack.c.b16 %v1316, %v1315
    %v1815 = vpack.c.b16 %v1318, %v1317
    %v1816 = vpack.c.b16 %v1320, %v1319
    %v1817 = vpack.c.b16 %v1322, %v1321
    %v1818 = vpack.c.b16 %v1324, %v1323
    %v1819 = vpack.c.b16 %v1326, %v1325
    %v1820 = vpack.c.b16 %v1328, %v1327
    %v1821 = vpack.c.b16 %v1330, %v1329
    %v1822 = vpack.c.b16 %v1332, %v1331
    %v1823 = vpack.c.b16 %v1334, %v1333
    %v1824 = vpack.c.b16 %v1336, %v1335
    %v1825 = vpack.c.b16 %v1338, %v1337
    %v1826 = vpack.c.b16 %v1340, %v1339
    %v1827 = vpack.c.b16 %v1342, %v1341
    %v1828 = vpack.c.b16 %v1344, %v1343
    %v1829 = vpack.c.b16 %v1346, %v1345
    %v1830 = vpack.c.b16 %v1348, %v1347
    %v1831 = vpack.c.b16 %v1350, %v1349
    %v1832 = vpack.c.b16 %v1352, %v1351
    %v1833 = vpack.c.b16 %v1354, %v1353
    %v1834 = vpack.c.b16 %v1356, %v1355
    %v1835 = vpack.c.b16 %v1358, %v1357
    %v1836 = vpack.c.b16 %v1360, %v1359
    %v1837 = vpack.c.b16 %v1362, %v1361
    %v1838 = vpack.c.b16 %v1364, %v1363
    %v1839 = vpack.c.b16 %v1366, %v1365
    %v1840 = vpack.c.b16 %v1368, %v1367
    %v1841 = vpack.c.b16 %v1370, %v1369
    %v1842 = vpack.c.b16 %v1372, %v1371
    %v1843 = vpack.c.b16 %v1374, %v1373
    %v1844 = vpack.c.b16 %v1376, %v1375
    %v1845 = vpack.c.b16 %v1378, %v1377
    %v1846 = vpack.c.b16 %v1380, %v1379
    %v1847 = vpack.c.b16 %v1382, %v1381
    %v1848 = vpack.c.b16 %v1384, %v1383
    %v1849 = vpack.c.b16 %v1386, %v1385
    %v1850 = vpack.c.b16 %v1388, %v1387
    %v1851 = vpack.c.b16 %v1390, %v1389
    %v1852 = vpack.c.b16 %v1392, %v1391
    %v1853 = vpack.c.b16 %v1394, %v1393
    %v1854 = vpack.c.b16 %v1396, %v1395
    %v1855 = vpack.c.b16 %v1398, %v1397
    %v1856 = vpack.c.b16 %v1400, %v1399
    %v1857 = vpack.c.b16 %v1402, %v1401
    %v1858 = vpack.c.b16 %v1404, %v1403
    %v1859 = vpack.c.b16 %v1406, %v1405
    %v1860 = vpack.c.b16 %v1408, %v1407
    %v1861 = vpack.c.b16 %v1410, %v1409
    %v1862 = vpack.c.b16 %v1412, %v1411
    %v1863 = vpack.c.b16 %v1414, %v1413
    %v1864 = vpack.c.b16 %v1416, %v1415
    %v1865 = vpack.c.b16 %v1418, %v1417
    %v1866 = vpack.c.b16 %v1420, %v1419
    %v1867 = vpack.c.b16 %v1422, %v1421
    %v1868 = vpack.c.b16 %v1424, %v1423
    %v1869 = vpack.c.b16 %v1426, %v1425
    %v1870 = vpack.c.b16 %v1428, %v1427
    %v1871 = vpack.c.b16 %v1430, %v1429
    %v1872 = vpack.c.b16 %v1432, %v1431
    %v1873 = vpack.c.b16 %v1434, %v1433
    %v1874 = vpack.c.b16 %v1436, %v1435
    %v1875 = vpack.c.b16 %v1438, %v1437
    %v1876 = vpack.c.b16 %v1440, %v1439
    %v1877 = vpack.c.b16 %v1442, %v1441
    %v1878 = vpack.c.b16 %v1444, %v1443
    %v1879 = vpack.c.b16 %v1446, %v1445
    %v1880 = vpack.c.b16 %v1448, %v1447
    %v1881 = vpack.c.b16 %v1450, %v1449
    %v1882 = vpack.c.b16 %v1452, %v1451
    %v1883 = vpack.c.b16 %v1454, %v1453
    %v1884 = vpack.c.b16 %v1456, %v1455
    %v1885 = vpack.c.b16 %v1458, %v1457
    %v1886 = vpack.c.b16 %v1460, %v1459
    %v1887 = vpack.c.b16 %v1462, %v1461
    %v1888 = vpack.c.b16 %v1464, %v1463
    %v1889 = vpack.c.b16 %v1466, %v1465
    %v1890 = vpack.c.b16 %v1468, %v1467
    %v1891 = vpack.c.b16 %v1470, %v1469
    %v1892 = vpack.c.b16 %v1472, %v1471
    %v1893 = vpack.c.b16 %v1474, %v1473
    %v1894 = vpack.c.b16 %v1476, %v1475
    %v1895 = vpack.c.b16 %v1478, %v1477
    %v1896 = vpack.c.b16 %v1480, %v1479
    %v1897 = vpack.c.b16 %v1482, %v1481
    %v1898 = vpack.c.b16 %v1484, %v1483
    %v1899 = vpack.c.b16 %v1486, %v1485
    %v1900 = vpack.c.b16 %v1488, %v1487
    %v1901 = vpack.c.b16 %v1490, %v1489
    %v1902 = vpack.c.b16 %v1492, %v1491
    %v1903 = vpack.c.b16 %v1494, %v1493
    %v1904 = vpack.c.b16 %v1496, %v1495
    %v1905 = vpack.c.b16 %v1498, %v1497
    %v1906 = vpack.c.b16 %v1500, %v1499
    %v1907 = vpack.c.b16 %v1502, %v1501
    %v1908 = vpack.c.b16 %v1504, %v1503
    %v1909 = vpack.c.b16 %v1506, %v1505
    %v1910 = vpack.c.b16 %v1508, %v1507
    %v1911 = vpack.c.b16 %v1510, %v1509
    %v1912 = vpack.c.b16 %v1512, %v1511
    %v1913 = vpack.c.b16 %v1514, %v1513
    %v1914 = vpack.c.b16 %v1516, %v1515
    %v1915 = vpack.c.b16 %v1518, %v1517
    %v1916 = vpack.c.b16 %v1520, %v1519
    %v1917 = vpack.c.b16 %v1522, %v1521
    %v1918 = vpack.c.b16 %v1524, %v1523
    %v1919 = vpack.c.b16 %v1526, %v1525
    %v1920 = vpack.c.b16 %v1528, %v1527
    %v1921 = vpack.c.b16 %v1530, %v1529
    %v1922 = vpack.c.b16 %v1532, %v1531
    %v1923 = vpack.c.b16 %v1534, %v1533
    %v1924 = vpack.c.b16 %v1536, %v1535
    %v1925 = vpack.c.b16 %v1538, %v1537
    %v1926 = vpack.c.b16 %v1540, %v1539
    %v1927 = vpack.c.b16 %v1542, %v1541
    %v1928 = vpack.c.b16 %v1544, %v1543
    %v1929 = vpack.c.b16 %v1546, %v1545
    %v1930 = vpack.c.b16 %v1548, %v1547
    %v1931 = vpack.c.b16 %v1550, %v1549
    %v1932 = vpack.c.b16 %v1552, %v1551
    %v1933 = vpack.c.b16 %v1554, %v1553
    %v1934 = vpack.c.b16 %v1556, %v1555
    %v1935 = vpack.c.b16 %v1558, %v1557
    %v1936 = vpack.c.b16 %v1560, %v1559
    %v1937 = vpack.c.b16 %v1562, %v1561
    %v1938 = vpack.c.b16 %v1564, %v1563
    %v1939 = vpack.c.b16 %v1566, %v1565
    %v1940 = vpack.c.b16 %v1568, %v1567
    %v1941 = vpack.c.b16 %v1570, %v1569
    %v1942 = vpack.c.b16 %v1572, %v1571
    %v1943 = vpack.c.b16 %v1574, %v1573
    %v1944 = vpack.c.b16 %v1576, %v1575
    %v1945 = vpack.c.b16 %v1578, %v1577
    %v1946 = vpack.c.b16 %v1580, %v1579
    %v1947 = vpack.c.b16 %v1582, %v1581
    %v1948 = vpack.c.b16 %v1584, %v1583
    %v1949 = vpack.c.b16 %v1586, %v1585
    %v1950 = vpack.c.b16 %v1588, %v1587
    %v1951 = vpack.c.b16 %v1590, %v1589
    %v1952 = vpack.c.b16 %v1592, %v1591
    %v1953 = vpack.c.b16 %v1594, %v1593
    %v1954 = vpack.c.b16 %v1596, %v1595
    %v1955 = vpack.c.b16 %v1598, %v1597
    %v1956 = vpack.c.b16 %v1600, %v1599
    %v1957 = vpack.c.b16 %v1602, %v1601
    %v1958 = vpack.c.b16 %v1604, %v1603
    %v1959 = vpack.c.b16 %v1606, %v1605
    %v1960 = vpack.c.b16 %v1608, %v1607
    %v1961 = vpack.c.b16 %v1610, %v1609
    %v1962 = vpack.c.b16 %v1612, %v1611
    %v1963 = vpack.c.b16 %v1614, %v1613
    %v1964 = vpack.c.b16 %v1616, %v1615
    %v1965 = vpack.c.b16 %v1618, %v1617
    %v1966 = vpack.c.b16 %v1620, %v1619
    %v1967 = vpack.c.b16 %v1622, %v1621
    %v1968 = vpack.c.b16 %v1624, %v1623
    %v1969 = vpack.c.b16 %v1626, %v1625
    %v1970 = vpack.c.b16 %v1628, %v1627
    %v1971 = vpack.c.b16 %v1630, %v1629
    %v1972 = vpack.c.b16 %v1632, %v1631
    %v1973 = vpack.c.b16 %v1634, %v1633
    %v1974 = vpack.c.b16 %v1636, %v1635
    %v1975 = vpack.c.b16 %v1638, %v1637
    %v1976 = vpack.c.b16 %v1640, %v1639
    %v1977 = vpack.c.b16 %v1642, %v1641
    %v1978 = vpack.c.b16 %v1644, %v1643
    %v1979 = vpack.c.b16 %v1646, %v1645
    %v1980 = vpack.c.b16 %v1648, %v1647
    %v1981 = vpack.c.b16 %v1650, %v1649
    %v1982 = vpack.c.b16 %v1652, %v1651
    %v1983 = vpack.c.b16 %v1654, %v1653
    %v1984 = vpack.c.b16 %v1656, %v1655
    %v1985 = vpack.c.b16 %v1658, %v1657
    %v1986 = vpack.c.b16 %v1660, %v1659
    %v1987 = vpack.c.b16 %v1662, %v1661
    %v1988 = vpack.c.b16 %v1664, %v1663
    %v1989 = vpack.c.b16 %v1666, %v1665
    %v1990 = vpack.c.b16 %v1668, %v1667
    %v1991 = vpack.c.b16 %v1670, %v1669
    %v1992 = vpack.c.b16 %v1672, %v1671
    %v1993 = vpack.c.b16 %v1674, %v1673
    %v1994 = vpack.c.b16 %v1676, %v1675
    %v1995 = vpack.c.b16 %v1678, %v1677
    %v1996 = vpack.c.b16 %v1680, %v1679
    %v1997 = vpack.c.b16 %v1682, %v1681
    %v1998 = vpack.c.b16 %v1684, %v1683
    %v1999 = vpack.c.b16 %v1686, %v1685
    %v2000 = vpack.c.b16 %v1688, %v1687
    %v2001 = vpack.c.b16 %v1690, %v1689
    %v2002 = vpack.c.b16 %v1692, %v1691
    %v2003 = vpack.c.b16 %v1694, %v1693
    %v2004 = vpack.c.b16 %v1696, %v1695
    %v2005 = vpack.c.b16 %v1698, %v1697
    %v2006 = vpack.c.b16 %v1700, %v1699
    %v2007 = vpack.c.b16 %v1702, %v1701
    %v2008 = vpack.c.b16 %v1704, %v1703
    %v2009 = vpack.c.b16 %v1706, %v1705
    %v2010 = vpack.c.b16 %v1708, %v1707
    %v2011 = vpack.c.b16 %v1710, %v1709
    %v2012 = vpack.c.b16 %v1712, %v1711
    %v2013 = vpack.c.b16 %v1714, %v1713
    %v2014 = vpack.c.b16 %v1716, %v1715
    %v2015 = vpack.c.b16 %v1718, %v1717
    %v2016 = vpack.c.b16 %v1720, %v1719
    %v2017 = vpack.c.b16 %v1722, %v1721
    %v2018 = vpack.c.b16 %v1724, %v1723
    %v2019 = vpack.c.b16 %v1726, %v1725
    %v2020 = vpack.c.b16 %v1728, %v1727
    %v2021 = vpack.c.b16 %v1730, %v1729
    %v2022 = vpack.c.b16 %v1732, %v1731
    %v2023 = vpack.c.b16 %v1734, %v1733
    %v2024 = vpack.c.b16 %v1736, %v1735
    %v2025 = vpack.c.b16 %v1738, %v1737
    %v2026 = vpack.c.b16 %v1740, %v1739
    %v2027 = vpack.c.b16 %v1742, %v1741
    %v2028 = vpack.c.b16 %v1744, %v1743
    %v2029 = vpack.c.b16 %v1746, %v1745
    %v2030 = vpack.c.b16 %v1748, %v1747
    %v2031 = vpack.c.b16 %v1750, %v1749
    %v2032 = vpack.c.b16 %v1752, %v1751
    %v2033 = vpack.c.b16 %v1754, %v1753
    %v2034 = vpack.c.b16 %v1756, %v1755
    %v2035 = vpack.c.b16 %v1758, %v1757
    %v2036 = vpack.c.b16 %v1760, %v1759
    %v2037 = vpack.c.b16 %v1762, %v1761
    %v2038 = vpack.c.b16 %v1764, %v1763
    %v2039 = vpack.c.b16 %v1766, %v1765
    %v2040 = vpack.c.b16 %v1768, %v1767
    %v2041 = vpack.c.b16 %v1770, %v1769
    %v2042 = vpack.c.b16 %v1772, %v1771
    %v2043 = vpack.c.b16 %v1774, %v1773
    %v2044 = vpack.c.b16 %v1776, %v1775
    %v2045 = vpack.c.b16 %v1778, %v1777
    %v2046 = vpack.c.b16 %v1780, %v1779
    %v2047 = vpack.c.b16 %v1782, %v1781
    %v2048 = vpack.c.b16 %v1784, %v1783
    %v2049 = vpack.c.b16 %v1786, %v1785
    %v2050 = vpack.c.b16 %v1788, %v1787
    %v2051 = vpack.c.b16 %v1790, %v1789
    %v2052 = vpack.c.b16 %v1792, %v1791
    %v2053 = vpack.c.b16 %v1794, %v1793
    %v2054 = vpack.c.b16 %v1796, %v1795
    %v2055 = vpack.c.b16 %v1798, %v1797
    %v2056 = vpack.c.b16 %v1800, %v1799
    %2313 = vmatprep.subr.bf16.mxu0 0
    %2314 = vmatpush1.bf16.msra.mxu0 %v1801
    %2315 = vmatprep.subr.bf16.mxu0 0
    %2316 = vmatpush1.bf16.msra.mxu0 %v1802
    %2317 = vmatprep.subr.bf16.mxu0 0
    %2318 = vmatpush1.bf16.msra.mxu0 %v1803
    %2319 = vmatprep.subr.bf16.mxu0 0
    %2320 = vmatpush1.bf16.msra.mxu0 %v1804
    %2321 = vmatprep.subr.bf16.mxu0 0
    %2322 = vmatpush1.bf16.msra.mxu0 %v1805
    %2323 = vmatprep.subr.bf16.mxu0 0
    %2324 = vmatpush1.bf16.msra.mxu0 %v1806
    %2325 = vmatprep.subr.bf16.mxu0 0
    %2326 = vmatpush1.bf16.msra.mxu0 %v1807
    %2327 = vmatprep.subr.bf16.mxu0 0
    %2328 = vmatpush1.bf16.msra.mxu0 %v1808
    %2329 = vmatprep.subr.bf16.mxu0 0
    %2330 = vmatpush1.bf16.msra.mxu0 %v1809
    %2331 = vmatprep.subr.bf16.mxu0 0
    %2332 = vmatpush1.bf16.msra.mxu0 %v1810
    %2333 = vmatprep.subr.bf16.mxu0 0
    %2334 = vmatpush1.bf16.msra.mxu0 %v1811
    %2335 = vmatprep.subr.bf16.mxu0 0
    %2336 = vmatpush1.bf16.msra.mxu0 %v1812
    %2337 = vmatprep.subr.bf16.mxu0 0
    %2338 = vmatpush1.bf16.msra.mxu0 %v1813
    %2339 = vmatprep.subr.bf16.mxu0 0
    %2340 = vmatpush1.bf16.msra.mxu0 %v1814
    %2341 = vmatprep.subr.bf16.mxu0 0
    %2342 = vmatpush1.bf16.msra.mxu0 %v1815
    %2343 = vmatprep.subr.bf16.mxu0 0
    %2344 = vmatpush1.bf16.msra.mxu0 %v1816
    %2345 = vmatprep.mubr.bf16.mxu0 %v586
    %2346 = vmatmul.mubr.bf16.gmra.mrb[0].mxu0 %v572
    %v2347 = vpop.f32.mrb[0].mxu0
    %v2348 = vadd.f32 %v543, %v2347
    %v2349 = vpop.f32.mrb[0].mxu0
    %v2350 = vpop.f32.mrb[0].mxu0
    %v2351 = vpop.f32.mrb[0].mxu0
    %2352 = vdwg.mxu0
    %2353 = vmatprep.subr.bf16.mxu0 0
    %2354 = vmatpush1.bf16.msra.mxu0 %v1817
    %2355 = vmatprep.subr.bf16.mxu0 0
    %2356 = vmatpush1.bf16.msra.mxu0 %v1818
    %2357 = vmatprep.subr.bf16.mxu0 0
    %2358 = vmatpush1.bf16.msra.mxu0 %v1819
    %2359 = vmatprep.subr.bf16.mxu0 0
    %2360 = vmatpush1.bf16.msra.mxu0 %v1820
    %2361 = vmatprep.subr.bf16.mxu0 0
    %2362 = vmatpush1.bf16.msra.mxu0 %v1821
    %2363 = vmatprep.subr.bf16.mxu0 0
    %2364 = vmatpush1.bf16.msra.mxu0 %v1822
    %2365 = vmatprep.subr.bf16.mxu0 0
    %2366 = vmatpush1.bf16.msra.mxu0 %v1823
    %2367 = vmatprep.subr.bf16.mxu0 0
    %2368 = vmatpush1.bf16.msra.mxu0 %v1824
    %2369 = vmatprep.subr.bf16.mxu0 0
    %2370 = vmatpush1.bf16.msra.mxu0 %v1825
    %2371 = vmatprep.subr.bf16.mxu0 0
    %2372 = vmatpush1.bf16.msra.mxu0 %v1826
    %2373 = vmatprep.subr.bf16.mxu0 0
    %2374 = vmatpush1.bf16.msra.mxu0 %v1827
    %2375 = vmatprep.subr.bf16.mxu0 0
    %2376 = vmatpush1.bf16.msra.mxu0 %v1828
    %2377 = vmatprep.subr.bf16.mxu0 0
    %2378 = vmatpush1.bf16.msra.mxu0 %v1829
    %2379 = vmatprep.subr.bf16.mxu0 0
    %2380 = vmatpush1.bf16.msra.mxu0 %v1830
    %2381 = vmatprep.subr.bf16.mxu0 0
    %2382 = vmatpush1.bf16.msra.mxu0 %v1831
    %2383 = vmatprep.subr.bf16.mxu0 0
    %2384 = vmatpush1.bf16.msra.mxu0 %v1832
    %2385 = vmatprep.mubr.bf16.mxu0 %v596
    %2386 = vmatmul.mubr.bf16.gmra.mrb[0].mxu0 %v594
    %v2387 = vpop.f32.mrb[0].mxu0
    %v2388 = vadd.f32 %v2348, %v2387
    %v2389 = vpop.f32.mrb[0].mxu0
    %v2390 = vpop.f32.mrb[0].mxu0
    %v2391 = vpop.f32.mrb[0].mxu0
    %2392 = vdwg.mxu0
    %2393 = vmatprep.subr.bf16.mxu0 0
    %2394 = vmatpush1.bf16.msra.mxu0 %v1833
    %2395 = vmatprep.subr.bf16.mxu0 0
    %2396 = vmatpush1.bf16.msra.mxu0 %v1834
    %2397 = vmatprep.subr.bf16.mxu0 0
    %2398 = vmatpush1.bf16.msra.mxu0 %v1835
    %2399 = vmatprep.subr.bf16.mxu0 0
    %2400 = vmatpush1.bf16.msra.mxu0 %v1836
    %2401 = vmatprep.subr.bf16.mxu0 0
    %2402 = vmatpush1.bf16.msra.mxu0 %v1837
    %2403 = vmatprep.subr.bf16.mxu0 0
    %2404 = vmatpush1.bf16.msra.mxu0 %v1838
    %2405 = vmatprep.subr.bf16.mxu0 0
    %2406 = vmatpush1.bf16.msra.mxu0 %v1839
    %2407 = vmatprep.subr.bf16.mxu0 0
    %2408 = vmatpush1.bf16.msra.mxu0 %v1840
    %2409 = vmatprep.subr.bf16.mxu0 0
    %2410 = vmatpush1.bf16.msra.mxu0 %v1841
    %2411 = vmatprep.subr.bf16.mxu0 0
    %2412 = vmatpush1.bf16.msra.mxu0 %v1842
    %2413 = vmatprep.subr.bf16.mxu0 0
    %2414 = vmatpush1.bf16.msra.mxu0 %v1843
    %2415 = vmatprep.subr.bf16.mxu0 0
    %2416 = vmatpush1.bf16.msra.mxu0 %v1844
    %2417 = vmatprep.subr.bf16.mxu0 0
    %2418 = vmatpush1.bf16.msra.mxu0 %v1845
    %2419 = vmatprep.subr.bf16.mxu0 0
    %2420 = vmatpush1.bf16.msra.mxu0 %v1846
    %2421 = vmatprep.subr.bf16.mxu0 0
    %2422 = vmatpush1.bf16.msra.mxu0 %v1847
    %2423 = vmatprep.subr.bf16.mxu0 0
    %2424 = vmatpush1.bf16.msra.mxu0 %v1848
    %2425 = vmatprep.mubr.bf16.mxu0 %v593
    %2426 = vmatmul.mubr.bf16.gmra.mrb[0].mxu0 %v579
    %v2427 = vpop.f32.mrb[0].mxu0
    %v2428 = vadd.f32 %v2388, %v2427
    %v2429 = vpop.f32.mrb[0].mxu0
    %v2430 = vpop.f32.mrb[0].mxu0
    %v2431 = vpop.f32.mrb[0].mxu0
    %2432 = vdwg.mxu0
    %2433 = vmatprep.subr.bf16.mxu0 0
    %2434 = vmatpush1.bf16.msra.mxu0 %v1849
    %2435 = vmatprep.subr.bf16.mxu0 0
    %2436 = vmatpush1.bf16.msra.mxu0 %v1850
    %2437 = vmatprep.subr.bf16.mxu0 0
    %2438 = vmatpush1.bf16.msra.mxu0 %v1851
    %2439 = vmatprep.subr.bf16.mxu0 0
    %2440 = vmatpush1.bf16.msra.mxu0 %v1852
    %2441 = vmatprep.subr.bf16.mxu0 0
    %2442 = vmatpush1.bf16.msra.mxu0 %v1853
    %2443 = vmatprep.subr.bf16.mxu0 0
    %2444 = vmatpush1.bf16.msra.mxu0 %v1854
    %2445 = vmatprep.subr.bf16.mxu0 0
    %2446 = vmatpush1.bf16.msra.mxu0 %v1855
    %2447 = vmatprep.subr.bf16.mxu0 0
    %2448 = vmatpush1.bf16.msra.mxu0 %v1856
    %2449 = vmatprep.subr.bf16.mxu0 0
    %2450 = vmatpush1.bf16.msra.mxu0 %v1857
    %2451 = vmatprep.subr.bf16.mxu0 0
    %2452 = vmatpush1.bf16.msra.mxu0 %v1858
    %2453 = vmatprep.subr.bf16.mxu0 0
    %2454 = vmatpush1.bf16.msra.mxu0 %v1859
    %2455 = vmatprep.subr.bf16.mxu0 0
    %2456 = vmatpush1.bf16.msra.mxu0 %v1860
    %2457 = vmatprep.subr.bf16.mxu0 0
    %2458 = vmatpush1.bf16.msra.mxu0 %v1861
    %2459 = vmatprep.subr.bf16.mxu0 0
    %2460 = vmatpush1.bf16.msra.mxu0 %v1862
    %2461 = vmatprep.subr.bf16.mxu0 0
    %2462 = vmatpush1.bf16.msra.mxu0 %v1863
    %2463 = vmatprep.subr.bf16.mxu0 0
    %2464 = vmatpush1.bf16.msra.mxu0 %v1864
    %2465 = vmatprep.mubr.bf16.mxu0 %v597
    %2466 = vmatmul.mubr.bf16.gmra.mrb[0].mxu0 %v595
    %v2467 = vpop.f32.mrb[0].mxu0
    %v2468 = vadd.f32 %v2428, %v2467
    %v2469 = vpop.f32.mrb[0].mxu0
    %v2470 = vpop.f32.mrb[0].mxu0
    %v2471 = vpop.f32.mrb[0].mxu0
    %2472 = vdwg.mxu0
    %2473 = vmatprep.subr.bf16.mxu0 0
    %2474 = vmatpush1.bf16.msra.mxu0 %v1865
    %2475 = vmatprep.subr.bf16.mxu0 0
    %2476 = vmatpush1.bf16.msra.mxu0 %v1866
    %2477 = vmatprep.subr.bf16.mxu0 0
    %2478 = vmatpush1.bf16.msra.mxu0 %v1867
    %2479 = vmatprep.subr.bf16.mxu0 0
    %2480 = vmatpush1.bf16.msra.mxu0 %v1868
    %2481 = vmatprep.subr.bf16.mxu0 0
    %2482 = vmatpush1.bf16.msra.mxu0 %v1869
    %2483 = vmatprep.subr.bf16.mxu0 0
    %2484 = vmatpush1.bf16.msra.mxu0 %v1870
    %2485 = vmatprep.subr.bf16.mxu0 0
    %2486 = vmatpush1.bf16.msra.mxu0 %v1871
    %2487 = vmatprep.subr.bf16.mxu0 0
    %2488 = vmatpush1.bf16.msra.mxu0 %v1872
    %2489 = vmatprep.subr.bf16.mxu0 0
    %2490 = vmatpush1.bf16.msra.mxu0 %v1873
    %2491 = vmatprep.subr.bf16.mxu0 0
    %2492 = vmatpush1.bf16.msra.mxu0 %v1874
    %2493 = vmatprep.subr.bf16.mxu0 0
    %2494 = vmatpush1.bf16.msra.mxu0 %v1875
    %2495 = vmatprep.subr.bf16.mxu0 0
    %2496 = vmatpush1.bf16.msra.mxu0 %v1876
    %2497 = vmatprep.subr.bf16.mxu0 0
    %2498 = vmatpush1.bf16.msra.mxu0 %v1877
    %2499 = vmatprep.subr.bf16.mxu0 0
    %2500 = vmatpush1.bf16.msra.mxu0 %v1878
    %2501 = vmatprep.subr.bf16.mxu0 0
    %2502 = vmatpush1.bf16.msra.mxu0 %v1879
    %2503 = vmatprep.subr.bf16.mxu0 0
    %2504 = vmatpush1.bf16.msra.mxu0 %v1880
    %2505 = vmatprep.mubr.bf16.mxu0 %v635
    %2506 = vmatmul.mubr.bf16.gmra.mrb[0].mxu0 %v621
    %v2507 = vpop.f32.mrb[0].mxu0
    %v2508 = vadd.f32 %v2468, %v2507
    %v2509 = vpop.f32.mrb[0].mxu0
    %v2510 = vpop.f32.mrb[0].mxu0
    %v2511 = vpop.f32.mrb[0].mxu0
    %2512 = vdwg.mxu0
    %2513 = vmatprep.subr.bf16.mxu0 0
    %2514 = vmatpush1.bf16.msra.mxu0 %v1881
    %2515 = vmatprep.subr.bf16.mxu0 0
    %2516 = vmatpush1.bf16.msra.mxu0 %v1882
    %2517 = vmatprep.subr.bf16.mxu0 0
    %2518 = vmatpush1.bf16.msra.mxu0 %v1883
    %2519 = vmatprep.subr.bf16.mxu0 0
    %2520 = vmatpush1.bf16.msra.mxu0 %v1884
    %2521 = vmatprep.subr.bf16.mxu0 0
    %2522 = vmatpush1.bf16.msra.mxu0 %v1885
    %2523 = vmatprep.subr.bf16.mxu0 0
    %2524 = vmatpush1.bf16.msra.mxu0 %v1886
    %2525 = vmatprep.subr.bf16.mxu0 0
    %2526 = vmatpush1.bf16.msra.mxu0 %v1887
    %2527 = vmatprep.subr.bf16.mxu0 0
    %2528 = vmatpush1.bf16.msra.mxu0 %v1888
    %2529 = vmatprep.subr.bf16.mxu0 0
    %2530 = vmatpush1.bf16.msra.mxu0 %v1889
    %2531 = vmatprep.subr.bf16.mxu0 0
    %2532 = vmatpush1.bf16.msra.mxu0 %v1890
    %2533 = vmatprep.subr.bf16.mxu0 0
    %2534 = vmatpush1.bf16.msra.mxu0 %v1891
    %2535 = vmatprep.subr.bf16.mxu0 0
    %2536 = vmatpush1.bf16.msra.mxu0 %v1892
    %2537 = vmatprep.subr.bf16.mxu0 0
    %2538 = vmatpush1.bf16.msra.mxu0 %v1893
    %2539 = vmatprep.subr.bf16.mxu0 0
    %2540 = vmatpush1.bf16.msra.mxu0 %v1894
    %2541 = vmatprep.subr.bf16.mxu0 0
    %2542 = vmatpush1.bf16.msra.mxu0 %v1895
    %2543 = vmatprep.subr.bf16.mxu0 0
    %2544 = vmatpush1.bf16.msra.mxu0 %v1896
    %2545 = vmatprep.mubr.bf16.mxu0 %v645
    %2546 = vmatmul.mubr.bf16.gmra.mrb[0].mxu0 %v643
    %v2547 = vpop.f32.mrb[0].mxu0
    %v2548 = vadd.f32 %v2508, %v2547
    %v2549 = vpop.f32.mrb[0].mxu0
    %v2550 = vpop.f32.mrb[0].mxu0
    %v2551 = vpop.f32.mrb[0].mxu0
    %2552 = vdwg.mxu0
    %2553 = vmatprep.subr.bf16.mxu0 0
    %2554 = vmatpush1.bf16.msra.mxu0 %v1897
    %2555 = vmatprep.subr.bf16.mxu0 0
    %2556 = vmatpush1.bf16.msra.mxu0 %v1898
    %2557 = vmatprep.subr.bf16.mxu0 0
    %2558 = vmatpush1.bf16.msra.mxu0 %v1899
    %2559 = vmatprep.subr.bf16.mxu0 0
    %2560 = vmatpush1.bf16.msra.mxu0 %v1900
    %2561 = vmatprep.subr.bf16.mxu0 0
    %2562 = vmatpush1.bf16.msra.mxu0 %v1901
    %2563 = vmatprep.subr.bf16.mxu0 0
    %2564 = vmatpush1.bf16.msra.mxu0 %v1902
    %2565 = vmatprep.subr.bf16.mxu0 0
    %2566 = vmatpush1.bf16.msra.mxu0 %v1903
    %2567 = vmatprep.subr.bf16.mxu0 0
    %2568 = vmatpush1.bf16.msra.mxu0 %v1904
    %2569 = vmatprep.subr.bf16.mxu0 0
    %2570 = vmatpush1.bf16.msra.mxu0 %v1905
    %2571 = vmatprep.subr.bf16.mxu0 0
    %2572 = vmatpush1.bf16.msra.mxu0 %v1906
    %2573 = vmatprep.subr.bf16.mxu0 0
    %2574 = vmatpush1.bf16.msra.mxu0 %v1907
    %2575 = vmatprep.subr.bf16.mxu0 0
    %2576 = vmatpush1.bf16.msra.mxu0 %v1908
    %2577 = vmatprep.subr.bf16.mxu0 0
    %2578 = vmatpush1.bf16.msra.mxu0 %v1909
    %2579 = vmatprep.subr.bf16.mxu0 0
    %2580 = vmatpush1.bf16.msra.mxu0 %v1910
    %2581 = vmatprep.subr.bf16.mxu0 0
    %2582 = vmatpush1.bf16.msra.mxu0 %v1911
    %2583 = vmatprep.subr.bf16.mxu0 0
    %2584 = vmatpush1.bf16.msra.mxu0 %v1912
    %2585 = vmatprep.mubr.bf16.mxu0 %v642
    %2586 = vmatmul.mubr.bf16.gmra.mrb[0].mxu0 %v628
    %v2587 = vpop.f32.mrb[0].mxu0
    %v2588 = vadd.f32 %v2548, %v2587
    %v2589 = vpop.f32.mrb[0].mxu0
    %v2590 = vpop.f32.mrb[0].mxu0
    %v2591 = vpop.f32.mrb[0].mxu0
    %2592 = vdwg.mxu0
    %2593 = vmatprep.subr.bf16.mxu0 0
    %2594 = vmatpush1.bf16.msra.mxu0 %v1913
    %2595 = vmatprep.subr.bf16.mxu0 0
    %2596 = vmatpush1.bf16.msra.mxu0 %v1914
    %2597 = vmatprep.subr.bf16.mxu0 0
    %2598 = vmatpush1.bf16.msra.mxu0 %v1915
    %2599 = vmatprep.subr.bf16.mxu0 0
    %2600 = vmatpush1.bf16.msra.mxu0 %v1916
    %2601 = vmatprep.subr.bf16.mxu0 0
    %2602 = vmatpush1.bf16.msra.mxu0 %v1917
    %2603 = vmatprep.subr.bf16.mxu0 0
    %2604 = vmatpush1.bf16.msra.mxu0 %v1918
    %2605 = vmatprep.subr.bf16.mxu0 0
    %2606 = vmatpush1.bf16.msra.mxu0 %v1919
    %2607 = vmatprep.subr.bf16.mxu0 0
    %2608 = vmatpush1.bf16.msra.mxu0 %v1920
    %2609 = vmatprep.subr.bf16.mxu0 0
    %2610 = vmatpush1.bf16.msra.mxu0 %v1921
    %2611 = vmatprep.subr.bf16.mxu0 0
    %2612 = vmatpush1.bf16.msra.mxu0 %v1922
    %2613 = vmatprep.subr.bf16.mxu0 0
    %2614 = vmatpush1.bf16.msra.mxu0 %v1923
    %2615 = vmatprep.subr.bf16.mxu0 0
    %2616 = vmatpush1.bf16.msra.mxu0 %v1924
    %2617 = vmatprep.subr.bf16.mxu0 0
    %2618 = vmatpush1.bf16.msra.mxu0 %v1925
    %2619 = vmatprep.subr.bf16.mxu0 0
    %2620 = vmatpush1.bf16.msra.mxu0 %v1926
    %2621 = vmatprep.subr.bf16.mxu0 0
    %2622 = vmatpush1.bf16.msra.mxu0 %v1927
    %2623 = vmatprep.subr.bf16.mxu0 0
    %2624 = vmatpush1.bf16.msra.mxu0 %v1928
    %2625 = vmatprep.mubr.bf16.mxu0 %v646
    %2626 = vmatmul.mubr.bf16.gmra.mrb[0].mxu0 %v644
    %v2627 = vpop.f32.mrb[0].mxu0
    %v2628 = vadd.f32 %v2588, %v2627
    %v2629 = vpop.f32.mrb[0].mxu0
    %v2630 = vpop.f32.mrb[0].mxu0
    %v2631 = vpop.f32.mrb[0].mxu0
    %2632 = vdwg.mxu0
    %2633 = vmatprep.subr.bf16.mxu0 0
    %2634 = vmatpush1.bf16.msra.mxu0 %v1929
    %2635 = vmatprep.subr.bf16.mxu0 0
    %2636 = vmatpush1.bf16.msra.mxu0 %v1930
    %2637 = vmatprep.subr.bf16.mxu0 0
    %2638 = vmatpush1.bf16.msra.mxu0 %v1931
    %2639 = vmatprep.subr.bf16.mxu0 0
    %2640 = vmatpush1.bf16.msra.mxu0 %v1932
    %2641 = vmatprep.subr.bf16.mxu0 0
    %2642 = vmatpush1.bf16.msra.mxu0 %v1933
    %2643 = vmatprep.subr.bf16.mxu0 0
    %2644 = vmatpush1.bf16.msra.mxu0 %v1934
    %2645 = vmatprep.subr.bf16.mxu0 0
    %2646 = vmatpush1.bf16.msra.mxu0 %v1935
    %2647 = vmatprep.subr.bf16.mxu0 0
    %2648 = vmatpush1.bf16.msra.mxu0 %v1936
    %2649 = vmatprep.subr.bf16.mxu0 0
    %2650 = vmatpush1.bf16.msra.mxu0 %v1937
    %2651 = vmatprep.subr.bf16.mxu0 0
    %2652 = vmatpush1.bf16.msra.mxu0 %v1938
    %2653 = vmatprep.subr.bf16.mxu0 0
    %2654 = vmatpush1.bf16.msra.mxu0 %v1939
    %2655 = vmatprep.subr.bf16.mxu0 0
    %2656 = vmatpush1.bf16.msra.mxu0 %v1940
    %2657 = vmatprep.subr.bf16.mxu0 0
    %2658 = vmatpush1.bf16.msra.mxu0 %v1941
    %2659 = vmatprep.subr.bf16.mxu0 0
    %2660 = vmatpush1.bf16.msra.mxu0 %v1942
    %2661 = vmatprep.subr.bf16.mxu0 0
    %2662 = vmatpush1.bf16.msra.mxu0 %v1943
    %2663 = vmatprep.subr.bf16.mxu0 0
    %2664 = vmatpush1.bf16.msra.mxu0 %v1944
    %2665 = vmatprep.mubr.bf16.mxu0 %v684
    %2666 = vmatmul.mubr.bf16.gmra.mrb[0].mxu0 %v670
    %v2667 = vpop.f32.mrb[0].mxu0
    %v2668 = vadd.f32 %v2628, %v2667
    %v2669 = vpop.f32.mrb[0].mxu0
    %v2670 = vpop.f32.mrb[0].mxu0
    %v2671 = vpop.f32.mrb[0].mxu0
    %2672 = vdwg.mxu0
    %2673 = vmatprep.subr.bf16.mxu0 0
    %2674 = vmatpush1.bf16.msra.mxu0 %v1945
    %2675 = vmatprep.subr.bf16.mxu0 0
    %2676 = vmatpush1.bf16.msra.mxu0 %v1946
    %2677 = vmatprep.subr.bf16.mxu0 0
    %2678 = vmatpush1.bf16.msra.mxu0 %v1947
    %2679 = vmatprep.subr.bf16.mxu0 0
    %2680 = vmatpush1.bf16.msra.mxu0 %v1948
    %2681 = vmatprep.subr.bf16.mxu0 0
    %2682 = vmatpush1.bf16.msra.mxu0 %v1949
    %2683 = vmatprep.subr.bf16.mxu0 0
    %2684 = vmatpush1.bf16.msra.mxu0 %v1950
    %2685 = vmatprep.subr.bf16.mxu0 0
    %2686 = vmatpush1.bf16.msra.mxu0 %v1951
    %2687 = vmatprep.subr.bf16.mxu0 0
    %2688 = vmatpush1.bf16.msra.mxu0 %v1952
    %2689 = vmatprep.subr.bf16.mxu0 0
    %2690 = vmatpush1.bf16.msra.mxu0 %v1953
    %2691 = vmatprep.subr.bf16.mxu0 0
    %2692 = vmatpush1.bf16.msra.mxu0 %v1954
    %2693 = vmatprep.subr.bf16.mxu0 0
    %2694 = vmatpush1.bf16.msra.mxu0 %v1955
    %2695 = vmatprep.subr.bf16.mxu0 0
    %2696 = vmatpush1.bf16.msra.mxu0 %v1956
    %2697 = vmatprep.subr.bf16.mxu0 0
    %2698 = vmatpush1.bf16.msra.mxu0 %v1957
    %2699 = vmatprep.subr.bf16.mxu0 0
    %2700 = vmatpush1.bf16.msra.mxu0 %v1958
    %2701 = vmatprep.subr.bf16.mxu0 0
    %2702 = vmatpush1.bf16.msra.mxu0 %v1959
    %2703 = vmatprep.subr.bf16.mxu0 0
    %2704 = vmatpush1.bf16.msra.mxu0 %v1960
    %2705 = vmatprep.mubr.bf16.mxu0 %v694
    %2706 = vmatmul.mubr.bf16.gmra.mrb[0].mxu0 %v692
    %v2707 = vpop.f32.mrb[0].mxu0
    %v2708 = vadd.f32 %v2668, %v2707
    %v2709 = vpop.f32.mrb[0].mxu0
    %v2710 = vpop.f32.mrb[0].mxu0
    %v2711 = vpop.f32.mrb[0].mxu0
    %2712 = vdwg.mxu0
    %2713 = vmatprep.subr.bf16.mxu0 0
    %2714 = vmatpush1.bf16.msra.mxu0 %v1961
    %2715 = vmatprep.subr.bf16.mxu0 0
    %2716 = vmatpush1.bf16.msra.mxu0 %v1962
    %2717 = vmatprep.subr.bf16.mxu0 0
    %2718 = vmatpush1.bf16.msra.mxu0 %v1963
    %2719 = vmatprep.subr.bf16.mxu0 0
    %2720 = vmatpush1.bf16.msra.mxu0 %v1964
    %2721 = vmatprep.subr.bf16.mxu0 0
    %2722 = vmatpush1.bf16.msra.mxu0 %v1965
    %2723 = vmatprep.subr.bf16.mxu0 0
    %2724 = vmatpush1.bf16.msra.mxu0 %v1966
    %2725 = vmatprep.subr.bf16.mxu0 0
    %2726 = vmatpush1.bf16.msra.mxu0 %v1967
    %2727 = vmatprep.subr.bf16.mxu0 0
    %2728 = vmatpush1.bf16.msra.mxu0 %v1968
    %2729 = vmatprep.subr.bf16.mxu0 0
    %2730 = vmatpush1.bf16.msra.mxu0 %v1969
    %2731 = vmatprep.subr.bf16.mxu0 0
    %2732 = vmatpush1.bf16.msra.mxu0 %v1970
    %2733 = vmatprep.subr.bf16.mxu0 0
    %2734 = vmatpush1.bf16.msra.mxu0 %v1971
    %2735 = vmatprep.subr.bf16.mxu0 0
    %2736 = vmatpush1.bf16.msra.mxu0 %v1972
    %2737 = vmatprep.subr.bf16.mxu0 0
    %2738 = vmatpush1.bf16.msra.mxu0 %v1973
    %2739 = vmatprep.subr.bf16.mxu0 0
    %2740 = vmatpush1.bf16.msra.mxu0 %v1974
    %2741 = vmatprep.subr.bf16.mxu0 0
    %2742 = vmatpush1.bf16.msra.mxu0 %v1975
    %2743 = vmatprep.subr.bf16.mxu0 0
    %2744 = vmatpush1.bf16.msra.mxu0 %v1976
    %2745 = vmatprep.mubr.bf16.mxu0 %v691
    %2746 = vmatmul.mubr.bf16.gmra.mrb[0].mxu0 %v677
    %v2747 = vpop.f32.mrb[0].mxu0
    %v2748 = vadd.f32 %v2708, %v2747
    %v2749 = vpop.f32.mrb[0].mxu0
    %v2750 = vpop.f32.mrb[0].mxu0
    %v2751 = vpop.f32.mrb[0].mxu0
    %2752 = vdwg.mxu0
    %2753 = vmatprep.subr.bf16.mxu0 0
    %2754 = vmatpush1.bf16.msra.mxu0 %v1977
    %2755 = vmatprep.subr.bf16.mxu0 0
    %2756 = vmatpush1.bf16.msra.mxu0 %v1978
    %2757 = vmatprep.subr.bf16.mxu0 0
    %2758 = vmatpush1.bf16.msra.mxu0 %v1979
    %2759 = vmatprep.subr.bf16.mxu0 0
    %2760 = vmatpush1.bf16.msra.mxu0 %v1980
    %2761 = vmatprep.subr.bf16.mxu0 0
    %2762 = vmatpush1.bf16.msra.mxu0 %v1981
    %2763 = vmatprep.subr.bf16.mxu0 0
    %2764 = vmatpush1.bf16.msra.mxu0 %v1982
    %2765 = vmatprep.subr.bf16.mxu0 0
    %2766 = vmatpush1.bf16.msra.mxu0 %v1983
    %2767 = vmatprep.subr.bf16.mxu0 0
    %2768 = vmatpush1.bf16.msra.mxu0 %v1984
    %2769 = vmatprep.subr.bf16.mxu0 0
    %2770 = vmatpush1.bf16.msra.mxu0 %v1985
    %2771 = vmatprep.subr.bf16.mxu0 0
    %2772 = vmatpush1.bf16.msra.mxu0 %v1986
    %2773 = vmatprep.subr.bf16.mxu0 0
    %2774 = vmatpush1.bf16.msra.mxu0 %v1987
    %2775 = vmatprep.subr.bf16.mxu0 0
    %2776 = vmatpush1.bf16.msra.mxu0 %v1988
    %2777 = vmatprep.subr.bf16.mxu0 0
    %2778 = vmatpush1.bf16.msra.mxu0 %v1989
    %2779 = vmatprep.subr.bf16.mxu0 0
    %2780 = vmatpush1.bf16.msra.mxu0 %v1990
    %2781 = vmatprep.subr.bf16.mxu0 0
    %2782 = vmatpush1.bf16.msra.mxu0 %v1991
    %2783 = vmatprep.subr.bf16.mxu0 0
    %2784 = vmatpush1.bf16.msra.mxu0 %v1992
    %2785 = vmatprep.mubr.bf16.mxu0 %v695
    %2786 = vmatmul.mubr.bf16.gmra.mrb[0].mxu0 %v693
    %v2787 = vpop.f32.mrb[0].mxu0
    %v2788 = vadd.f32 %v2748, %v2787
    %v2789 = vpop.f32.mrb[0].mxu0
    %v2790 = vpop.f32.mrb[0].mxu0
    %v2791 = vpop.f32.mrb[0].mxu0
    %2792 = vdwg.mxu0
    %2793 = vmatprep.subr.bf16.mxu0 0
    %2794 = vmatpush1.bf16.msra.mxu0 %v1993
    %2795 = vmatprep.subr.bf16.mxu0 0
    %2796 = vmatpush1.bf16.msra.mxu0 %v1994
    %2797 = vmatprep.subr.bf16.mxu0 0
    %2798 = vmatpush1.bf16.msra.mxu0 %v1995
    %2799 = vmatprep.subr.bf16.mxu0 0
    %2800 = vmatpush1.bf16.msra.mxu0 %v1996
    %2801 = vmatprep.subr.bf16.mxu0 0
    %2802 = vmatpush1.bf16.msra.mxu0 %v1997
    %2803 = vmatprep.subr.bf16.mxu0 0
    %2804 = vmatpush1.bf16.msra.mxu0 %v1998
    %2805 = vmatprep.subr.bf16.mxu0 0
    %2806 = vmatpush1.bf16.msra.mxu0 %v1999
    %2807 = vmatprep.subr.bf16.mxu0 0
    %2808 = vmatpush1.bf16.msra.mxu0 %v2000
    %2809 = vmatprep.subr.bf16.mxu0 0
    %2810 = vmatpush1.bf16.msra.mxu0 %v2001
    %2811 = vmatprep.subr.bf16.mxu0 0
    %2812 = vmatpush1.bf16.msra.mxu0 %v2002
    %2813 = vmatprep.subr.bf16.mxu0 0
    %2814 = vmatpush1.bf16.msra.mxu0 %v2003
    %2815 = vmatprep.subr.bf16.mxu0 0
    %2816 = vmatpush1.bf16.msra.mxu0 %v2004
    %2817 = vmatprep.subr.bf16.mxu0 0
    %2818 = vmatpush1.bf16.msra.mxu0 %v2005
    %2819 = vmatprep.subr.bf16.mxu0 0
    %2820 = vmatpush1.bf16.msra.mxu0 %v2006
    %2821 = vmatprep.subr.bf16.mxu0 0
    %2822 = vmatpush1.bf16.msra.mxu0 %v2007
    %2823 = vmatprep.subr.bf16.mxu0 0
    %2824 = vmatpush1.bf16.msra.mxu0 %v2008
    %2825 = vmatprep.mubr.bf16.mxu0 %v733
    %2826 = vmatmul.mubr.bf16.gmra.mrb[0].mxu0 %v719
    %v2827 = vpop.f32.mrb[0].mxu0
    %v2828 = vadd.f32 %v2788, %v2827
    %v2829 = vpop.f32.mrb[0].mxu0
    %v2830 = vpop.f32.mrb[0].mxu0
    %v2831 = vpop.f32.mrb[0].mxu0
    %2832 = vdwg.mxu0
    %2833 = vmatprep.subr.bf16.mxu0 0
    %2834 = vmatpush1.bf16.msra.mxu0 %v2009
    %2835 = vmatprep.subr.bf16.mxu0 0
    %2836 = vmatpush1.bf16.msra.mxu0 %v2010
    %2837 = vmatprep.subr.bf16.mxu0 0
    %2838 = vmatpush1.bf16.msra.mxu0 %v2011
    %2839 = vmatprep.subr.bf16.mxu0 0
    %2840 = vmatpush1.bf16.msra.mxu0 %v2012
    %2841 = vmatprep.subr.bf16.mxu0 0
    %2842 = vmatpush1.bf16.msra.mxu0 %v2013
    %2843 = vmatprep.subr.bf16.mxu0 0
    %2844 = vmatpush1.bf16.msra.mxu0 %v2014
    %2845 = vmatprep.subr.bf16.mxu0 0
    %2846 = vmatpush1.bf16.msra.mxu0 %v2015
    %2847 = vmatprep.subr.bf16.mxu0 0
    %2848 = vmatpush1.bf16.msra.mxu0 %v2016
    %2849 = vmatprep.subr.bf16.mxu0 0
    %2850 = vmatpush1.bf16.msra.mxu0 %v2017
    %2851 = vmatprep.subr.bf16.mxu0 0
    %2852 = vmatpush1.bf16.msra.mxu0 %v2018
    %2853 = vmatprep.subr.bf16.mxu0 0
    %2854 = vmatpush1.bf16.msra.mxu0 %v2019
    %2855 = vmatprep.subr.bf16.mxu0 0
    %2856 = vmatpush1.bf16.msra.mxu0 %v2020
    %2857 = vmatprep.subr.bf16.mxu0 0
    %2858 = vmatpush1.bf16.msra.mxu0 %v2021
    %2859 = vmatprep.subr.bf16.mxu0 0
    %2860 = vmatpush1.bf16.msra.mxu0 %v2022
    %2861 = vmatprep.subr.bf16.mxu0 0
    %2862 = vmatpush1.bf16.msra.mxu0 %v2023
    %2863 = vmatprep.subr.bf16.mxu0 0
    %2864 = vmatpush1.bf16.msra.mxu0 %v2024
    %2865 = vmatprep.mubr.bf16.mxu0 %v743
    %2866 = vmatmul.mubr.bf16.gmra.mrb[0].mxu0 %v741
    %v2867 = vpop.f32.mrb[0].mxu0
    %v2868 = vadd.f32 %v2828, %v2867
    %v2869 = vpop.f32.mrb[0].mxu0
    %v2870 = vpop.f32.mrb[0].mxu0
    %v2871 = vpop.f32.mrb[0].mxu0
    %2872 = vdwg.mxu0
    %2873 = vmatprep.subr.bf16.mxu0 0
    %2874 = vmatpush1.bf16.msra.mxu0 %v2025
    %2875 = vmatprep.subr.bf16.mxu0 0
    %2876 = vmatpush1.bf16.msra.mxu0 %v2026
    %2877 = vmatprep.subr.bf16.mxu0 0
    %2878 = vmatpush1.bf16.msra.mxu0 %v2027
    %2879 = vmatprep.subr.bf16.mxu0 0
    %2880 = vmatpush1.bf16.msra.mxu0 %v2028
    %2881 = vmatprep.subr.bf16.mxu0 0
    %2882 = vmatpush1.bf16.msra.mxu0 %v2029
    %2883 = vmatprep.subr.bf16.mxu0 0
    %2884 = vmatpush1.bf16.msra.mxu0 %v2030
    %2885 = vmatprep.subr.bf16.mxu0 0
    %2886 = vmatpush1.bf16.msra.mxu0 %v2031
    %2887 = vmatprep.subr.bf16.mxu0 0
    %2888 = vmatpush1.bf16.msra.mxu0 %v2032
    %2889 = vmatprep.subr.bf16.mxu0 0
    %2890 = vmatpush1.bf16.msra.mxu0 %v2033
    %2891 = vmatprep.subr.bf16.mxu0 0
    %2892 = vmatpush1.bf16.msra.mxu0 %v2034
    %2893 = vmatprep.subr.bf16.mxu0 0
    %2894 = vmatpush1.bf16.msra.mxu0 %v2035
    %2895 = vmatprep.subr.bf16.mxu0 0
    %2896 = vmatpush1.bf16.msra.mxu0 %v2036
    %2897 = vmatprep.subr.bf16.mxu0 0
    %2898 = vmatpush1.bf16.msra.mxu0 %v2037
    %2899 = vmatprep.subr.bf16.mxu0 0
    %2900 = vmatpush1.bf16.msra.mxu0 %v2038
    %2901 = vmatprep.subr.bf16.mxu0 0
    %2902 = vmatpush1.bf16.msra.mxu0 %v2039
    %2903 = vmatprep.subr.bf16.mxu0 0
    %2904 = vmatpush1.bf16.msra.mxu0 %v2040
    %2905 = vmatprep.mubr.bf16.mxu0 %v740
    %2906 = vmatmul.mubr.bf16.gmra.mrb[0].mxu0 %v726
    %v2907 = vpop.f32.mrb[0].mxu0
    %v2908 = vadd.f32 %v2868, %v2907
    %v2909 = vpop.f32.mrb[0].mxu0
    %v2910 = vpop.f32.mrb[0].mxu0
    %v2911 = vpop.f32.mrb[0].mxu0
    %2912 = vdwg.mxu0
    %2913 = vmatprep.subr.bf16.mxu0 0
    %2914 = vmatpush1.bf16.msra.mxu0 %v2041
    %2915 = vmatprep.subr.bf16.mxu0 0
    %2916 = vmatpush1.bf16.msra.mxu0 %v2042
    %2917 = vmatprep.subr.bf16.mxu0 0
    %2918 = vmatpush1.bf16.msra.mxu0 %v2043
    %2919 = vmatprep.subr.bf16.mxu0 0
    %2920 = vmatpush1.bf16.msra.mxu0 %v2044
    %2921 = vmatprep.subr.bf16.mxu0 0
    %2922 = vmatpush1.bf16.msra.mxu0 %v2045
    %2923 = vmatprep.subr.bf16.mxu0 0
    %2924 = vmatpush1.bf16.msra.mxu0 %v2046
    %2925 = vmatprep.subr.bf16.mxu0 0
    %2926 = vmatpush1.bf16.msra.mxu0 %v2047
    %2927 = vmatprep.subr.bf16.mxu0 0
    %2928 = vmatpush1.bf16.msra.mxu0 %v2048
    %2929 = vmatprep.subr.bf16.mxu0 0
    %2930 = vmatpush1.bf16.msra.mxu0 %v2049
    %2931 = vmatprep.subr.bf16.mxu0 0
    %2932 = vmatpush1.bf16.msra.mxu0 %v2050
    %2933 = vmatprep.subr.bf16.mxu0 0
    %2934 = vmatpush1.bf16.msra.mxu0 %v2051
    %2935 = vmatprep.subr.bf16.mxu0 0
    %2936 = vmatpush1.bf16.msra.mxu0 %v2052
    %2937 = vmatprep.subr.bf16.mxu0 0
    %2938 = vmatpush1.bf16.msra.mxu0 %v2053
    %2939 = vmatprep.subr.bf16.mxu0 0
    %2940 = vmatpush1.bf16.msra.mxu0 %v2054
    %2941 = vmatprep.subr.bf16.mxu0 0
    %2942 = vmatpush1.bf16.msra.mxu0 %v2055
    %2943 = vmatprep.subr.bf16.mxu0 0
    %2944 = vmatpush1.bf16.msra.mxu0 %v2056
    %2945 = vmatprep.mubr.bf16.mxu0 %v744
    %2946 = vmatmul.mubr.bf16.gmra.mrb[0].mxu0 %v742
    %v2947 = vpop.f32.mrb[0].mxu0
    %v2948 = vadd.f32 %v2908, %v2947
    %v2949 = vpop.f32.mrb[0].mxu0
    %v2950 = vpop.f32.mrb[0].mxu0
    %v2951 = vpop.f32.mrb[0].mxu0
    %2952 = vdwg.mxu0
    %v2953 = vmax.f32 %v2948, 0.0
    %v2954 = vld [vmem:[%s3] sm:$0xff]
    %v2955 = vld [vmem:[%s3 + $0x8] sm:$0xff]
    %v2956 = vld [vmem:[%s3 + $0x10] sm:$0xff]
    %v2957 = vld [vmem:[%s3 + $0x18] sm:$0xff]
    %v2958 = vld [vmem:[%s3 + $0x20] sm:$0xff]
    %v2959 = vld [vmem:[%s3 + $0x28] sm:$0xff]
    %v2960 = vld [vmem:[%s3 + $0x30] sm:$0xff]
    %v2961 = vld [vmem:[%s3 + $0x38] sm:$0xff]
    %v2962 = vld [vmem:[%s4] sm:$0x1]
    %v2964 = vlaneseq
    %v2965 = vshrl.u32 %v2964, 7
    %v2966 = vsub.s32 0, %v2965
    %v2967 = vrot.slane %v2962, %v2966
    %vm2969 = vcmask 523264
    %v2971 = vsel %vm2969, %v2953, 0
    %2973 = vmatprep.subr.mxu0 0.0
    %2974 = vmatpush1.msra.mxu0 %v2954
    %2975 = vmatprep.subr.mxu0 0.0
    %2976 = vmatpush1.msra.mxu0 %v2955
    %2977 = vmatprep.subr.mxu0 0.0
    %2978 = vmatpush1.msra.mxu0 %v2956
    %2979 = vmatprep.subr.mxu0 0.0
    %2980 = vmatpush1.msra.mxu0 %v2957
    %2981 = vmatprep.subr.mxu0 0.0
    %2982 = vmatpush1.msra.mxu0 %v2958
    %2983 = vmatprep.subr.mxu0 0.0
    %2984 = vmatpush1.msra.mxu0 %v2959
    %2985 = vmatprep.subr.mxu0 0.0
    %2986 = vmatpush1.msra.mxu0 %v2960
    %2987 = vmatprep.subr.mxu0 0.0
    %2988 = vmatpush1.msra.mxu0 %v2961
    %2989 = vmatprep.subr.mxu0 0.0
    %2990 = vmatpush1.msra.mxu0 0.0
    %2991 = vmatprep.subr.mxu0 0.0
    %2992 = vmatpush1.msra.mxu0 0.0
    %2993 = vmatprep.subr.mxu0 0.0
    %2994 = vmatpush1.msra.mxu0 0.0
    %2995 = vmatprep.subr.mxu0 0.0
    %2996 = vmatpush1.msra.mxu0 0.0
    %2997 = vmatprep.subr.mxu0 0.0
    %2998 = vmatpush1.msra.mxu0 0.0
    %2999 = vmatprep.subr.mxu0 0.0
    %3000 = vmatpush1.msra.mxu0 0.0
    %3001 = vmatprep.subr.mxu0 0.0
    %3002 = vmatpush1.msra.mxu0 0.0
    %3003 = vmatprep.subr.mxu0 0.0
    %3004 = vmatpush1.msra.mxu0 0.0
    %3005 = vmatprep.subr.mxu0 0.0
    %3006 = vmatpush1.msra.mxu0 0.0
    %3007 = vmatprep.subr.mxu0 0.0
    %3008 = vmatpush1.msra.mxu0 0.0
    %3009 = vmatprep.subr.mxu0 0.0
    %3010 = vmatpush1.msra.mxu0 0.0
    %3011 = vmatprep.subr.mxu0 0.0
    %3012 = vmatpush1.msra.mxu0 0.0
    %3013 = vmatprep.subr.mxu0 0.0
    %3014 = vmatpush1.msra.mxu0 0.0
    %3015 = vmatprep.subr.mxu0 0.0
    %3016 = vmatpush1.msra.mxu0 0.0
    %3017 = vmatprep.subr.mxu0 0.0
    %3018 = vmatpush1.msra.mxu0 0.0
    %3019 = vmatprep.subr.mxu0 0.0
    %3020 = vmatpush1.msra.mxu0 0.0
    %3021 = vmatprep.subr.mxu0 0.0
    %3022 = vmatpush1.msra.mxu0 0.0
    %3023 = vmatprep.subr.mxu0 0.0
    %3024 = vmatpush1.msra.mxu0 0.0
    %3025 = vmatprep.subr.mxu0 0.0
    %3026 = vmatpush1.msra.mxu0 0.0
    %3027 = vmatprep.subr.mxu0 0.0
    %3028 = vmatpush1.msra.mxu0 0.0
    %3029 = vmatprep.subr.mxu0 0.0
    %3030 = vmatpush1.msra.mxu0 0.0
    %3031 = vmatprep.subr.mxu0 0.0
    %3032 = vmatpush1.msra.mxu0 0.0
    %3033 = vmatprep.subr.mxu0 0.0
    %3034 = vmatpush1.msra.mxu0 0.0
    %3035 = vmatprep.subr.mxu0 0.0
    %3036 = vmatpush1.msra.mxu0 0.0
    %3037 = vmatprep.mubr.f32.mxu0 0.0
    %3038 = vmatmul.mubr.f32.gmra.mrb[0].mxu0 %v2971
    %v3039 = vpop.f32.mrb[0].mxu0
    %v3040 = vadd.f32 %v2967, %v3039
    %v3041 = vpop.f32.mrb[0].mxu0
    %3042 = vdwg.mxu0
    %3043 = vst [vmem:[#allocation2] sm:$0x3] %v3040
    // Predicated region
    $region22: #{ecg_classifier_forward.3} parent=1 // pred_check
      _
    $region23: #{ecg_classifier_forward.3} parent=1 // pred_check_branch
      %3045 = sbr.rel (0) target = $region25
    $region24: #{ecg_classifier_forward.3} parent=1 // pred_region
      %s3047 = ssub.s32 32, 32
      %3048 = vsyncadd [#allocation3], %s3047
      %s3050 = sshll.u32 [#allocation2], 4
      %s3051 = int_to_ptr.vmem [resolvable:$true] %s3050
      %3053 = dma.vmem_to_hbm [thread:$0]  %s3051, 32, %s5, [#allocation3]
    $region25: #{ecg_classifier_forward.3} parent=1 // pred_fallthru
      _
    // Predicated region
    $region26: #{ecg_classifier_forward.3} parent=1 // pred_check
      _
    $region27: #{ecg_classifier_forward.3} parent=1 // pred_check_branch
      %3055 = sbr.rel (0) target = $region29
    $region28: #{ecg_classifier_forward.3} parent=1 // pred_region
      %3056 = dma.done [#allocation3], 32
    $region29: #{ecg_classifier_forward.3} parent=1 // pred_fallthru
      _
    %3057 = vsyncpa [#allocation3], 1

</llo_original>
